<compile_context>
chip_gen: v7x
topology: tpu7x:2x2x1
jax: 0.10.0
libtpu: 0.0.40
codegen_flags: <defaults>
</compile_context>

<pallas_src>
import functools

import jax
import jax.numpy as jnp
from jax import lax
from jax.experimental import pallas as pl
from jax.experimental.pallas import tpu as pltpu


def _conv_bn_relu_kernel(x_hbm, w_ref, scale_ref, bias_ref, o_ref,
                         slab, xs, sem, *, d_blk, num_db, cin, wp, l_cols):
    """One (n, depth-block) grid step.

    x_hbm:  (N, num_db*d_blk + 2, Cin, P_pad) bf16, raw HBM ref (pl.ANY).
    w_ref:  (3, Cout, 9*Cin) bf16 -- unscaled conv weight, kd-major,
            K ordered as (kh*3 + kw)*Cin + cin.
    scale_ref, bias_ref: (Cout, 1) f32 -- folded BN scale / bias.
    o_ref:  (d_blk, Cout, L) f32 with L = H*(W+2); columns with w >= W are
            garbage and sliced off by the caller.
    slab:   (2, d_blk+2, Cin, P_pad) bf16 VMEM double buffer for depth slabs.
    xs:     (d_blk+2, 9*Cin, L) bf16 VMEM scratch of lane-shifted tap copies.
    sem:    DMA semaphores, one per slab buffer slot.
    """
    n = pl.program_id(0)
    db = pl.program_id(1)
    slot = db % 2

    def chunk_copy(db_idx, slot_idx):
        return pltpu.make_async_copy(
            x_hbm.at[n, pl.ds(db_idx * d_blk, d_blk + 2)],
            slab.at[slot_idx],
            sem.at[slot_idx])

    # Prime the pipeline at the start of each sample's depth-block row.
    @pl.when(db == 0)
    def _():
        chunk_copy(0, slot).start()

    # Prefetch the next depth block (other slot) while we work on this one.
    @pl.when(db + 1 < num_db)
    def _():
        chunk_copy(db + 1, 1 - slot).start()

    chunk_copy(db, slot).wait()

    # Build the 9 (kh, kw) lane-shifted copies of every slab in the chunk.
    # Row layout of xs[s]: ((kh*3 + kw)*Cin + cin), columns l = h*Wp + w, so
    # one (Cout, 9*Cin) @ (9*Cin, L) matmul per (depth, kd) covers all 9 taps.
    chunk = slab.at[slot]
    for s in range(d_blk + 2):
        for kh in range(3):
            for kw in range(3):
                r0 = (kh * 3 + kw) * cin
                xs[s, r0:r0 + cin, :] = chunk[s, :, pl.ds(kh * wp + kw, l_cols)]

    scale = scale_ref[...]
    bias = bias_ref[...]
    for ld in range(d_blk):
        acc = jnp.dot(w_ref[0], xs[ld], preferred_element_type=jnp.float32)
        acc = acc + jnp.dot(w_ref[1], xs[ld + 1],
                            preferred_element_type=jnp.float32)
        acc = acc + jnp.dot(w_ref[2], xs[ld + 2],
                            preferred_element_type=jnp.float32)
        o_ref[ld] = jnp.maximum(acc * scale + bias, 0.0)


def conv_bn_relu_3d(x, weight, gamma, beta, running_mean, running_var,
                    eps=1e-5, d_blk=4):
    """Fused Conv3d(k=3, s=1, p=1, bias=False) + BatchNorm3d (inference) + ReLU.

    x: (N, Cin, D, H, W) f32.  weight: (Cout, Cin, 3, 3, 3).  Returns NCDHW f32.
    """
    N, Cin, D, H, W = x.shape
    Cout = weight.shape[0]
    Hp, Wp = H + 2, W + 2
    P = Hp * Wp                       # flattened padded (H, W) plane
    L = H * Wp                        # output columns per depth (2 garbage / row)
    # +2 guard so the (kh=2, kw=2) window of the last row stays in bounds,
    # then 128-align the lane dim.
    P_pad = ((P + 2 + 127) // 128) * 128
    num_db = pl.cdiv(D, d_blk)
    D_out = num_db * d_blk

    # ---- BatchNorm (inference) as per-channel scale / bias, kept in f32 ----
    scale_v = gamma / jnp.sqrt(running_var + eps)
    bias_v = beta - running_mean * scale_v
    scale = scale_v.astype(jnp.float32).reshape(Cout, 1)
    bias = bias_v.astype(jnp.float32).reshape(Cout, 1)

    # ---- weight: (Cout, Cin, 3,3,3) -> (kd, Cout, 9*Cin), unscaled, bf16 ----
    w_kd = jnp.transpose(weight.astype(jnp.float32), (2, 0, 3, 4, 1))
    w_kd = w_kd.reshape(3, Cout, 9 * Cin).astype(jnp.bfloat16)

    # ---- input: bf16 first, spatial + depth-block pad folded together ----
    xb = x.astype(jnp.bfloat16)
    xb = jnp.pad(xb, ((0, 0), (0, 0), (1, 1 + D_out - D), (1, 1), (1, 1)))
    xb = jnp.transpose(xb, (0, 2, 1, 3, 4)).reshape(N, D_out + 2, Cin, P)
    xb = jnp.pad(xb, ((0, 0), (0, 0), (0, 0), (0, P_pad - P)))

    kernel = functools.partial(_conv_bn_relu_kernel, d_blk=d_blk,
                               num_db=num_db, cin=Cin, wp=Wp, l_cols=L)

    out = pl.pallas_call(
        kernel,
        out_shape=jax.ShapeDtypeStruct((N, D_out, Cout, L), jnp.float32),
        grid_spec=pltpu.PrefetchScalarGridSpec(
            num_scalar_prefetch=0,
            grid=(N, num_db),
            in_specs=[
                pl.BlockSpec(memory_space=pl.ANY),                        # x (HBM)
                pl.BlockSpec((3, Cout, 9 * Cin), lambda n, db: (0, 0, 0)),  # weight
                pl.BlockSpec((Cout, 1), lambda n, db: (0, 0)),              # BN scale
                pl.BlockSpec((Cout, 1), lambda n, db: (0, 0)),              # BN bias
            ],
            out_specs=pl.BlockSpec((None, d_blk, Cout, L),
                                   lambda n, db: (n, db, 0, 0)),
            scratch_shapes=[
                pltpu.VMEM((2, d_blk + 2, Cin, P_pad), jnp.bfloat16),  # slab dbuf
                pltpu.VMEM((d_blk + 2, 9 * Cin, L), jnp.bfloat16),     # shifted taps
                pltpu.SemaphoreType.DMA((2,)),
            ]),
        compiler_params=pltpu.CompilerParams(
            # N independent -> sharded across v7x's 2 TensorCores; the depth-
            # block axis carries the manual double-buffer state -> arbitrary.
            dimension_semantics=("parallel", "arbitrary")),
    )(xb, w_kd, scale, bias)

    # (N, D_out, Cout, H*Wp) -> drop pad depths + the 2 garbage cols -> NCDHW.
    out = out[:, :D].reshape(N, D, Cout, H, Wp)[..., :W]
    return jnp.transpose(out, (0, 2, 1, 3, 4))


if __name__ == "__main__":
    key = jax.random.PRNGKey(0)
    k1, k2, k3, k4, k5, k6 = jax.random.split(key, 6)

    # Small shapes consistent with ConvBnReLU3D(in_channels=4, out_channels=8)
    N, Cin, Cout, D, H, W = 2, 4, 8, 8, 16, 16

    x = jax.random.normal(k1, (N, Cin, D, H, W), jnp.float32)
    weight = jax.random.normal(k2, (Cout, Cin, 3, 3, 3), jnp.float32) * 0.1
    gamma = 1.0 + 0.1 * jax.random.normal(k3, (Cout,), jnp.float32)
    beta = 0.1 * jax.random.normal(k4, (Cout,), jnp.float32)
    running_mean = 0.1 * jax.random.normal(k5, (Cout,), jnp.float32)
    running_var = jax.nn.softplus(jax.random.normal(k6, (Cout,), jnp.float32)) + 0.5

    # d_blk=4 -> 2 depth blocks per sample, exercising the DMA prefetch path.
    y = conv_bn_relu_3d(x, weight, gamma, beta, running_mean, running_var,
                        d_blk=4)
    y = jax.block_until_ready(y)
    assert y.shape == (N, Cout, D, H, W), y.shape

    eps = 1e-5
    scale = gamma / jnp.sqrt(running_var + eps)
    bias = beta - running_mean * scale

    def ref_forward(x_in, w_in):
        conv = lax.conv_general_dilated(
            x_in, w_in, window_strides=(1, 1, 1),
            padding=((1, 1), (1, 1), (1, 1)),
            dimension_numbers=("NCDHW", "OIDHW", "NCDHW"),
            precision=lax.Precision.HIGHEST)
        return jnp.maximum(conv * scale.reshape(1, Cout, 1, 1, 1)
                           + bias.reshape(1, Cout, 1, 1, 1), 0.0)

    # 1) Tight check against a reference built from the same bf16-rounded
    #    operands (isolates the kernel; only f32 accumulation order differs).
    x_q = x.astype(jnp.bfloat16).astype(jnp.float32)
    w_q = weight.astype(jnp.bfloat16).astype(jnp.float32)
    ref_q = ref_forward(x_q, w_q)
    err_q = float(jnp.max(jnp.abs(y - ref_q)))
    assert jnp.allclose(y, ref_q, atol=2e-3, rtol=2e-3), err_q

    # 2) Looser end-to-end check against the full-f32 PyTorch-equivalent path
    #    (difference = bf16 rounding of x and the conv weight only; the BN
    #    scale/bias stay f32 in-kernel).
    ref_f32 = ref_forward(x, weight)
    err_f = float(jnp.max(jnp.abs(y - ref_f32)))
    assert jnp.allclose(y, ref_f32, atol=8e-2, rtol=8e-2), err_f

    print("KERNEL_OK")
</pallas_src>

<mosaic_0001>
module attributes {stable_mosaic.version = 11 : i64} {
  func.func @_conv_bn_relu_kernel(%arg0: i32, %arg1: i32, %arg2: memref<2x10x4x384xbf16, #tpu.memory_space<any>>, %arg3: memref<3x8x36xbf16, #tpu.memory_space<vmem>>, %arg4: memref<8x1xf32, #tpu.memory_space<vmem>>, %arg5: memref<8x1xf32, #tpu.memory_space<vmem>>, %arg6: memref<1x4x8x288xf32, #tpu.memory_space<vmem>>, %arg7: memref<2x6x4x384xbf16, #tpu.memory_space<vmem>>, %arg8: memref<6x36x288xbf16, #tpu.memory_space<vmem>>, %arg9: memref<2x!tpu.dma_semaphore, #tpu.memory_space<semaphore_mem>>) attributes {dimension_semantics = [#tpu.dimension_semantics<parallel>, #tpu.dimension_semantics<arbitrary>], iteration_bounds = array<i64: 2, 2>, scalar_prefetch = 0 : i64, scratch_operands = 3 : i64, tpu.core_type = #tpu.core_type<tc>, window_params = [{}, {pipeline_mode = #tpu.pipeline_mode<synchronous>, transform_indices = @transform_1, window_bounds = array<i64: 3, 8, 36>}, {pipeline_mode = #tpu.pipeline_mode<synchronous>, transform_indices = @transform_2, window_bounds = array<i64: 8, 1>}, {pipeline_mode = #tpu.pipeline_mode<synchronous>, transform_indices = @transform_3, window_bounds = array<i64: 8, 1>}, {transform_indices = @transform_4, window_bounds = array<i64: 1, 4, 8, 288>}]} {
    %c2_i32 = arith.constant 2 : i32
    %c0_i32 = arith.constant 0 : i32
    %0 = arith.cmpi eq, %c2_i32, %c0_i32 : i32
    %c1_i32 = arith.constant 1 : i32
    %1 = arith.select %0, %c1_i32, %c2_i32 : i32
    %2 = arith.remsi %arg1, %1 : i32
    %c0_i32_0 = arith.constant 0 : i32
    %3 = arith.cmpi ne, %2, %c0_i32_0 : i32
    %c0_i32_1 = arith.constant 0 : i32
    %4 = arith.cmpi slt, %2, %c0_i32_1 : i32
    %c0_i32_2 = arith.constant 0 : i32
    %5 = arith.cmpi slt, %1, %c0_i32_2 : i32
    %6 = arith.xori %4, %5 : i1
    %7 = arith.andi %6, %3 : i1
    %8 = arith.addi %2, %1 : i32
    %9 = arith.select %7, %8, %2 : i32
    %c0_i32_3 = arith.constant 0 : i32
    %10 = arith.cmpi eq, %arg1, %c0_i32_3 : i32
    %11 = arith.extui %10 : i1 to i32
    %c0_i32_4 = arith.constant 0 : i32
    %12 = arith.cmpi ne, %11, %c0_i32_4 : i32
    scf.if %12 {
      %c0_i32_588 = arith.constant 0 : i32
      %c0_i32_589 = arith.constant 0 : i32
      %c0_i32_590 = arith.constant 0 : i32
      %508 = tpu.memref_slice %arg2[%arg0, %c0_i32_588, %c0_i32_589, %c0_i32_590] : memref<2x10x4x384xbf16, #tpu.memory_space<any>> -> memref<1x6x4x384xbf16, #tpu.memory_space<any>>
      %509 = tpu.memref_squeeze %508 : memref<1x6x4x384xbf16, #tpu.memory_space<any>> -> memref<6x4x384xbf16, #tpu.memory_space<any>>
      %c0_i32_591 = arith.constant 0 : i32
      %c0_i32_592 = arith.constant 0 : i32
      %c0_i32_593 = arith.constant 0 : i32
      %510 = tpu.memref_slice %arg7[%9, %c0_i32_591, %c0_i32_592, %c0_i32_593] : memref<2x6x4x384xbf16, #tpu.memory_space<vmem>> -> memref<1x6x4x384xbf16, #tpu.memory_space<vmem>>
      %511 = tpu.memref_squeeze %510 : memref<1x6x4x384xbf16, #tpu.memory_space<vmem>> -> memref<6x4x384xbf16, #tpu.memory_space<vmem>>
      %512 = tpu.memref_slice %arg9[%9] : memref<2x!tpu.dma_semaphore, #tpu.memory_space<semaphore_mem>> -> memref<1x!tpu.dma_semaphore, #tpu.memory_space<semaphore_mem>>
      %513 = tpu.memref_squeeze %512 : memref<1x!tpu.dma_semaphore, #tpu.memory_space<semaphore_mem>> -> memref<!tpu.dma_semaphore, #tpu.memory_space<semaphore_mem>>
      tpu.enqueue_dma source(%509 : memref<6x4x384xbf16, #tpu.memory_space<any>>) target(%511 : memref<6x4x384xbf16, #tpu.memory_space<vmem>>) target_semaphore(%513 : memref<!tpu.dma_semaphore, #tpu.memory_space<semaphore_mem>>)
    } else {
    }
    %c1_i32_5 = arith.constant 1 : i32
    %13 = arith.addi %arg1, %c1_i32_5 : i32
    %c2_i32_6 = arith.constant 2 : i32
    %14 = arith.cmpi slt, %13, %c2_i32_6 : i32
    %15 = arith.extui %14 : i1 to i32
    %c0_i32_7 = arith.constant 0 : i32
    %16 = arith.cmpi ne, %15, %c0_i32_7 : i32
    scf.if %16 {
      %c1_i32_588 = arith.constant 1 : i32
      %508 = arith.addi %arg1, %c1_i32_588 : i32
      %c1_i32_589 = arith.constant 1 : i32
      %509 = arith.subi %c1_i32_589, %9 : i32
      %c4_i32_590 = arith.constant 4 : i32
      %510 = arith.muli %508, %c4_i32_590 : i32
      %c0_i32_591 = arith.constant 0 : i32
      %c0_i32_592 = arith.constant 0 : i32
      %511 = tpu.memref_slice %arg2[%arg0, %510, %c0_i32_591, %c0_i32_592] : memref<2x10x4x384xbf16, #tpu.memory_space<any>> -> memref<1x6x4x384xbf16, #tpu.memory_space<any>>
      %512 = tpu.memref_squeeze %511 : memref<1x6x4x384xbf16, #tpu.memory_space<any>> -> memref<6x4x384xbf16, #tpu.memory_space<any>>
      %c0_i32_593 = arith.constant 0 : i32
      %c0_i32_594 = arith.constant 0 : i32
      %c0_i32_595 = arith.constant 0 : i32
      %513 = tpu.memref_slice %arg7[%509, %c0_i32_593, %c0_i32_594, %c0_i32_595] : memref<2x6x4x384xbf16, #tpu.memory_space<vmem>> -> memref<1x6x4x384xbf16, #tpu.memory_space<vmem>>
      %514 = tpu.memref_squeeze %513 : memref<1x6x4x384xbf16, #tpu.memory_space<vmem>> -> memref<6x4x384xbf16, #tpu.memory_space<vmem>>
      %515 = tpu.memref_slice %arg9[%509] : memref<2x!tpu.dma_semaphore, #tpu.memory_space<semaphore_mem>> -> memref<1x!tpu.dma_semaphore, #tpu.memory_space<semaphore_mem>>
      %516 = tpu.memref_squeeze %515 : memref<1x!tpu.dma_semaphore, #tpu.memory_space<semaphore_mem>> -> memref<!tpu.dma_semaphore, #tpu.memory_space<semaphore_mem>>
      tpu.enqueue_dma source(%512 : memref<6x4x384xbf16, #tpu.memory_space<any>>) target(%514 : memref<6x4x384xbf16, #tpu.memory_space<vmem>>) target_semaphore(%516 : memref<!tpu.dma_semaphore, #tpu.memory_space<semaphore_mem>>)
    } else {
    }
    %c4_i32 = arith.constant 4 : i32
    %17 = arith.muli %arg1, %c4_i32 : i32
    %c0_i32_8 = arith.constant 0 : i32
    %c0_i32_9 = arith.constant 0 : i32
    %18 = tpu.memref_slice %arg2[%arg0, %17, %c0_i32_8, %c0_i32_9] : memref<2x10x4x384xbf16, #tpu.memory_space<any>> -> memref<1x6x4x384xbf16, #tpu.memory_space<any>>
    %19 = tpu.memref_squeeze %18 : memref<1x6x4x384xbf16, #tpu.memory_space<any>> -> memref<6x4x384xbf16, #tpu.memory_space<any>>
    %c0_i32_10 = arith.constant 0 : i32
    %c0_i32_11 = arith.constant 0 : i32
    %c0_i32_12 = arith.constant 0 : i32
    %20 = tpu.memref_slice %arg7[%9, %c0_i32_10, %c0_i32_11, %c0_i32_12] : memref<2x6x4x384xbf16, #tpu.memory_space<vmem>> -> memref<1x6x4x384xbf16, #tpu.memory_space<vmem>>
    %21 = tpu.memref_squeeze %20 : memref<1x6x4x384xbf16, #tpu.memory_space<vmem>> -> memref<6x4x384xbf16, #tpu.memory_space<vmem>>
    %22 = tpu.memref_slice %arg9[%9] : memref<2x!tpu.dma_semaphore, #tpu.memory_space<semaphore_mem>> -> memref<1x!tpu.dma_semaphore, #tpu.memory_space<semaphore_mem>>
    %23 = tpu.memref_squeeze %22 : memref<1x!tpu.dma_semaphore, #tpu.memory_space<semaphore_mem>> -> memref<!tpu.dma_semaphore, #tpu.memory_space<semaphore_mem>>
    tpu.wait_dma2 semaphore(%23 : memref<!tpu.dma_semaphore, #tpu.memory_space<semaphore_mem>>) src(%19 : memref<6x4x384xbf16, #tpu.memory_space<any>>) dst(%21 : memref<6x4x384xbf16, #tpu.memory_space<vmem>>)
    %c0_i32_13 = arith.constant 0 : i32
    %c0_i32_14 = arith.constant 0 : i32
    %c0_i32_15 = arith.constant 0 : i32
    %24 = tpu.memref_slice %arg7[%9, %c0_i32_13, %c0_i32_14, %c0_i32_15] : memref<2x6x4x384xbf16, #tpu.memory_space<vmem>> -> memref<1x6x4x384xbf16, #tpu.memory_space<vmem>>
    %25 = tpu.memref_squeeze %24 : memref<1x6x4x384xbf16, #tpu.memory_space<vmem>> -> memref<6x4x384xbf16, #tpu.memory_space<vmem>>
    %c0 = arith.constant 0 : index
    %c0_16 = arith.constant 0 : index
    %c0_17 = arith.constant 0 : index
    %26 = vector.load %25[%c0, %c0_16, %c0_17] : memref<6x4x384xbf16, #tpu.memory_space<vmem>>, vector<1x4x288xbf16>
    %27 = vector.shape_cast %26 : vector<1x4x288xbf16> to vector<4x288xbf16>
    %c0_18 = arith.constant 0 : index
    %c0_19 = arith.constant 0 : index
    %c0_20 = arith.constant 0 : index
    %28 = vector.load %arg8[%c0_18, %c0_19, %c0_20] : memref<6x36x288xbf16, #tpu.memory_space<vmem>>, vector<1x4x288xbf16>
    %29 = vector.shape_cast %28 : vector<1x4x288xbf16> to vector<4x288xbf16>
    %30 = vector.shape_cast %27 : vector<4x288xbf16> to vector<1x4x288xbf16>
    tpu.vector_store %arg8[%c0_18, %c0_19, %c0_20], %30 {strides = array<i32>} : memref<6x36x288xbf16, #tpu.memory_space<vmem>>, vector<1x4x288xbf16>,
    %c0_i32_21 = arith.constant 0 : i32
    %c0_i32_22 = arith.constant 0 : i32
    %c0_i32_23 = arith.constant 0 : i32
    %31 = tpu.memref_slice %arg7[%9, %c0_i32_21, %c0_i32_22, %c0_i32_23] : memref<2x6x4x384xbf16, #tpu.memory_space<vmem>> -> memref<1x6x4x384xbf16, #tpu.memory_space<vmem>>
    %32 = tpu.memref_squeeze %31 : memref<1x6x4x384xbf16, #tpu.memory_space<vmem>> -> memref<6x4x384xbf16, #tpu.memory_space<vmem>>
    %c0_24 = arith.constant 0 : index
    %c0_25 = arith.constant 0 : index
    %c1 = arith.constant 1 : index
    %33 = vector.load %32[%c0_24, %c0_25, %c1] : memref<6x4x384xbf16, #tpu.memory_space<vmem>>, vector<1x4x288xbf16>
    %34 = vector.shape_cast %33 : vector<1x4x288xbf16> to vector<4x288xbf16>
    %c0_26 = arith.constant 0 : index
    %c4 = arith.constant 4 : index
    %c0_27 = arith.constant 0 : index
    %35 = vector.load %arg8[%c0_26, %c4, %c0_27] : memref<6x36x288xbf16, #tpu.memory_space<vmem>>, vector<1x4x288xbf16>
    %36 = vector.shape_cast %35 : vector<1x4x288xbf16> to vector<4x288xbf16>
    %37 = vector.shape_cast %34 : vector<4x288xbf16> to vector<1x4x288xbf16>
    tpu.vector_store %arg8[%c0_26, %c4, %c0_27], %37 {strides = array<i32>} : memref<6x36x288xbf16, #tpu.memory_space<vmem>>, vector<1x4x288xbf16>,
    %c0_i32_28 = arith.constant 0 : i32
    %c0_i32_29 = arith.constant 0 : i32
    %c0_i32_30 = arith.constant 0 : i32
    %38 = tpu.memref_slice %arg7[%9, %c0_i32_28, %c0_i32_29, %c0_i32_30] : memref<2x6x4x384xbf16, #tpu.memory_space<vmem>> -> memref<1x6x4x384xbf16, #tpu.memory_space<vmem>>
    %39 = tpu.memref_squeeze %38 : memref<1x6x4x384xbf16, #tpu.memory_space<vmem>> -> memref<6x4x384xbf16, #tpu.memory_space<vmem>>
    %c0_31 = arith.constant 0 : index
    %c0_32 = arith.constant 0 : index
    %c2 = arith.constant 2 : index
    %40 = vector.load %39[%c0_31, %c0_32, %c2] : memref<6x4x384xbf16, #tpu.memory_space<vmem>>, vector<1x4x288xbf16>
    %41 = vector.shape_cast %40 : vector<1x4x288xbf16> to vector<4x288xbf16>
    %c0_33 = arith.constant 0 : index
    %c8 = arith.constant 8 : index
    %c0_34 = arith.constant 0 : index
    %42 = vector.load %arg8[%c0_33, %c8, %c0_34] : memref<6x36x288xbf16, #tpu.memory_space<vmem>>, vector<1x4x288xbf16>
    %43 = vector.shape_cast %42 : vector<1x4x288xbf16> to vector<4x288xbf16>
    %44 = vector.shape_cast %41 : vector<4x288xbf16> to vector<1x4x288xbf16>
    tpu.vector_store %arg8[%c0_33, %c8, %c0_34], %44 {strides = array<i32>} : memref<6x36x288xbf16, #tpu.memory_space<vmem>>, vector<1x4x288xbf16>,
    %c0_i32_35 = arith.constant 0 : i32
    %c0_i32_36 = arith.constant 0 : i32
    %c0_i32_37 = arith.constant 0 : i32
    %45 = tpu.memref_slice %arg7[%9, %c0_i32_35, %c0_i32_36, %c0_i32_37] : memref<2x6x4x384xbf16, #tpu.memory_space<vmem>> -> memref<1x6x4x384xbf16, #tpu.memory_space<vmem>>
    %46 = tpu.memref_squeeze %45 : memref<1x6x4x384xbf16, #tpu.memory_space<vmem>> -> memref<6x4x384xbf16, #tpu.memory_space<vmem>>
    %c0_38 = arith.constant 0 : index
    %c0_39 = arith.constant 0 : index
    %c18 = arith.constant 18 : index
    %47 = vector.load %46[%c0_38, %c0_39, %c18] : memref<6x4x384xbf16, #tpu.memory_space<vmem>>, vector<1x4x288xbf16>
    %48 = vector.shape_cast %47 : vector<1x4x288xbf16> to vector<4x288xbf16>
    %c0_40 = arith.constant 0 : index
    %c12 = arith.constant 12 : index
    %c0_41 = arith.constant 0 : index
    %49 = vector.load %arg8[%c0_40, %c12, %c0_41] : memref<6x36x288xbf16, #tpu.memory_space<vmem>>, vector<1x4x288xbf16>
    %50 = vector.shape_cast %49 : vector<1x4x288xbf16> to vector<4x288xbf16>
    %51 = vector.shape_cast %48 : vector<4x288xbf16> to vector<1x4x288xbf16>
    tpu.vector_store %arg8[%c0_40, %c12, %c0_41], %51 {strides = array<i32>} : memref<6x36x288xbf16, #tpu.memory_space<vmem>>, vector<1x4x288xbf16>,
    %c0_i32_42 = arith.constant 0 : i32
    %c0_i32_43 = arith.constant 0 : i32
    %c0_i32_44 = arith.constant 0 : i32
    %52 = tpu.memref_slice %arg7[%9, %c0_i32_42, %c0_i32_43, %c0_i32_44] : memref<2x6x4x384xbf16, #tpu.memory_space<vmem>> -> memref<1x6x4x384xbf16, #tpu.memory_space<vmem>>
    %53 = tpu.memref_squeeze %52 : memref<1x6x4x384xbf16, #tpu.memory_space<vmem>> -> memref<6x4x384xbf16, #tpu.memory_space<vmem>>
    %c0_45 = arith.constant 0 : index
    %c0_46 = arith.constant 0 : index
    %c19 = arith.constant 19 : index
    %54 = vector.load %53[%c0_45, %c0_46, %c19] : memref<6x4x384xbf16, #tpu.memory_space<vmem>>, vector<1x4x288xbf16>
    %55 = vector.shape_cast %54 : vector<1x4x288xbf16> to vector<4x288xbf16>
    %c0_47 = arith.constant 0 : index
    %c16 = arith.constant 16 : index
    %c0_48 = arith.constant 0 : index
    %56 = vector.load %arg8[%c0_47, %c16, %c0_48] : memref<6x36x288xbf16, #tpu.memory_space<vmem>>, vector<1x4x288xbf16>
    %57 = vector.shape_cast %56 : vector<1x4x288xbf16> to vector<4x288xbf16>
    %58 = vector.shape_cast %55 : vector<4x288xbf16> to vector<1x4x288xbf16>
    tpu.vector_store %arg8[%c0_47, %c16, %c0_48], %58 {strides = array<i32>} : memref<6x36x288xbf16, #tpu.memory_space<vmem>>, vector<1x4x288xbf16>,
    %c0_i32_49 = arith.constant 0 : i32
    %c0_i32_50 = arith.constant 0 : i32
    %c0_i32_51 = arith.constant 0 : i32
    %59 = tpu.memref_slice %arg7[%9, %c0_i32_49, %c0_i32_50, %c0_i32_51] : memref<2x6x4x384xbf16, #tpu.memory_space<vmem>> -> memref<1x6x4x384xbf16, #tpu.memory_space<vmem>>
    %60 = tpu.memref_squeeze %59 : memref<1x6x4x384xbf16, #tpu.memory_space<vmem>> -> memref<6x4x384xbf16, #tpu.memory_space<vmem>>
    %c0_52 = arith.constant 0 : index
    %c0_53 = arith.constant 0 : index
    %c20 = arith.constant 20 : index
    %61 = vector.load %60[%c0_52, %c0_53, %c20] : memref<6x4x384xbf16, #tpu.memory_space<vmem>>, vector<1x4x288xbf16>
    %62 = vector.shape_cast %61 : vector<1x4x288xbf16> to vector<4x288xbf16>
    %c0_54 = arith.constant 0 : index
    %c20_55 = arith.constant 20 : index
    %c0_56 = arith.constant 0 : index
    %63 = vector.load %arg8[%c0_54, %c20_55, %c0_56] : memref<6x36x288xbf16, #tpu.memory_space<vmem>>, vector<1x4x288xbf16>
    %64 = vector.shape_cast %63 : vector<1x4x288xbf16> to vector<4x288xbf16>
    %65 = vector.shape_cast %62 : vector<4x288xbf16> to vector<1x4x288xbf16>
    tpu.vector_store %arg8[%c0_54, %c20_55, %c0_56], %65 {strides = array<i32>} : memref<6x36x288xbf16, #tpu.memory_space<vmem>>, vector<1x4x288xbf16>,
    %c0_i32_57 = arith.constant 0 : i32
    %c0_i32_58 = arith.constant 0 : i32
    %c0_i32_59 = arith.constant 0 : i32
    %66 = tpu.memref_slice %arg7[%9, %c0_i32_57, %c0_i32_58, %c0_i32_59] : memref<2x6x4x384xbf16, #tpu.memory_space<vmem>> -> memref<1x6x4x384xbf16, #tpu.memory_space<vmem>>
    %67 = tpu.memref_squeeze %66 : memref<1x6x4x384xbf16, #tpu.memory_space<vmem>> -> memref<6x4x384xbf16, #tpu.memory_space<vmem>>
    %c0_60 = arith.constant 0 : index
    %c0_61 = arith.constant 0 : index
    %c36 = arith.constant 36 : index
    %68 = vector.load %67[%c0_60, %c0_61, %c36] : memref<6x4x384xbf16, #tpu.memory_space<vmem>>, vector<1x4x288xbf16>
    %69 = vector.shape_cast %68 : vector<1x4x288xbf16> to vector<4x288xbf16>
    %c0_62 = arith.constant 0 : index
    %c24 = arith.constant 24 : index
    %c0_63 = arith.constant 0 : index
    %70 = vector.load %arg8[%c0_62, %c24, %c0_63] : memref<6x36x288xbf16, #tpu.memory_space<vmem>>, vector<1x4x288xbf16>
    %71 = vector.shape_cast %70 : vector<1x4x288xbf16> to vector<4x288xbf16>
    %72 = vector.shape_cast %69 : vector<4x288xbf16> to vector<1x4x288xbf16>
    tpu.vector_store %arg8[%c0_62, %c24, %c0_63], %72 {strides = array<i32>} : memref<6x36x288xbf16, #tpu.memory_space<vmem>>, vector<1x4x288xbf16>,
    %c0_i32_64 = arith.constant 0 : i32
    %c0_i32_65 = arith.constant 0 : i32
    %c0_i32_66 = arith.constant 0 : i32
    %73 = tpu.memref_slice %arg7[%9, %c0_i32_64, %c0_i32_65, %c0_i32_66] : memref<2x6x4x384xbf16, #tpu.memory_space<vmem>> -> memref<1x6x4x384xbf16, #tpu.memory_space<vmem>>
    %74 = tpu.memref_squeeze %73 : memref<1x6x4x384xbf16, #tpu.memory_space<vmem>> -> memref<6x4x384xbf16, #tpu.memory_space<vmem>>
    %c0_67 = arith.constant 0 : index
    %c0_68 = arith.constant 0 : index
    %c37 = arith.constant 37 : index
    %75 = vector.load %74[%c0_67, %c0_68, %c37] : memref<6x4x384xbf16, #tpu.memory_space<vmem>>, vector<1x4x288xbf16>
    %76 = vector.shape_cast %75 : vector<1x4x288xbf16> to vector<4x288xbf16>
    %c0_69 = arith.constant 0 : index
    %c28 = arith.constant 28 : index
    %c0_70 = arith.constant 0 : index
    %77 = vector.load %arg8[%c0_69, %c28, %c0_70] : memref<6x36x288xbf16, #tpu.memory_space<vmem>>, vector<1x4x288xbf16>
    %78 = vector.shape_cast %77 : vector<1x4x288xbf16> to vector<4x288xbf16>
    %79 = vector.shape_cast %76 : vector<4x288xbf16> to vector<1x4x288xbf16>
    tpu.vector_store %arg8[%c0_69, %c28, %c0_70], %79 {strides = array<i32>} : memref<6x36x288xbf16, #tpu.memory_space<vmem>>, vector<1x4x288xbf16>,
    %c0_i32_71 = arith.constant 0 : i32
    %c0_i32_72 = arith.constant 0 : i32
    %c0_i32_73 = arith.constant 0 : i32
    %80 = tpu.memref_slice %arg7[%9, %c0_i32_71, %c0_i32_72, %c0_i32_73] : memref<2x6x4x384xbf16, #tpu.memory_space<vmem>> -> memref<1x6x4x384xbf16, #tpu.memory_space<vmem>>
    %81 = tpu.memref_squeeze %80 : memref<1x6x4x384xbf16, #tpu.memory_space<vmem>> -> memref<6x4x384xbf16, #tpu.memory_space<vmem>>
    %c0_74 = arith.constant 0 : index
    %c0_75 = arith.constant 0 : index
    %c38 = arith.constant 38 : index
    %82 = vector.load %81[%c0_74, %c0_75, %c38] : memref<6x4x384xbf16, #tpu.memory_space<vmem>>, vector<1x4x288xbf16>
    %83 = vector.shape_cast %82 : vector<1x4x288xbf16> to vector<4x288xbf16>
    %c0_76 = arith.constant 0 : index
    %c32 = arith.constant 32 : index
    %c0_77 = arith.constant 0 : index
    %84 = vector.load %arg8[%c0_76, %c32, %c0_77] : memref<6x36x288xbf16, #tpu.memory_space<vmem>>, vector<1x4x288xbf16>
    %85 = vector.shape_cast %84 : vector<1x4x288xbf16> to vector<4x288xbf16>
    %86 = vector.shape_cast %83 : vector<4x288xbf16> to vector<1x4x288xbf16>
    tpu.vector_store %arg8[%c0_76, %c32, %c0_77], %86 {strides = array<i32>} : memref<6x36x288xbf16, #tpu.memory_space<vmem>>, vector<1x4x288xbf16>,
    %c0_i32_78 = arith.constant 0 : i32
    %c0_i32_79 = arith.constant 0 : i32
    %c0_i32_80 = arith.constant 0 : i32
    %87 = tpu.memref_slice %arg7[%9, %c0_i32_78, %c0_i32_79, %c0_i32_80] : memref<2x6x4x384xbf16, #tpu.memory_space<vmem>> -> memref<1x6x4x384xbf16, #tpu.memory_space<vmem>>
    %88 = tpu.memref_squeeze %87 : memref<1x6x4x384xbf16, #tpu.memory_space<vmem>> -> memref<6x4x384xbf16, #tpu.memory_space<vmem>>
    %c1_81 = arith.constant 1 : index
    %c0_82 = arith.constant 0 : index
    %c0_83 = arith.constant 0 : index
    %89 = vector.load %88[%c1_81, %c0_82, %c0_83] : memref<6x4x384xbf16, #tpu.memory_space<vmem>>, vector<1x4x288xbf16>
    %90 = vector.shape_cast %89 : vector<1x4x288xbf16> to vector<4x288xbf16>
    %c1_84 = arith.constant 1 : index
    %c0_85 = arith.constant 0 : index
    %c0_86 = arith.constant 0 : index
    %91 = vector.load %arg8[%c1_84, %c0_85, %c0_86] : memref<6x36x288xbf16, #tpu.memory_space<vmem>>, vector<1x4x288xbf16>
    %92 = vector.shape_cast %91 : vector<1x4x288xbf16> to vector<4x288xbf16>
    %93 = vector.shape_cast %90 : vector<4x288xbf16> to vector<1x4x288xbf16>
    tpu.vector_store %arg8[%c1_84, %c0_85, %c0_86], %93 {strides = array<i32>} : memref<6x36x288xbf16, #tpu.memory_space<vmem>>, vector<1x4x288xbf16>,
    %c0_i32_87 = arith.constant 0 : i32
    %c0_i32_88 = arith.constant 0 : i32
    %c0_i32_89 = arith.constant 0 : i32
    %94 = tpu.memref_slice %arg7[%9, %c0_i32_87, %c0_i32_88, %c0_i32_89] : memref<2x6x4x384xbf16, #tpu.memory_space<vmem>> -> memref<1x6x4x384xbf16, #tpu.memory_space<vmem>>
    %95 = tpu.memref_squeeze %94 : memref<1x6x4x384xbf16, #tpu.memory_space<vmem>> -> memref<6x4x384xbf16, #tpu.memory_space<vmem>>
    %c1_90 = arith.constant 1 : index
    %c0_91 = arith.constant 0 : index
    %c1_92 = arith.constant 1 : index
    %96 = vector.load %95[%c1_90, %c0_91, %c1_92] : memref<6x4x384xbf16, #tpu.memory_space<vmem>>, vector<1x4x288xbf16>
    %97 = vector.shape_cast %96 : vector<1x4x288xbf16> to vector<4x288xbf16>
    %c1_93 = arith.constant 1 : index
    %c4_94 = arith.constant 4 : index
    %c0_95 = arith.constant 0 : index
    %98 = vector.load %arg8[%c1_93, %c4_94, %c0_95] : memref<6x36x288xbf16, #tpu.memory_space<vmem>>, vector<1x4x288xbf16>
    %99 = vector.shape_cast %98 : vector<1x4x288xbf16> to vector<4x288xbf16>
    %100 = vector.shape_cast %97 : vector<4x288xbf16> to vector<1x4x288xbf16>
    tpu.vector_store %arg8[%c1_93, %c4_94, %c0_95], %100 {strides = array<i32>} : memref<6x36x288xbf16, #tpu.memory_space<vmem>>, vector<1x4x288xbf16>,
    %c0_i32_96 = arith.constant 0 : i32
    %c0_i32_97 = arith.constant 0 : i32
    %c0_i32_98 = arith.constant 0 : i32
    %101 = tpu.memref_slice %arg7[%9, %c0_i32_96, %c0_i32_97, %c0_i32_98] : memref<2x6x4x384xbf16, #tpu.memory_space<vmem>> -> memref<1x6x4x384xbf16, #tpu.memory_space<vmem>>
    %102 = tpu.memref_squeeze %101 : memref<1x6x4x384xbf16, #tpu.memory_space<vmem>> -> memref<6x4x384xbf16, #tpu.memory_space<vmem>>
    %c1_99 = arith.constant 1 : index
    %c0_100 = arith.constant 0 : index
    %c2_101 = arith.constant 2 : index
    %103 = vector.load %102[%c1_99, %c0_100, %c2_101] : memref<6x4x384xbf16, #tpu.memory_space<vmem>>, vector<1x4x288xbf16>
    %104 = vector.shape_cast %103 : vector<1x4x288xbf16> to vector<4x288xbf16>
    %c1_102 = arith.constant 1 : index
    %c8_103 = arith.constant 8 : index
    %c0_104 = arith.constant 0 : index
    %105 = vector.load %arg8[%c1_102, %c8_103, %c0_104] : memref<6x36x288xbf16, #tpu.memory_space<vmem>>, vector<1x4x288xbf16>
    %106 = vector.shape_cast %105 : vector<1x4x288xbf16> to vector<4x288xbf16>
    %107 = vector.shape_cast %104 : vector<4x288xbf16> to vector<1x4x288xbf16>
    tpu.vector_store %arg8[%c1_102, %c8_103, %c0_104], %107 {strides = array<i32>} : memref<6x36x288xbf16, #tpu.memory_space<vmem>>, vector<1x4x288xbf16>,
    %c0_i32_105 = arith.constant 0 : i32
    %c0_i32_106 = arith.constant 0 : i32
    %c0_i32_107 = arith.constant 0 : i32
    %108 = tpu.memref_slice %arg7[%9, %c0_i32_105, %c0_i32_106, %c0_i32_107] : memref<2x6x4x384xbf16, #tpu.memory_space<vmem>> -> memref<1x6x4x384xbf16, #tpu.memory_space<vmem>>
    %109 = tpu.memref_squeeze %108 : memref<1x6x4x384xbf16, #tpu.memory_space<vmem>> -> memref<6x4x384xbf16, #tpu.memory_space<vmem>>
    %c1_108 = arith.constant 1 : index
    %c0_109 = arith.constant 0 : index
    %c18_110 = arith.constant 18 : index
    %110 = vector.load %109[%c1_108, %c0_109, %c18_110] : memref<6x4x384xbf16, #tpu.memory_space<vmem>>, vector<1x4x288xbf16>
    %111 = vector.shape_cast %110 : vector<1x4x288xbf16> to vector<4x288xbf16>
    %c1_111 = arith.constant 1 : index
    %c12_112 = arith.constant 12 : index
    %c0_113 = arith.constant 0 : index
    %112 = vector.load %arg8[%c1_111, %c12_112, %c0_113] : memref<6x36x288xbf16, #tpu.memory_space<vmem>>, vector<1x4x288xbf16>
    %113 = vector.shape_cast %112 : vector<1x4x288xbf16> to vector<4x288xbf16>
    %114 = vector.shape_cast %111 : vector<4x288xbf16> to vector<1x4x288xbf16>
    tpu.vector_store %arg8[%c1_111, %c12_112, %c0_113], %114 {strides = array<i32>} : memref<6x36x288xbf16, #tpu.memory_space<vmem>>, vector<1x4x288xbf16>,
    %c0_i32_114 = arith.constant 0 : i32
    %c0_i32_115 = arith.constant 0 : i32
    %c0_i32_116 = arith.constant 0 : i32
    %115 = tpu.memref_slice %arg7[%9, %c0_i32_114, %c0_i32_115, %c0_i32_116] : memref<2x6x4x384xbf16, #tpu.memory_space<vmem>> -> memref<1x6x4x384xbf16, #tpu.memory_space<vmem>>
    %116 = tpu.memref_squeeze %115 : memref<1x6x4x384xbf16, #tpu.memory_space<vmem>> -> memref<6x4x384xbf16, #tpu.memory_space<vmem>>
    %c1_117 = arith.constant 1 : index
    %c0_118 = arith.constant 0 : index
    %c19_119 = arith.constant 19 : index
    %117 = vector.load %116[%c1_117, %c0_118, %c19_119] : memref<6x4x384xbf16, #tpu.memory_space<vmem>>, vector<1x4x288xbf16>
    %118 = vector.shape_cast %117 : vector<1x4x288xbf16> to vector<4x288xbf16>
    %c1_120 = arith.constant 1 : index
    %c16_121 = arith.constant 16 : index
    %c0_122 = arith.constant 0 : index
    %119 = vector.load %arg8[%c1_120, %c16_121, %c0_122] : memref<6x36x288xbf16, #tpu.memory_space<vmem>>, vector<1x4x288xbf16>
    %120 = vector.shape_cast %119 : vector<1x4x288xbf16> to vector<4x288xbf16>
    %121 = vector.shape_cast %118 : vector<4x288xbf16> to vector<1x4x288xbf16>
    tpu.vector_store %arg8[%c1_120, %c16_121, %c0_122], %121 {strides = array<i32>} : memref<6x36x288xbf16, #tpu.memory_space<vmem>>, vector<1x4x288xbf16>,
    %c0_i32_123 = arith.constant 0 : i32
    %c0_i32_124 = arith.constant 0 : i32
    %c0_i32_125 = arith.constant 0 : i32
    %122 = tpu.memref_slice %arg7[%9, %c0_i32_123, %c0_i32_124, %c0_i32_125] : memref<2x6x4x384xbf16, #tpu.memory_space<vmem>> -> memref<1x6x4x384xbf16, #tpu.memory_space<vmem>>
    %123 = tpu.memref_squeeze %122 : memref<1x6x4x384xbf16, #tpu.memory_space<vmem>> -> memref<6x4x384xbf16, #tpu.memory_space<vmem>>
    %c1_126 = arith.constant 1 : index
    %c0_127 = arith.constant 0 : index
    %c20_128 = arith.constant 20 : index
    %124 = vector.load %123[%c1_126, %c0_127, %c20_128] : memref<6x4x384xbf16, #tpu.memory_space<vmem>>, vector<1x4x288xbf16>
    %125 = vector.shape_cast %124 : vector<1x4x288xbf16> to vector<4x288xbf16>
    %c1_129 = arith.constant 1 : index
    %c20_130 = arith.constant 20 : index
    %c0_131 = arith.constant 0 : index
    %126 = vector.load %arg8[%c1_129, %c20_130, %c0_131] : memref<6x36x288xbf16, #tpu.memory_space<vmem>>, vector<1x4x288xbf16>
    %127 = vector.shape_cast %126 : vector<1x4x288xbf16> to vector<4x288xbf16>
    %128 = vector.shape_cast %125 : vector<4x288xbf16> to vector<1x4x288xbf16>
    tpu.vector_store %arg8[%c1_129, %c20_130, %c0_131], %128 {strides = array<i32>} : memref<6x36x288xbf16, #tpu.memory_space<vmem>>, vector<1x4x288xbf16>,
    %c0_i32_132 = arith.constant 0 : i32
    %c0_i32_133 = arith.constant 0 : i32
    %c0_i32_134 = arith.constant 0 : i32
    %129 = tpu.memref_slice %arg7[%9, %c0_i32_132, %c0_i32_133, %c0_i32_134] : memref<2x6x4x384xbf16, #tpu.memory_space<vmem>> -> memref<1x6x4x384xbf16, #tpu.memory_space<vmem>>
    %130 = tpu.memref_squeeze %129 : memref<1x6x4x384xbf16, #tpu.memory_space<vmem>> -> memref<6x4x384xbf16, #tpu.memory_space<vmem>>
    %c1_135 = arith.constant 1 : index
    %c0_136 = arith.constant 0 : index
    %c36_137 = arith.constant 36 : index
    %131 = vector.load %130[%c1_135, %c0_136, %c36_137] : memref<6x4x384xbf16, #tpu.memory_space<vmem>>, vector<1x4x288xbf16>
    %132 = vector.shape_cast %131 : vector<1x4x288xbf16> to vector<4x288xbf16>
    %c1_138 = arith.constant 1 : index
    %c24_139 = arith.constant 24 : index
    %c0_140 = arith.constant 0 : index
    %133 = vector.load %arg8[%c1_138, %c24_139, %c0_140] : memref<6x36x288xbf16, #tpu.memory_space<vmem>>, vector<1x4x288xbf16>
    %134 = vector.shape_cast %133 : vector<1x4x288xbf16> to vector<4x288xbf16>
    %135 = vector.shape_cast %132 : vector<4x288xbf16> to vector<1x4x288xbf16>
    tpu.vector_store %arg8[%c1_138, %c24_139, %c0_140], %135 {strides = array<i32>} : memref<6x36x288xbf16, #tpu.memory_space<vmem>>, vector<1x4x288xbf16>,
    %c0_i32_141 = arith.constant 0 : i32
    %c0_i32_142 = arith.constant 0 : i32
    %c0_i32_143 = arith.constant 0 : i32
    %136 = tpu.memref_slice %arg7[%9, %c0_i32_141, %c0_i32_142, %c0_i32_143] : memref<2x6x4x384xbf16, #tpu.memory_space<vmem>> -> memref<1x6x4x384xbf16, #tpu.memory_space<vmem>>
    %137 = tpu.memref_squeeze %136 : memref<1x6x4x384xbf16, #tpu.memory_space<vmem>> -> memref<6x4x384xbf16, #tpu.memory_space<vmem>>
    %c1_144 = arith.constant 1 : index
    %c0_145 = arith.constant 0 : index
    %c37_146 = arith.constant 37 : index
    %138 = vector.load %137[%c1_144, %c0_145, %c37_146] : memref<6x4x384xbf16, #tpu.memory_space<vmem>>, vector<1x4x288xbf16>
    %139 = vector.shape_cast %138 : vector<1x4x288xbf16> to vector<4x288xbf16>
    %c1_147 = arith.constant 1 : index
    %c28_148 = arith.constant 28 : index
    %c0_149 = arith.constant 0 : index
    %140 = vector.load %arg8[%c1_147, %c28_148, %c0_149] : memref<6x36x288xbf16, #tpu.memory_space<vmem>>, vector<1x4x288xbf16>
    %141 = vector.shape_cast %140 : vector<1x4x288xbf16> to vector<4x288xbf16>
    %142 = vector.shape_cast %139 : vector<4x288xbf16> to vector<1x4x288xbf16>
    tpu.vector_store %arg8[%c1_147, %c28_148, %c0_149], %142 {strides = array<i32>} : memref<6x36x288xbf16, #tpu.memory_space<vmem>>, vector<1x4x288xbf16>,
    %c0_i32_150 = arith.constant 0 : i32
    %c0_i32_151 = arith.constant 0 : i32
    %c0_i32_152 = arith.constant 0 : i32
    %143 = tpu.memref_slice %arg7[%9, %c0_i32_150, %c0_i32_151, %c0_i32_152] : memref<2x6x4x384xbf16, #tpu.memory_space<vmem>> -> memref<1x6x4x384xbf16, #tpu.memory_space<vmem>>
    %144 = tpu.memref_squeeze %143 : memref<1x6x4x384xbf16, #tpu.memory_space<vmem>> -> memref<6x4x384xbf16, #tpu.memory_space<vmem>>
    %c1_153 = arith.constant 1 : index
    %c0_154 = arith.constant 0 : index
    %c38_155 = arith.constant 38 : index
    %145 = vector.load %144[%c1_153, %c0_154, %c38_155] : memref<6x4x384xbf16, #tpu.memory_space<vmem>>, vector<1x4x288xbf16>
    %146 = vector.shape_cast %145 : vector<1x4x288xbf16> to vector<4x288xbf16>
    %c1_156 = arith.constant 1 : index
    %c32_157 = arith.constant 32 : index
    %c0_158 = arith.constant 0 : index
    %147 = vector.load %arg8[%c1_156, %c32_157, %c0_158] : memref<6x36x288xbf16, #tpu.memory_space<vmem>>, vector<1x4x288xbf16>
    %148 = vector.shape_cast %147 : vector<1x4x288xbf16> to vector<4x288xbf16>
    %149 = vector.shape_cast %146 : vector<4x288xbf16> to vector<1x4x288xbf16>
    tpu.vector_store %arg8[%c1_156, %c32_157, %c0_158], %149 {strides = array<i32>} : memref<6x36x288xbf16, #tpu.memory_space<vmem>>, vector<1x4x288xbf16>,
    %c0_i32_159 = arith.constant 0 : i32
    %c0_i32_160 = arith.constant 0 : i32
    %c0_i32_161 = arith.constant 0 : i32
    %150 = tpu.memref_slice %arg7[%9, %c0_i32_159, %c0_i32_160, %c0_i32_161] : memref<2x6x4x384xbf16, #tpu.memory_space<vmem>> -> memref<1x6x4x384xbf16, #tpu.memory_space<vmem>>
    %151 = tpu.memref_squeeze %150 : memref<1x6x4x384xbf16, #tpu.memory_space<vmem>> -> memref<6x4x384xbf16, #tpu.memory_space<vmem>>
    %c2_162 = arith.constant 2 : index
    %c0_163 = arith.constant 0 : index
    %c0_164 = arith.constant 0 : index
    %152 = vector.load %151[%c2_162, %c0_163, %c0_164] : memref<6x4x384xbf16, #tpu.memory_space<vmem>>, vector<1x4x288xbf16>
    %153 = vector.shape_cast %152 : vector<1x4x288xbf16> to vector<4x288xbf16>
    %c2_165 = arith.constant 2 : index
    %c0_166 = arith.constant 0 : index
    %c0_167 = arith.constant 0 : index
    %154 = vector.load %arg8[%c2_165, %c0_166, %c0_167] : memref<6x36x288xbf16, #tpu.memory_space<vmem>>, vector<1x4x288xbf16>
    %155 = vector.shape_cast %154 : vector<1x4x288xbf16> to vector<4x288xbf16>
    %156 = vector.shape_cast %153 : vector<4x288xbf16> to vector<1x4x288xbf16>
    tpu.vector_store %arg8[%c2_165, %c0_166, %c0_167], %156 {strides = array<i32>} : memref<6x36x288xbf16, #tpu.memory_space<vmem>>, vector<1x4x288xbf16>,
    %c0_i32_168 = arith.constant 0 : i32
    %c0_i32_169 = arith.constant 0 : i32
    %c0_i32_170 = arith.constant 0 : i32
    %157 = tpu.memref_slice %arg7[%9, %c0_i32_168, %c0_i32_169, %c0_i32_170] : memref<2x6x4x384xbf16, #tpu.memory_space<vmem>> -> memref<1x6x4x384xbf16, #tpu.memory_space<vmem>>
    %158 = tpu.memref_squeeze %157 : memref<1x6x4x384xbf16, #tpu.memory_space<vmem>> -> memref<6x4x384xbf16, #tpu.memory_space<vmem>>
    %c2_171 = arith.constant 2 : index
    %c0_172 = arith.constant 0 : index
    %c1_173 = arith.constant 1 : index
    %159 = vector.load %158[%c2_171, %c0_172, %c1_173] : memref<6x4x384xbf16, #tpu.memory_space<vmem>>, vector<1x4x288xbf16>
    %160 = vector.shape_cast %159 : vector<1x4x288xbf16> to vector<4x288xbf16>
    %c2_174 = arith.constant 2 : index
    %c4_175 = arith.constant 4 : index
    %c0_176 = arith.constant 0 : index
    %161 = vector.load %arg8[%c2_174, %c4_175, %c0_176] : memref<6x36x288xbf16, #tpu.memory_space<vmem>>, vector<1x4x288xbf16>
    %162 = vector.shape_cast %161 : vector<1x4x288xbf16> to vector<4x288xbf16>
    %163 = vector.shape_cast %160 : vector<4x288xbf16> to vector<1x4x288xbf16>
    tpu.vector_store %arg8[%c2_174, %c4_175, %c0_176], %163 {strides = array<i32>} : memref<6x36x288xbf16, #tpu.memory_space<vmem>>, vector<1x4x288xbf16>,
    %c0_i32_177 = arith.constant 0 : i32
    %c0_i32_178 = arith.constant 0 : i32
    %c0_i32_179 = arith.constant 0 : i32
    %164 = tpu.memref_slice %arg7[%9, %c0_i32_177, %c0_i32_178, %c0_i32_179] : memref<2x6x4x384xbf16, #tpu.memory_space<vmem>> -> memref<1x6x4x384xbf16, #tpu.memory_space<vmem>>
    %165 = tpu.memref_squeeze %164 : memref<1x6x4x384xbf16, #tpu.memory_space<vmem>> -> memref<6x4x384xbf16, #tpu.memory_space<vmem>>
    %c2_180 = arith.constant 2 : index
    %c0_181 = arith.constant 0 : index
    %c2_182 = arith.constant 2 : index
    %166 = vector.load %165[%c2_180, %c0_181, %c2_182] : memref<6x4x384xbf16, #tpu.memory_space<vmem>>, vector<1x4x288xbf16>
    %167 = vector.shape_cast %166 : vector<1x4x288xbf16> to vector<4x288xbf16>
    %c2_183 = arith.constant 2 : index
    %c8_184 = arith.constant 8 : index
    %c0_185 = arith.constant 0 : index
    %168 = vector.load %arg8[%c2_183, %c8_184, %c0_185] : memref<6x36x288xbf16, #tpu.memory_space<vmem>>, vector<1x4x288xbf16>
    %169 = vector.shape_cast %168 : vector<1x4x288xbf16> to vector<4x288xbf16>
    %170 = vector.shape_cast %167 : vector<4x288xbf16> to vector<1x4x288xbf16>
    tpu.vector_store %arg8[%c2_183, %c8_184, %c0_185], %170 {strides = array<i32>} : memref<6x36x288xbf16, #tpu.memory_space<vmem>>, vector<1x4x288xbf16>,
    %c0_i32_186 = arith.constant 0 : i32
    %c0_i32_187 = arith.constant 0 : i32
    %c0_i32_188 = arith.constant 0 : i32
    %171 = tpu.memref_slice %arg7[%9, %c0_i32_186, %c0_i32_187, %c0_i32_188] : memref<2x6x4x384xbf16, #tpu.memory_space<vmem>> -> memref<1x6x4x384xbf16, #tpu.memory_space<vmem>>
    %172 = tpu.memref_squeeze %171 : memref<1x6x4x384xbf16, #tpu.memory_space<vmem>> -> memref<6x4x384xbf16, #tpu.memory_space<vmem>>
    %c2_189 = arith.constant 2 : index
    %c0_190 = arith.constant 0 : index
    %c18_191 = arith.constant 18 : index
    %173 = vector.load %172[%c2_189, %c0_190, %c18_191] : memref<6x4x384xbf16, #tpu.memory_space<vmem>>, vector<1x4x288xbf16>
    %174 = vector.shape_cast %173 : vector<1x4x288xbf16> to vector<4x288xbf16>
    %c2_192 = arith.constant 2 : index
    %c12_193 = arith.constant 12 : index
    %c0_194 = arith.constant 0 : index
    %175 = vector.load %arg8[%c2_192, %c12_193, %c0_194] : memref<6x36x288xbf16, #tpu.memory_space<vmem>>, vector<1x4x288xbf16>
    %176 = vector.shape_cast %175 : vector<1x4x288xbf16> to vector<4x288xbf16>
    %177 = vector.shape_cast %174 : vector<4x288xbf16> to vector<1x4x288xbf16>
    tpu.vector_store %arg8[%c2_192, %c12_193, %c0_194], %177 {strides = array<i32>} : memref<6x36x288xbf16, #tpu.memory_space<vmem>>, vector<1x4x288xbf16>,
    %c0_i32_195 = arith.constant 0 : i32
    %c0_i32_196 = arith.constant 0 : i32
    %c0_i32_197 = arith.constant 0 : i32
    %178 = tpu.memref_slice %arg7[%9, %c0_i32_195, %c0_i32_196, %c0_i32_197] : memref<2x6x4x384xbf16, #tpu.memory_space<vmem>> -> memref<1x6x4x384xbf16, #tpu.memory_space<vmem>>
    %179 = tpu.memref_squeeze %178 : memref<1x6x4x384xbf16, #tpu.memory_space<vmem>> -> memref<6x4x384xbf16, #tpu.memory_space<vmem>>
    %c2_198 = arith.constant 2 : index
    %c0_199 = arith.constant 0 : index
    %c19_200 = arith.constant 19 : index
    %180 = vector.load %179[%c2_198, %c0_199, %c19_200] : memref<6x4x384xbf16, #tpu.memory_space<vmem>>, vector<1x4x288xbf16>
    %181 = vector.shape_cast %180 : vector<1x4x288xbf16> to vector<4x288xbf16>
    %c2_201 = arith.constant 2 : index
    %c16_202 = arith.constant 16 : index
    %c0_203 = arith.constant 0 : index
    %182 = vector.load %arg8[%c2_201, %c16_202, %c0_203] : memref<6x36x288xbf16, #tpu.memory_space<vmem>>, vector<1x4x288xbf16>
    %183 = vector.shape_cast %182 : vector<1x4x288xbf16> to vector<4x288xbf16>
    %184 = vector.shape_cast %181 : vector<4x288xbf16> to vector<1x4x288xbf16>
    tpu.vector_store %arg8[%c2_201, %c16_202, %c0_203], %184 {strides = array<i32>} : memref<6x36x288xbf16, #tpu.memory_space<vmem>>, vector<1x4x288xbf16>,
    %c0_i32_204 = arith.constant 0 : i32
    %c0_i32_205 = arith.constant 0 : i32
    %c0_i32_206 = arith.constant 0 : i32
    %185 = tpu.memref_slice %arg7[%9, %c0_i32_204, %c0_i32_205, %c0_i32_206] : memref<2x6x4x384xbf16, #tpu.memory_space<vmem>> -> memref<1x6x4x384xbf16, #tpu.memory_space<vmem>>
    %186 = tpu.memref_squeeze %185 : memref<1x6x4x384xbf16, #tpu.memory_space<vmem>> -> memref<6x4x384xbf16, #tpu.memory_space<vmem>>
    %c2_207 = arith.constant 2 : index
    %c0_208 = arith.constant 0 : index
    %c20_209 = arith.constant 20 : index
    %187 = vector.load %186[%c2_207, %c0_208, %c20_209] : memref<6x4x384xbf16, #tpu.memory_space<vmem>>, vector<1x4x288xbf16>
    %188 = vector.shape_cast %187 : vector<1x4x288xbf16> to vector<4x288xbf16>
    %c2_210 = arith.constant 2 : index
    %c20_211 = arith.constant 20 : index
    %c0_212 = arith.constant 0 : index
    %189 = vector.load %arg8[%c2_210, %c20_211, %c0_212] : memref<6x36x288xbf16, #tpu.memory_space<vmem>>, vector<1x4x288xbf16>
    %190 = vector.shape_cast %189 : vector<1x4x288xbf16> to vector<4x288xbf16>
    %191 = vector.shape_cast %188 : vector<4x288xbf16> to vector<1x4x288xbf16>
    tpu.vector_store %arg8[%c2_210, %c20_211, %c0_212], %191 {strides = array<i32>} : memref<6x36x288xbf16, #tpu.memory_space<vmem>>, vector<1x4x288xbf16>,
    %c0_i32_213 = arith.constant 0 : i32
    %c0_i32_214 = arith.constant 0 : i32
    %c0_i32_215 = arith.constant 0 : i32
    %192 = tpu.memref_slice %arg7[%9, %c0_i32_213, %c0_i32_214, %c0_i32_215] : memref<2x6x4x384xbf16, #tpu.memory_space<vmem>> -> memref<1x6x4x384xbf16, #tpu.memory_space<vmem>>
    %193 = tpu.memref_squeeze %192 : memref<1x6x4x384xbf16, #tpu.memory_space<vmem>> -> memref<6x4x384xbf16, #tpu.memory_space<vmem>>
    %c2_216 = arith.constant 2 : index
    %c0_217 = arith.constant 0 : index
    %c36_218 = arith.constant 36 : index
    %194 = vector.load %193[%c2_216, %c0_217, %c36_218] : memref<6x4x384xbf16, #tpu.memory_space<vmem>>, vector<1x4x288xbf16>
    %195 = vector.shape_cast %194 : vector<1x4x288xbf16> to vector<4x288xbf16>
    %c2_219 = arith.constant 2 : index
    %c24_220 = arith.constant 24 : index
    %c0_221 = arith.constant 0 : index
    %196 = vector.load %arg8[%c2_219, %c24_220, %c0_221] : memref<6x36x288xbf16, #tpu.memory_space<vmem>>, vector<1x4x288xbf16>
    %197 = vector.shape_cast %196 : vector<1x4x288xbf16> to vector<4x288xbf16>
    %198 = vector.shape_cast %195 : vector<4x288xbf16> to vector<1x4x288xbf16>
    tpu.vector_store %arg8[%c2_219, %c24_220, %c0_221], %198 {strides = array<i32>} : memref<6x36x288xbf16, #tpu.memory_space<vmem>>, vector<1x4x288xbf16>,
    %c0_i32_222 = arith.constant 0 : i32
    %c0_i32_223 = arith.constant 0 : i32
    %c0_i32_224 = arith.constant 0 : i32
    %199 = tpu.memref_slice %arg7[%9, %c0_i32_222, %c0_i32_223, %c0_i32_224] : memref<2x6x4x384xbf16, #tpu.memory_space<vmem>> -> memref<1x6x4x384xbf16, #tpu.memory_space<vmem>>
    %200 = tpu.memref_squeeze %199 : memref<1x6x4x384xbf16, #tpu.memory_space<vmem>> -> memref<6x4x384xbf16, #tpu.memory_space<vmem>>
    %c2_225 = arith.constant 2 : index
    %c0_226 = arith.constant 0 : index
    %c37_227 = arith.constant 37 : index
    %201 = vector.load %200[%c2_225, %c0_226, %c37_227] : memref<6x4x384xbf16, #tpu.memory_space<vmem>>, vector<1x4x288xbf16>
    %202 = vector.shape_cast %201 : vector<1x4x288xbf16> to vector<4x288xbf16>
    %c2_228 = arith.constant 2 : index
    %c28_229 = arith.constant 28 : index
    %c0_230 = arith.constant 0 : index
    %203 = vector.load %arg8[%c2_228, %c28_229, %c0_230] : memref<6x36x288xbf16, #tpu.memory_space<vmem>>, vector<1x4x288xbf16>
    %204 = vector.shape_cast %203 : vector<1x4x288xbf16> to vector<4x288xbf16>
    %205 = vector.shape_cast %202 : vector<4x288xbf16> to vector<1x4x288xbf16>
    tpu.vector_store %arg8[%c2_228, %c28_229, %c0_230], %205 {strides = array<i32>} : memref<6x36x288xbf16, #tpu.memory_space<vmem>>, vector<1x4x288xbf16>,
    %c0_i32_231 = arith.constant 0 : i32
    %c0_i32_232 = arith.constant 0 : i32
    %c0_i32_233 = arith.constant 0 : i32
    %206 = tpu.memref_slice %arg7[%9, %c0_i32_231, %c0_i32_232, %c0_i32_233] : memref<2x6x4x384xbf16, #tpu.memory_space<vmem>> -> memref<1x6x4x384xbf16, #tpu.memory_space<vmem>>
    %207 = tpu.memref_squeeze %206 : memref<1x6x4x384xbf16, #tpu.memory_space<vmem>> -> memref<6x4x384xbf16, #tpu.memory_space<vmem>>
    %c2_234 = arith.constant 2 : index
    %c0_235 = arith.constant 0 : index
    %c38_236 = arith.constant 38 : index
    %208 = vector.load %207[%c2_234, %c0_235, %c38_236] : memref<6x4x384xbf16, #tpu.memory_space<vmem>>, vector<1x4x288xbf16>
    %209 = vector.shape_cast %208 : vector<1x4x288xbf16> to vector<4x288xbf16>
    %c2_237 = arith.constant 2 : index
    %c32_238 = arith.constant 32 : index
    %c0_239 = arith.constant 0 : index
    %210 = vector.load %arg8[%c2_237, %c32_238, %c0_239] : memref<6x36x288xbf16, #tpu.memory_space<vmem>>, vector<1x4x288xbf16>
    %211 = vector.shape_cast %210 : vector<1x4x288xbf16> to vector<4x288xbf16>
    %212 = vector.shape_cast %209 : vector<4x288xbf16> to vector<1x4x288xbf16>
    tpu.vector_store %arg8[%c2_237, %c32_238, %c0_239], %212 {strides = array<i32>} : memref<6x36x288xbf16, #tpu.memory_space<vmem>>, vector<1x4x288xbf16>,
    %c0_i32_240 = arith.constant 0 : i32
    %c0_i32_241 = arith.constant 0 : i32
    %c0_i32_242 = arith.constant 0 : i32
    %213 = tpu.memref_slice %arg7[%9, %c0_i32_240, %c0_i32_241, %c0_i32_242] : memref<2x6x4x384xbf16, #tpu.memory_space<vmem>> -> memref<1x6x4x384xbf16, #tpu.memory_space<vmem>>
    %214 = tpu.memref_squeeze %213 : memref<1x6x4x384xbf16, #tpu.memory_space<vmem>> -> memref<6x4x384xbf16, #tpu.memory_space<vmem>>
    %c3 = arith.constant 3 : index
    %c0_243 = arith.constant 0 : index
    %c0_244 = arith.constant 0 : index
    %215 = vector.load %214[%c3, %c0_243, %c0_244] : memref<6x4x384xbf16, #tpu.memory_space<vmem>>, vector<1x4x288xbf16>
    %216 = vector.shape_cast %215 : vector<1x4x288xbf16> to vector<4x288xbf16>
    %c3_245 = arith.constant 3 : index
    %c0_246 = arith.constant 0 : index
    %c0_247 = arith.constant 0 : index
    %217 = vector.load %arg8[%c3_245, %c0_246, %c0_247] : memref<6x36x288xbf16, #tpu.memory_space<vmem>>, vector<1x4x288xbf16>
    %218 = vector.shape_cast %217 : vector<1x4x288xbf16> to vector<4x288xbf16>
    %219 = vector.shape_cast %216 : vector<4x288xbf16> to vector<1x4x288xbf16>
    tpu.vector_store %arg8[%c3_245, %c0_246, %c0_247], %219 {strides = array<i32>} : memref<6x36x288xbf16, #tpu.memory_space<vmem>>, vector<1x4x288xbf16>,
    %c0_i32_248 = arith.constant 0 : i32
    %c0_i32_249 = arith.constant 0 : i32
    %c0_i32_250 = arith.constant 0 : i32
    %220 = tpu.memref_slice %arg7[%9, %c0_i32_248, %c0_i32_249, %c0_i32_250] : memref<2x6x4x384xbf16, #tpu.memory_space<vmem>> -> memref<1x6x4x384xbf16, #tpu.memory_space<vmem>>
    %221 = tpu.memref_squeeze %220 : memref<1x6x4x384xbf16, #tpu.memory_space<vmem>> -> memref<6x4x384xbf16, #tpu.memory_space<vmem>>
    %c3_251 = arith.constant 3 : index
    %c0_252 = arith.constant 0 : index
    %c1_253 = arith.constant 1 : index
    %222 = vector.load %221[%c3_251, %c0_252, %c1_253] : memref<6x4x384xbf16, #tpu.memory_space<vmem>>, vector<1x4x288xbf16>
    %223 = vector.shape_cast %222 : vector<1x4x288xbf16> to vector<4x288xbf16>
    %c3_254 = arith.constant 3 : index
    %c4_255 = arith.constant 4 : index
    %c0_256 = arith.constant 0 : index
    %224 = vector.load %arg8[%c3_254, %c4_255, %c0_256] : memref<6x36x288xbf16, #tpu.memory_space<vmem>>, vector<1x4x288xbf16>
    %225 = vector.shape_cast %224 : vector<1x4x288xbf16> to vector<4x288xbf16>
    %226 = vector.shape_cast %223 : vector<4x288xbf16> to vector<1x4x288xbf16>
    tpu.vector_store %arg8[%c3_254, %c4_255, %c0_256], %226 {strides = array<i32>} : memref<6x36x288xbf16, #tpu.memory_space<vmem>>, vector<1x4x288xbf16>,
    %c0_i32_257 = arith.constant 0 : i32
    %c0_i32_258 = arith.constant 0 : i32
    %c0_i32_259 = arith.constant 0 : i32
    %227 = tpu.memref_slice %arg7[%9, %c0_i32_257, %c0_i32_258, %c0_i32_259] : memref<2x6x4x384xbf16, #tpu.memory_space<vmem>> -> memref<1x6x4x384xbf16, #tpu.memory_space<vmem>>
    %228 = tpu.memref_squeeze %227 : memref<1x6x4x384xbf16, #tpu.memory_space<vmem>> -> memref<6x4x384xbf16, #tpu.memory_space<vmem>>
    %c3_260 = arith.constant 3 : index
    %c0_261 = arith.constant 0 : index
    %c2_262 = arith.constant 2 : index
    %229 = vector.load %228[%c3_260, %c0_261, %c2_262] : memref<6x4x384xbf16, #tpu.memory_space<vmem>>, vector<1x4x288xbf16>
    %230 = vector.shape_cast %229 : vector<1x4x288xbf16> to vector<4x288xbf16>
    %c3_263 = arith.constant 3 : index
    %c8_264 = arith.constant 8 : index
    %c0_265 = arith.constant 0 : index
    %231 = vector.load %arg8[%c3_263, %c8_264, %c0_265] : memref<6x36x288xbf16, #tpu.memory_space<vmem>>, vector<1x4x288xbf16>
    %232 = vector.shape_cast %231 : vector<1x4x288xbf16> to vector<4x288xbf16>
    %233 = vector.shape_cast %230 : vector<4x288xbf16> to vector<1x4x288xbf16>
    tpu.vector_store %arg8[%c3_263, %c8_264, %c0_265], %233 {strides = array<i32>} : memref<6x36x288xbf16, #tpu.memory_space<vmem>>, vector<1x4x288xbf16>,
    %c0_i32_266 = arith.constant 0 : i32
    %c0_i32_267 = arith.constant 0 : i32
    %c0_i32_268 = arith.constant 0 : i32
    %234 = tpu.memref_slice %arg7[%9, %c0_i32_266, %c0_i32_267, %c0_i32_268] : memref<2x6x4x384xbf16, #tpu.memory_space<vmem>> -> memref<1x6x4x384xbf16, #tpu.memory_space<vmem>>
    %235 = tpu.memref_squeeze %234 : memref<1x6x4x384xbf16, #tpu.memory_space<vmem>> -> memref<6x4x384xbf16, #tpu.memory_space<vmem>>
    %c3_269 = arith.constant 3 : index
    %c0_270 = arith.constant 0 : index
    %c18_271 = arith.constant 18 : index
    %236 = vector.load %235[%c3_269, %c0_270, %c18_271] : memref<6x4x384xbf16, #tpu.memory_space<vmem>>, vector<1x4x288xbf16>
    %237 = vector.shape_cast %236 : vector<1x4x288xbf16> to vector<4x288xbf16>
    %c3_272 = arith.constant 3 : index
    %c12_273 = arith.constant 12 : index
    %c0_274 = arith.constant 0 : index
    %238 = vector.load %arg8[%c3_272, %c12_273, %c0_274] : memref<6x36x288xbf16, #tpu.memory_space<vmem>>, vector<1x4x288xbf16>
    %239 = vector.shape_cast %238 : vector<1x4x288xbf16> to vector<4x288xbf16>
    %240 = vector.shape_cast %237 : vector<4x288xbf16> to vector<1x4x288xbf16>
    tpu.vector_store %arg8[%c3_272, %c12_273, %c0_274], %240 {strides = array<i32>} : memref<6x36x288xbf16, #tpu.memory_space<vmem>>, vector<1x4x288xbf16>,
    %c0_i32_275 = arith.constant 0 : i32
    %c0_i32_276 = arith.constant 0 : i32
    %c0_i32_277 = arith.constant 0 : i32
    %241 = tpu.memref_slice %arg7[%9, %c0_i32_275, %c0_i32_276, %c0_i32_277] : memref<2x6x4x384xbf16, #tpu.memory_space<vmem>> -> memref<1x6x4x384xbf16, #tpu.memory_space<vmem>>
    %242 = tpu.memref_squeeze %241 : memref<1x6x4x384xbf16, #tpu.memory_space<vmem>> -> memref<6x4x384xbf16, #tpu.memory_space<vmem>>
    %c3_278 = arith.constant 3 : index
    %c0_279 = arith.constant 0 : index
    %c19_280 = arith.constant 19 : index
    %243 = vector.load %242[%c3_278, %c0_279, %c19_280] : memref<6x4x384xbf16, #tpu.memory_space<vmem>>, vector<1x4x288xbf16>
    %244 = vector.shape_cast %243 : vector<1x4x288xbf16> to vector<4x288xbf16>
    %c3_281 = arith.constant 3 : index
    %c16_282 = arith.constant 16 : index
    %c0_283 = arith.constant 0 : index
    %245 = vector.load %arg8[%c3_281, %c16_282, %c0_283] : memref<6x36x288xbf16, #tpu.memory_space<vmem>>, vector<1x4x288xbf16>
    %246 = vector.shape_cast %245 : vector<1x4x288xbf16> to vector<4x288xbf16>
    %247 = vector.shape_cast %244 : vector<4x288xbf16> to vector<1x4x288xbf16>
    tpu.vector_store %arg8[%c3_281, %c16_282, %c0_283], %247 {strides = array<i32>} : memref<6x36x288xbf16, #tpu.memory_space<vmem>>, vector<1x4x288xbf16>,
    %c0_i32_284 = arith.constant 0 : i32
    %c0_i32_285 = arith.constant 0 : i32
    %c0_i32_286 = arith.constant 0 : i32
    %248 = tpu.memref_slice %arg7[%9, %c0_i32_284, %c0_i32_285, %c0_i32_286] : memref<2x6x4x384xbf16, #tpu.memory_space<vmem>> -> memref<1x6x4x384xbf16, #tpu.memory_space<vmem>>
    %249 = tpu.memref_squeeze %248 : memref<1x6x4x384xbf16, #tpu.memory_space<vmem>> -> memref<6x4x384xbf16, #tpu.memory_space<vmem>>
    %c3_287 = arith.constant 3 : index
    %c0_288 = arith.constant 0 : index
    %c20_289 = arith.constant 20 : index
    %250 = vector.load %249[%c3_287, %c0_288, %c20_289] : memref<6x4x384xbf16, #tpu.memory_space<vmem>>, vector<1x4x288xbf16>
    %251 = vector.shape_cast %250 : vector<1x4x288xbf16> to vector<4x288xbf16>
    %c3_290 = arith.constant 3 : index
    %c20_291 = arith.constant 20 : index
    %c0_292 = arith.constant 0 : index
    %252 = vector.load %arg8[%c3_290, %c20_291, %c0_292] : memref<6x36x288xbf16, #tpu.memory_space<vmem>>, vector<1x4x288xbf16>
    %253 = vector.shape_cast %252 : vector<1x4x288xbf16> to vector<4x288xbf16>
    %254 = vector.shape_cast %251 : vector<4x288xbf16> to vector<1x4x288xbf16>
    tpu.vector_store %arg8[%c3_290, %c20_291, %c0_292], %254 {strides = array<i32>} : memref<6x36x288xbf16, #tpu.memory_space<vmem>>, vector<1x4x288xbf16>,
    %c0_i32_293 = arith.constant 0 : i32
    %c0_i32_294 = arith.constant 0 : i32
    %c0_i32_295 = arith.constant 0 : i32
    %255 = tpu.memref_slice %arg7[%9, %c0_i32_293, %c0_i32_294, %c0_i32_295] : memref<2x6x4x384xbf16, #tpu.memory_space<vmem>> -> memref<1x6x4x384xbf16, #tpu.memory_space<vmem>>
    %256 = tpu.memref_squeeze %255 : memref<1x6x4x384xbf16, #tpu.memory_space<vmem>> -> memref<6x4x384xbf16, #tpu.memory_space<vmem>>
    %c3_296 = arith.constant 3 : index
    %c0_297 = arith.constant 0 : index
    %c36_298 = arith.constant 36 : index
    %257 = vector.load %256[%c3_296, %c0_297, %c36_298] : memref<6x4x384xbf16, #tpu.memory_space<vmem>>, vector<1x4x288xbf16>
    %258 = vector.shape_cast %257 : vector<1x4x288xbf16> to vector<4x288xbf16>
    %c3_299 = arith.constant 3 : index
    %c24_300 = arith.constant 24 : index
    %c0_301 = arith.constant 0 : index
    %259 = vector.load %arg8[%c3_299, %c24_300, %c0_301] : memref<6x36x288xbf16, #tpu.memory_space<vmem>>, vector<1x4x288xbf16>
    %260 = vector.shape_cast %259 : vector<1x4x288xbf16> to vector<4x288xbf16>
    %261 = vector.shape_cast %258 : vector<4x288xbf16> to vector<1x4x288xbf16>
    tpu.vector_store %arg8[%c3_299, %c24_300, %c0_301], %261 {strides = array<i32>} : memref<6x36x288xbf16, #tpu.memory_space<vmem>>, vector<1x4x288xbf16>,
    %c0_i32_302 = arith.constant 0 : i32
    %c0_i32_303 = arith.constant 0 : i32
    %c0_i32_304 = arith.constant 0 : i32
    %262 = tpu.memref_slice %arg7[%9, %c0_i32_302, %c0_i32_303, %c0_i32_304] : memref<2x6x4x384xbf16, #tpu.memory_space<vmem>> -> memref<1x6x4x384xbf16, #tpu.memory_space<vmem>>
    %263 = tpu.memref_squeeze %262 : memref<1x6x4x384xbf16, #tpu.memory_space<vmem>> -> memref<6x4x384xbf16, #tpu.memory_space<vmem>>
    %c3_305 = arith.constant 3 : index
    %c0_306 = arith.constant 0 : index
    %c37_307 = arith.constant 37 : index
    %264 = vector.load %263[%c3_305, %c0_306, %c37_307] : memref<6x4x384xbf16, #tpu.memory_space<vmem>>, vector<1x4x288xbf16>
    %265 = vector.shape_cast %264 : vector<1x4x288xbf16> to vector<4x288xbf16>
    %c3_308 = arith.constant 3 : index
    %c28_309 = arith.constant 28 : index
    %c0_310 = arith.constant 0 : index
    %266 = vector.load %arg8[%c3_308, %c28_309, %c0_310] : memref<6x36x288xbf16, #tpu.memory_space<vmem>>, vector<1x4x288xbf16>
    %267 = vector.shape_cast %266 : vector<1x4x288xbf16> to vector<4x288xbf16>
    %268 = vector.shape_cast %265 : vector<4x288xbf16> to vector<1x4x288xbf16>
    tpu.vector_store %arg8[%c3_308, %c28_309, %c0_310], %268 {strides = array<i32>} : memref<6x36x288xbf16, #tpu.memory_space<vmem>>, vector<1x4x288xbf16>,
    %c0_i32_311 = arith.constant 0 : i32
    %c0_i32_312 = arith.constant 0 : i32
    %c0_i32_313 = arith.constant 0 : i32
    %269 = tpu.memref_slice %arg7[%9, %c0_i32_311, %c0_i32_312, %c0_i32_313] : memref<2x6x4x384xbf16, #tpu.memory_space<vmem>> -> memref<1x6x4x384xbf16, #tpu.memory_space<vmem>>
    %270 = tpu.memref_squeeze %269 : memref<1x6x4x384xbf16, #tpu.memory_space<vmem>> -> memref<6x4x384xbf16, #tpu.memory_space<vmem>>
    %c3_314 = arith.constant 3 : index
    %c0_315 = arith.constant 0 : index
    %c38_316 = arith.constant 38 : index
    %271 = vector.load %270[%c3_314, %c0_315, %c38_316] : memref<6x4x384xbf16, #tpu.memory_space<vmem>>, vector<1x4x288xbf16>
    %272 = vector.shape_cast %271 : vector<1x4x288xbf16> to vector<4x288xbf16>
    %c3_317 = arith.constant 3 : index
    %c32_318 = arith.constant 32 : index
    %c0_319 = arith.constant 0 : index
    %273 = vector.load %arg8[%c3_317, %c32_318, %c0_319] : memref<6x36x288xbf16, #tpu.memory_space<vmem>>, vector<1x4x288xbf16>
    %274 = vector.shape_cast %273 : vector<1x4x288xbf16> to vector<4x288xbf16>
    %275 = vector.shape_cast %272 : vector<4x288xbf16> to vector<1x4x288xbf16>
    tpu.vector_store %arg8[%c3_317, %c32_318, %c0_319], %275 {strides = array<i32>} : memref<6x36x288xbf16, #tpu.memory_space<vmem>>, vector<1x4x288xbf16>,
    %c0_i32_320 = arith.constant 0 : i32
    %c0_i32_321 = arith.constant 0 : i32
    %c0_i32_322 = arith.constant 0 : i32
    %276 = tpu.memref_slice %arg7[%9, %c0_i32_320, %c0_i32_321, %c0_i32_322] : memref<2x6x4x384xbf16, #tpu.memory_space<vmem>> -> memref<1x6x4x384xbf16, #tpu.memory_space<vmem>>
    %277 = tpu.memref_squeeze %276 : memref<1x6x4x384xbf16, #tpu.memory_space<vmem>> -> memref<6x4x384xbf16, #tpu.memory_space<vmem>>
    %c4_323 = arith.constant 4 : index
    %c0_324 = arith.constant 0 : index
    %c0_325 = arith.constant 0 : index
    %278 = vector.load %277[%c4_323, %c0_324, %c0_325] : memref<6x4x384xbf16, #tpu.memory_space<vmem>>, vector<1x4x288xbf16>
    %279 = vector.shape_cast %278 : vector<1x4x288xbf16> to vector<4x288xbf16>
    %c4_326 = arith.constant 4 : index
    %c0_327 = arith.constant 0 : index
    %c0_328 = arith.constant 0 : index
    %280 = vector.load %arg8[%c4_326, %c0_327, %c0_328] : memref<6x36x288xbf16, #tpu.memory_space<vmem>>, vector<1x4x288xbf16>
    %281 = vector.shape_cast %280 : vector<1x4x288xbf16> to vector<4x288xbf16>
    %282 = vector.shape_cast %279 : vector<4x288xbf16> to vector<1x4x288xbf16>
    tpu.vector_store %arg8[%c4_326, %c0_327, %c0_328], %282 {strides = array<i32>} : memref<6x36x288xbf16, #tpu.memory_space<vmem>>, vector<1x4x288xbf16>,
    %c0_i32_329 = arith.constant 0 : i32
    %c0_i32_330 = arith.constant 0 : i32
    %c0_i32_331 = arith.constant 0 : i32
    %283 = tpu.memref_slice %arg7[%9, %c0_i32_329, %c0_i32_330, %c0_i32_331] : memref<2x6x4x384xbf16, #tpu.memory_space<vmem>> -> memref<1x6x4x384xbf16, #tpu.memory_space<vmem>>
    %284 = tpu.memref_squeeze %283 : memref<1x6x4x384xbf16, #tpu.memory_space<vmem>> -> memref<6x4x384xbf16, #tpu.memory_space<vmem>>
    %c4_332 = arith.constant 4 : index
    %c0_333 = arith.constant 0 : index
    %c1_334 = arith.constant 1 : index
    %285 = vector.load %284[%c4_332, %c0_333, %c1_334] : memref<6x4x384xbf16, #tpu.memory_space<vmem>>, vector<1x4x288xbf16>
    %286 = vector.shape_cast %285 : vector<1x4x288xbf16> to vector<4x288xbf16>
    %c4_335 = arith.constant 4 : index
    %c4_336 = arith.constant 4 : index
    %c0_337 = arith.constant 0 : index
    %287 = vector.load %arg8[%c4_335, %c4_336, %c0_337] : memref<6x36x288xbf16, #tpu.memory_space<vmem>>, vector<1x4x288xbf16>
    %288 = vector.shape_cast %287 : vector<1x4x288xbf16> to vector<4x288xbf16>
    %289 = vector.shape_cast %286 : vector<4x288xbf16> to vector<1x4x288xbf16>
    tpu.vector_store %arg8[%c4_335, %c4_336, %c0_337], %289 {strides = array<i32>} : memref<6x36x288xbf16, #tpu.memory_space<vmem>>, vector<1x4x288xbf16>,
    %c0_i32_338 = arith.constant 0 : i32
    %c0_i32_339 = arith.constant 0 : i32
    %c0_i32_340 = arith.constant 0 : i32
    %290 = tpu.memref_slice %arg7[%9, %c0_i32_338, %c0_i32_339, %c0_i32_340] : memref<2x6x4x384xbf16, #tpu.memory_space<vmem>> -> memref<1x6x4x384xbf16, #tpu.memory_space<vmem>>
    %291 = tpu.memref_squeeze %290 : memref<1x6x4x384xbf16, #tpu.memory_space<vmem>> -> memref<6x4x384xbf16, #tpu.memory_space<vmem>>
    %c4_341 = arith.constant 4 : index
    %c0_342 = arith.constant 0 : index
    %c2_343 = arith.constant 2 : index
    %292 = vector.load %291[%c4_341, %c0_342, %c2_343] : memref<6x4x384xbf16, #tpu.memory_space<vmem>>, vector<1x4x288xbf16>
    %293 = vector.shape_cast %292 : vector<1x4x288xbf16> to vector<4x288xbf16>
    %c4_344 = arith.constant 4 : index
    %c8_345 = arith.constant 8 : index
    %c0_346 = arith.constant 0 : index
    %294 = vector.load %arg8[%c4_344, %c8_345, %c0_346] : memref<6x36x288xbf16, #tpu.memory_space<vmem>>, vector<1x4x288xbf16>
    %295 = vector.shape_cast %294 : vector<1x4x288xbf16> to vector<4x288xbf16>
    %296 = vector.shape_cast %293 : vector<4x288xbf16> to vector<1x4x288xbf16>
    tpu.vector_store %arg8[%c4_344, %c8_345, %c0_346], %296 {strides = array<i32>} : memref<6x36x288xbf16, #tpu.memory_space<vmem>>, vector<1x4x288xbf16>,
    %c0_i32_347 = arith.constant 0 : i32
    %c0_i32_348 = arith.constant 0 : i32
    %c0_i32_349 = arith.constant 0 : i32
    %297 = tpu.memref_slice %arg7[%9, %c0_i32_347, %c0_i32_348, %c0_i32_349] : memref<2x6x4x384xbf16, #tpu.memory_space<vmem>> -> memref<1x6x4x384xbf16, #tpu.memory_space<vmem>>
    %298 = tpu.memref_squeeze %297 : memref<1x6x4x384xbf16, #tpu.memory_space<vmem>> -> memref<6x4x384xbf16, #tpu.memory_space<vmem>>
    %c4_350 = arith.constant 4 : index
    %c0_351 = arith.constant 0 : index
    %c18_352 = arith.constant 18 : index
    %299 = vector.load %298[%c4_350, %c0_351, %c18_352] : memref<6x4x384xbf16, #tpu.memory_space<vmem>>, vector<1x4x288xbf16>
    %300 = vector.shape_cast %299 : vector<1x4x288xbf16> to vector<4x288xbf16>
    %c4_353 = arith.constant 4 : index
    %c12_354 = arith.constant 12 : index
    %c0_355 = arith.constant 0 : index
    %301 = vector.load %arg8[%c4_353, %c12_354, %c0_355] : memref<6x36x288xbf16, #tpu.memory_space<vmem>>, vector<1x4x288xbf16>
    %302 = vector.shape_cast %301 : vector<1x4x288xbf16> to vector<4x288xbf16>
    %303 = vector.shape_cast %300 : vector<4x288xbf16> to vector<1x4x288xbf16>
    tpu.vector_store %arg8[%c4_353, %c12_354, %c0_355], %303 {strides = array<i32>} : memref<6x36x288xbf16, #tpu.memory_space<vmem>>, vector<1x4x288xbf16>,
    %c0_i32_356 = arith.constant 0 : i32
    %c0_i32_357 = arith.constant 0 : i32
    %c0_i32_358 = arith.constant 0 : i32
    %304 = tpu.memref_slice %arg7[%9, %c0_i32_356, %c0_i32_357, %c0_i32_358] : memref<2x6x4x384xbf16, #tpu.memory_space<vmem>> -> memref<1x6x4x384xbf16, #tpu.memory_space<vmem>>
    %305 = tpu.memref_squeeze %304 : memref<1x6x4x384xbf16, #tpu.memory_space<vmem>> -> memref<6x4x384xbf16, #tpu.memory_space<vmem>>
    %c4_359 = arith.constant 4 : index
    %c0_360 = arith.constant 0 : index
    %c19_361 = arith.constant 19 : index
    %306 = vector.load %305[%c4_359, %c0_360, %c19_361] : memref<6x4x384xbf16, #tpu.memory_space<vmem>>, vector<1x4x288xbf16>
    %307 = vector.shape_cast %306 : vector<1x4x288xbf16> to vector<4x288xbf16>
    %c4_362 = arith.constant 4 : index
    %c16_363 = arith.constant 16 : index
    %c0_364 = arith.constant 0 : index
    %308 = vector.load %arg8[%c4_362, %c16_363, %c0_364] : memref<6x36x288xbf16, #tpu.memory_space<vmem>>, vector<1x4x288xbf16>
    %309 = vector.shape_cast %308 : vector<1x4x288xbf16> to vector<4x288xbf16>
    %310 = vector.shape_cast %307 : vector<4x288xbf16> to vector<1x4x288xbf16>
    tpu.vector_store %arg8[%c4_362, %c16_363, %c0_364], %310 {strides = array<i32>} : memref<6x36x288xbf16, #tpu.memory_space<vmem>>, vector<1x4x288xbf16>,
    %c0_i32_365 = arith.constant 0 : i32
    %c0_i32_366 = arith.constant 0 : i32
    %c0_i32_367 = arith.constant 0 : i32
    %311 = tpu.memref_slice %arg7[%9, %c0_i32_365, %c0_i32_366, %c0_i32_367] : memref<2x6x4x384xbf16, #tpu.memory_space<vmem>> -> memref<1x6x4x384xbf16, #tpu.memory_space<vmem>>
    %312 = tpu.memref_squeeze %311 : memref<1x6x4x384xbf16, #tpu.memory_space<vmem>> -> memref<6x4x384xbf16, #tpu.memory_space<vmem>>
    %c4_368 = arith.constant 4 : index
    %c0_369 = arith.constant 0 : index
    %c20_370 = arith.constant 20 : index
    %313 = vector.load %312[%c4_368, %c0_369, %c20_370] : memref<6x4x384xbf16, #tpu.memory_space<vmem>>, vector<1x4x288xbf16>
    %314 = vector.shape_cast %313 : vector<1x4x288xbf16> to vector<4x288xbf16>
    %c4_371 = arith.constant 4 : index
    %c20_372 = arith.constant 20 : index
    %c0_373 = arith.constant 0 : index
    %315 = vector.load %arg8[%c4_371, %c20_372, %c0_373] : memref<6x36x288xbf16, #tpu.memory_space<vmem>>, vector<1x4x288xbf16>
    %316 = vector.shape_cast %315 : vector<1x4x288xbf16> to vector<4x288xbf16>
    %317 = vector.shape_cast %314 : vector<4x288xbf16> to vector<1x4x288xbf16>
    tpu.vector_store %arg8[%c4_371, %c20_372, %c0_373], %317 {strides = array<i32>} : memref<6x36x288xbf16, #tpu.memory_space<vmem>>, vector<1x4x288xbf16>,
    %c0_i32_374 = arith.constant 0 : i32
    %c0_i32_375 = arith.constant 0 : i32
    %c0_i32_376 = arith.constant 0 : i32
    %318 = tpu.memref_slice %arg7[%9, %c0_i32_374, %c0_i32_375, %c0_i32_376] : memref<2x6x4x384xbf16, #tpu.memory_space<vmem>> -> memref<1x6x4x384xbf16, #tpu.memory_space<vmem>>
    %319 = tpu.memref_squeeze %318 : memref<1x6x4x384xbf16, #tpu.memory_space<vmem>> -> memref<6x4x384xbf16, #tpu.memory_space<vmem>>
    %c4_377 = arith.constant 4 : index
    %c0_378 = arith.constant 0 : index
    %c36_379 = arith.constant 36 : index
    %320 = vector.load %319[%c4_377, %c0_378, %c36_379] : memref<6x4x384xbf16, #tpu.memory_space<vmem>>, vector<1x4x288xbf16>
    %321 = vector.shape_cast %320 : vector<1x4x288xbf16> to vector<4x288xbf16>
    %c4_380 = arith.constant 4 : index
    %c24_381 = arith.constant 24 : index
    %c0_382 = arith.constant 0 : index
    %322 = vector.load %arg8[%c4_380, %c24_381, %c0_382] : memref<6x36x288xbf16, #tpu.memory_space<vmem>>, vector<1x4x288xbf16>
    %323 = vector.shape_cast %322 : vector<1x4x288xbf16> to vector<4x288xbf16>
    %324 = vector.shape_cast %321 : vector<4x288xbf16> to vector<1x4x288xbf16>
    tpu.vector_store %arg8[%c4_380, %c24_381, %c0_382], %324 {strides = array<i32>} : memref<6x36x288xbf16, #tpu.memory_space<vmem>>, vector<1x4x288xbf16>,
    %c0_i32_383 = arith.constant 0 : i32
    %c0_i32_384 = arith.constant 0 : i32
    %c0_i32_385 = arith.constant 0 : i32
    %325 = tpu.memref_slice %arg7[%9, %c0_i32_383, %c0_i32_384, %c0_i32_385] : memref<2x6x4x384xbf16, #tpu.memory_space<vmem>> -> memref<1x6x4x384xbf16, #tpu.memory_space<vmem>>
    %326 = tpu.memref_squeeze %325 : memref<1x6x4x384xbf16, #tpu.memory_space<vmem>> -> memref<6x4x384xbf16, #tpu.memory_space<vmem>>
    %c4_386 = arith.constant 4 : index
    %c0_387 = arith.constant 0 : index
    %c37_388 = arith.constant 37 : index
    %327 = vector.load %326[%c4_386, %c0_387, %c37_388] : memref<6x4x384xbf16, #tpu.memory_space<vmem>>, vector<1x4x288xbf16>
    %328 = vector.shape_cast %327 : vector<1x4x288xbf16> to vector<4x288xbf16>
    %c4_389 = arith.constant 4 : index
    %c28_390 = arith.constant 28 : index
    %c0_391 = arith.constant 0 : index
    %329 = vector.load %arg8[%c4_389, %c28_390, %c0_391] : memref<6x36x288xbf16, #tpu.memory_space<vmem>>, vector<1x4x288xbf16>
    %330 = vector.shape_cast %329 : vector<1x4x288xbf16> to vector<4x288xbf16>
    %331 = vector.shape_cast %328 : vector<4x288xbf16> to vector<1x4x288xbf16>
    tpu.vector_store %arg8[%c4_389, %c28_390, %c0_391], %331 {strides = array<i32>} : memref<6x36x288xbf16, #tpu.memory_space<vmem>>, vector<1x4x288xbf16>,
    %c0_i32_392 = arith.constant 0 : i32
    %c0_i32_393 = arith.constant 0 : i32
    %c0_i32_394 = arith.constant 0 : i32
    %332 = tpu.memref_slice %arg7[%9, %c0_i32_392, %c0_i32_393, %c0_i32_394] : memref<2x6x4x384xbf16, #tpu.memory_space<vmem>> -> memref<1x6x4x384xbf16, #tpu.memory_space<vmem>>
    %333 = tpu.memref_squeeze %332 : memref<1x6x4x384xbf16, #tpu.memory_space<vmem>> -> memref<6x4x384xbf16, #tpu.memory_space<vmem>>
    %c4_395 = arith.constant 4 : index
    %c0_396 = arith.constant 0 : index
    %c38_397 = arith.constant 38 : index
    %334 = vector.load %333[%c4_395, %c0_396, %c38_397] : memref<6x4x384xbf16, #tpu.memory_space<vmem>>, vector<1x4x288xbf16>
    %335 = vector.shape_cast %334 : vector<1x4x288xbf16> to vector<4x288xbf16>
    %c4_398 = arith.constant 4 : index
    %c32_399 = arith.constant 32 : index
    %c0_400 = arith.constant 0 : index
    %336 = vector.load %arg8[%c4_398, %c32_399, %c0_400] : memref<6x36x288xbf16, #tpu.memory_space<vmem>>, vector<1x4x288xbf16>
    %337 = vector.shape_cast %336 : vector<1x4x288xbf16> to vector<4x288xbf16>
    %338 = vector.shape_cast %335 : vector<4x288xbf16> to vector<1x4x288xbf16>
    tpu.vector_store %arg8[%c4_398, %c32_399, %c0_400], %338 {strides = array<i32>} : memref<6x36x288xbf16, #tpu.memory_space<vmem>>, vector<1x4x288xbf16>,
    %c0_i32_401 = arith.constant 0 : i32
    %c0_i32_402 = arith.constant 0 : i32
    %c0_i32_403 = arith.constant 0 : i32
    %339 = tpu.memref_slice %arg7[%9, %c0_i32_401, %c0_i32_402, %c0_i32_403] : memref<2x6x4x384xbf16, #tpu.memory_space<vmem>> -> memref<1x6x4x384xbf16, #tpu.memory_space<vmem>>
    %340 = tpu.memref_squeeze %339 : memref<1x6x4x384xbf16, #tpu.memory_space<vmem>> -> memref<6x4x384xbf16, #tpu.memory_space<vmem>>
    %c5 = arith.constant 5 : index
    %c0_404 = arith.constant 0 : index
    %c0_405 = arith.constant 0 : index
    %341 = vector.load %340[%c5, %c0_404, %c0_405] : memref<6x4x384xbf16, #tpu.memory_space<vmem>>, vector<1x4x288xbf16>
    %342 = vector.shape_cast %341 : vector<1x4x288xbf16> to vector<4x288xbf16>
    %c5_406 = arith.constant 5 : index
    %c0_407 = arith.constant 0 : index
    %c0_408 = arith.constant 0 : index
    %343 = vector.load %arg8[%c5_406, %c0_407, %c0_408] : memref<6x36x288xbf16, #tpu.memory_space<vmem>>, vector<1x4x288xbf16>
    %344 = vector.shape_cast %343 : vector<1x4x288xbf16> to vector<4x288xbf16>
    %345 = vector.shape_cast %342 : vector<4x288xbf16> to vector<1x4x288xbf16>
    tpu.vector_store %arg8[%c5_406, %c0_407, %c0_408], %345 {strides = array<i32>} : memref<6x36x288xbf16, #tpu.memory_space<vmem>>, vector<1x4x288xbf16>,
    %c0_i32_409 = arith.constant 0 : i32
    %c0_i32_410 = arith.constant 0 : i32
    %c0_i32_411 = arith.constant 0 : i32
    %346 = tpu.memref_slice %arg7[%9, %c0_i32_409, %c0_i32_410, %c0_i32_411] : memref<2x6x4x384xbf16, #tpu.memory_space<vmem>> -> memref<1x6x4x384xbf16, #tpu.memory_space<vmem>>
    %347 = tpu.memref_squeeze %346 : memref<1x6x4x384xbf16, #tpu.memory_space<vmem>> -> memref<6x4x384xbf16, #tpu.memory_space<vmem>>
    %c5_412 = arith.constant 5 : index
    %c0_413 = arith.constant 0 : index
    %c1_414 = arith.constant 1 : index
    %348 = vector.load %347[%c5_412, %c0_413, %c1_414] : memref<6x4x384xbf16, #tpu.memory_space<vmem>>, vector<1x4x288xbf16>
    %349 = vector.shape_cast %348 : vector<1x4x288xbf16> to vector<4x288xbf16>
    %c5_415 = arith.constant 5 : index
    %c4_416 = arith.constant 4 : index
    %c0_417 = arith.constant 0 : index
    %350 = vector.load %arg8[%c5_415, %c4_416, %c0_417] : memref<6x36x288xbf16, #tpu.memory_space<vmem>>, vector<1x4x288xbf16>
    %351 = vector.shape_cast %350 : vector<1x4x288xbf16> to vector<4x288xbf16>
    %352 = vector.shape_cast %349 : vector<4x288xbf16> to vector<1x4x288xbf16>
    tpu.vector_store %arg8[%c5_415, %c4_416, %c0_417], %352 {strides = array<i32>} : memref<6x36x288xbf16, #tpu.memory_space<vmem>>, vector<1x4x288xbf16>,
    %c0_i32_418 = arith.constant 0 : i32
    %c0_i32_419 = arith.constant 0 : i32
    %c0_i32_420 = arith.constant 0 : i32
    %353 = tpu.memref_slice %arg7[%9, %c0_i32_418, %c0_i32_419, %c0_i32_420] : memref<2x6x4x384xbf16, #tpu.memory_space<vmem>> -> memref<1x6x4x384xbf16, #tpu.memory_space<vmem>>
    %354 = tpu.memref_squeeze %353 : memref<1x6x4x384xbf16, #tpu.memory_space<vmem>> -> memref<6x4x384xbf16, #tpu.memory_space<vmem>>
    %c5_421 = arith.constant 5 : index
    %c0_422 = arith.constant 0 : index
    %c2_423 = arith.constant 2 : index
    %355 = vector.load %354[%c5_421, %c0_422, %c2_423] : memref<6x4x384xbf16, #tpu.memory_space<vmem>>, vector<1x4x288xbf16>
    %356 = vector.shape_cast %355 : vector<1x4x288xbf16> to vector<4x288xbf16>
    %c5_424 = arith.constant 5 : index
    %c8_425 = arith.constant 8 : index
    %c0_426 = arith.constant 0 : index
    %357 = vector.load %arg8[%c5_424, %c8_425, %c0_426] : memref<6x36x288xbf16, #tpu.memory_space<vmem>>, vector<1x4x288xbf16>
    %358 = vector.shape_cast %357 : vector<1x4x288xbf16> to vector<4x288xbf16>
    %359 = vector.shape_cast %356 : vector<4x288xbf16> to vector<1x4x288xbf16>
    tpu.vector_store %arg8[%c5_424, %c8_425, %c0_426], %359 {strides = array<i32>} : memref<6x36x288xbf16, #tpu.memory_space<vmem>>, vector<1x4x288xbf16>,
    %c0_i32_427 = arith.constant 0 : i32
    %c0_i32_428 = arith.constant 0 : i32
    %c0_i32_429 = arith.constant 0 : i32
    %360 = tpu.memref_slice %arg7[%9, %c0_i32_427, %c0_i32_428, %c0_i32_429] : memref<2x6x4x384xbf16, #tpu.memory_space<vmem>> -> memref<1x6x4x384xbf16, #tpu.memory_space<vmem>>
    %361 = tpu.memref_squeeze %360 : memref<1x6x4x384xbf16, #tpu.memory_space<vmem>> -> memref<6x4x384xbf16, #tpu.memory_space<vmem>>
    %c5_430 = arith.constant 5 : index
    %c0_431 = arith.constant 0 : index
    %c18_432 = arith.constant 18 : index
    %362 = vector.load %361[%c5_430, %c0_431, %c18_432] : memref<6x4x384xbf16, #tpu.memory_space<vmem>>, vector<1x4x288xbf16>
    %363 = vector.shape_cast %362 : vector<1x4x288xbf16> to vector<4x288xbf16>
    %c5_433 = arith.constant 5 : index
    %c12_434 = arith.constant 12 : index
    %c0_435 = arith.constant 0 : index
    %364 = vector.load %arg8[%c5_433, %c12_434, %c0_435] : memref<6x36x288xbf16, #tpu.memory_space<vmem>>, vector<1x4x288xbf16>
    %365 = vector.shape_cast %364 : vector<1x4x288xbf16> to vector<4x288xbf16>
    %366 = vector.shape_cast %363 : vector<4x288xbf16> to vector<1x4x288xbf16>
    tpu.vector_store %arg8[%c5_433, %c12_434, %c0_435], %366 {strides = array<i32>} : memref<6x36x288xbf16, #tpu.memory_space<vmem>>, vector<1x4x288xbf16>,
    %c0_i32_436 = arith.constant 0 : i32
    %c0_i32_437 = arith.constant 0 : i32
    %c0_i32_438 = arith.constant 0 : i32
    %367 = tpu.memref_slice %arg7[%9, %c0_i32_436, %c0_i32_437, %c0_i32_438] : memref<2x6x4x384xbf16, #tpu.memory_space<vmem>> -> memref<1x6x4x384xbf16, #tpu.memory_space<vmem>>
    %368 = tpu.memref_squeeze %367 : memref<1x6x4x384xbf16, #tpu.memory_space<vmem>> -> memref<6x4x384xbf16, #tpu.memory_space<vmem>>
    %c5_439 = arith.constant 5 : index
    %c0_440 = arith.constant 0 : index
    %c19_441 = arith.constant 19 : index
    %369 = vector.load %368[%c5_439, %c0_440, %c19_441] : memref<6x4x384xbf16, #tpu.memory_space<vmem>>, vector<1x4x288xbf16>
    %370 = vector.shape_cast %369 : vector<1x4x288xbf16> to vector<4x288xbf16>
    %c5_442 = arith.constant 5 : index
    %c16_443 = arith.constant 16 : index
    %c0_444 = arith.constant 0 : index
    %371 = vector.load %arg8[%c5_442, %c16_443, %c0_444] : memref<6x36x288xbf16, #tpu.memory_space<vmem>>, vector<1x4x288xbf16>
    %372 = vector.shape_cast %371 : vector<1x4x288xbf16> to vector<4x288xbf16>
    %373 = vector.shape_cast %370 : vector<4x288xbf16> to vector<1x4x288xbf16>
    tpu.vector_store %arg8[%c5_442, %c16_443, %c0_444], %373 {strides = array<i32>} : memref<6x36x288xbf16, #tpu.memory_space<vmem>>, vector<1x4x288xbf16>,
    %c0_i32_445 = arith.constant 0 : i32
    %c0_i32_446 = arith.constant 0 : i32
    %c0_i32_447 = arith.constant 0 : i32
    %374 = tpu.memref_slice %arg7[%9, %c0_i32_445, %c0_i32_446, %c0_i32_447] : memref<2x6x4x384xbf16, #tpu.memory_space<vmem>> -> memref<1x6x4x384xbf16, #tpu.memory_space<vmem>>
    %375 = tpu.memref_squeeze %374 : memref<1x6x4x384xbf16, #tpu.memory_space<vmem>> -> memref<6x4x384xbf16, #tpu.memory_space<vmem>>
    %c5_448 = arith.constant 5 : index
    %c0_449 = arith.constant 0 : index
    %c20_450 = arith.constant 20 : index
    %376 = vector.load %375[%c5_448, %c0_449, %c20_450] : memref<6x4x384xbf16, #tpu.memory_space<vmem>>, vector<1x4x288xbf16>
    %377 = vector.shape_cast %376 : vector<1x4x288xbf16> to vector<4x288xbf16>
    %c5_451 = arith.constant 5 : index
    %c20_452 = arith.constant 20 : index
    %c0_453 = arith.constant 0 : index
    %378 = vector.load %arg8[%c5_451, %c20_452, %c0_453] : memref<6x36x288xbf16, #tpu.memory_space<vmem>>, vector<1x4x288xbf16>
    %379 = vector.shape_cast %378 : vector<1x4x288xbf16> to vector<4x288xbf16>
    %380 = vector.shape_cast %377 : vector<4x288xbf16> to vector<1x4x288xbf16>
    tpu.vector_store %arg8[%c5_451, %c20_452, %c0_453], %380 {strides = array<i32>} : memref<6x36x288xbf16, #tpu.memory_space<vmem>>, vector<1x4x288xbf16>,
    %c0_i32_454 = arith.constant 0 : i32
    %c0_i32_455 = arith.constant 0 : i32
    %c0_i32_456 = arith.constant 0 : i32
    %381 = tpu.memref_slice %arg7[%9, %c0_i32_454, %c0_i32_455, %c0_i32_456] : memref<2x6x4x384xbf16, #tpu.memory_space<vmem>> -> memref<1x6x4x384xbf16, #tpu.memory_space<vmem>>
    %382 = tpu.memref_squeeze %381 : memref<1x6x4x384xbf16, #tpu.memory_space<vmem>> -> memref<6x4x384xbf16, #tpu.memory_space<vmem>>
    %c5_457 = arith.constant 5 : index
    %c0_458 = arith.constant 0 : index
    %c36_459 = arith.constant 36 : index
    %383 = vector.load %382[%c5_457, %c0_458, %c36_459] : memref<6x4x384xbf16, #tpu.memory_space<vmem>>, vector<1x4x288xbf16>
    %384 = vector.shape_cast %383 : vector<1x4x288xbf16> to vector<4x288xbf16>
    %c5_460 = arith.constant 5 : index
    %c24_461 = arith.constant 24 : index
    %c0_462 = arith.constant 0 : index
    %385 = vector.load %arg8[%c5_460, %c24_461, %c0_462] : memref<6x36x288xbf16, #tpu.memory_space<vmem>>, vector<1x4x288xbf16>
    %386 = vector.shape_cast %385 : vector<1x4x288xbf16> to vector<4x288xbf16>
    %387 = vector.shape_cast %384 : vector<4x288xbf16> to vector<1x4x288xbf16>
    tpu.vector_store %arg8[%c5_460, %c24_461, %c0_462], %387 {strides = array<i32>} : memref<6x36x288xbf16, #tpu.memory_space<vmem>>, vector<1x4x288xbf16>,
    %c0_i32_463 = arith.constant 0 : i32
    %c0_i32_464 = arith.constant 0 : i32
    %c0_i32_465 = arith.constant 0 : i32
    %388 = tpu.memref_slice %arg7[%9, %c0_i32_463, %c0_i32_464, %c0_i32_465] : memref<2x6x4x384xbf16, #tpu.memory_space<vmem>> -> memref<1x6x4x384xbf16, #tpu.memory_space<vmem>>
    %389 = tpu.memref_squeeze %388 : memref<1x6x4x384xbf16, #tpu.memory_space<vmem>> -> memref<6x4x384xbf16, #tpu.memory_space<vmem>>
    %c5_466 = arith.constant 5 : index
    %c0_467 = arith.constant 0 : index
    %c37_468 = arith.constant 37 : index
    %390 = vector.load %389[%c5_466, %c0_467, %c37_468] : memref<6x4x384xbf16, #tpu.memory_space<vmem>>, vector<1x4x288xbf16>
    %391 = vector.shape_cast %390 : vector<1x4x288xbf16> to vector<4x288xbf16>
    %c5_469 = arith.constant 5 : index
    %c28_470 = arith.constant 28 : index
    %c0_471 = arith.constant 0 : index
    %392 = vector.load %arg8[%c5_469, %c28_470, %c0_471] : memref<6x36x288xbf16, #tpu.memory_space<vmem>>, vector<1x4x288xbf16>
    %393 = vector.shape_cast %392 : vector<1x4x288xbf16> to vector<4x288xbf16>
    %394 = vector.shape_cast %391 : vector<4x288xbf16> to vector<1x4x288xbf16>
    tpu.vector_store %arg8[%c5_469, %c28_470, %c0_471], %394 {strides = array<i32>} : memref<6x36x288xbf16, #tpu.memory_space<vmem>>, vector<1x4x288xbf16>,
    %c0_i32_472 = arith.constant 0 : i32
    %c0_i32_473 = arith.constant 0 : i32
    %c0_i32_474 = arith.constant 0 : i32
    %395 = tpu.memref_slice %arg7[%9, %c0_i32_472, %c0_i32_473, %c0_i32_474] : memref<2x6x4x384xbf16, #tpu.memory_space<vmem>> -> memref<1x6x4x384xbf16, #tpu.memory_space<vmem>>
    %396 = tpu.memref_squeeze %395 : memref<1x6x4x384xbf16, #tpu.memory_space<vmem>> -> memref<6x4x384xbf16, #tpu.memory_space<vmem>>
    %c5_475 = arith.constant 5 : index
    %c0_476 = arith.constant 0 : index
    %c38_477 = arith.constant 38 : index
    %397 = vector.load %396[%c5_475, %c0_476, %c38_477] : memref<6x4x384xbf16, #tpu.memory_space<vmem>>, vector<1x4x288xbf16>
    %398 = vector.shape_cast %397 : vector<1x4x288xbf16> to vector<4x288xbf16>
    %c5_478 = arith.constant 5 : index
    %c32_479 = arith.constant 32 : index
    %c0_480 = arith.constant 0 : index
    %399 = vector.load %arg8[%c5_478, %c32_479, %c0_480] : memref<6x36x288xbf16, #tpu.memory_space<vmem>>, vector<1x4x288xbf16>
    %400 = vector.shape_cast %399 : vector<1x4x288xbf16> to vector<4x288xbf16>
    %401 = vector.shape_cast %398 : vector<4x288xbf16> to vector<1x4x288xbf16>
    tpu.vector_store %arg8[%c5_478, %c32_479, %c0_480], %401 {strides = array<i32>} : memref<6x36x288xbf16, #tpu.memory_space<vmem>>, vector<1x4x288xbf16>,
    %c0_481 = arith.constant 0 : index
    %c0_482 = arith.constant 0 : index
    %402 = vector.load %arg4[%c0_481, %c0_482] : memref<8x1xf32, #tpu.memory_space<vmem>>, vector<8x1xf32>
    %c0_483 = arith.constant 0 : index
    %c0_484 = arith.constant 0 : index
    %403 = vector.load %arg5[%c0_483, %c0_484] : memref<8x1xf32, #tpu.memory_space<vmem>>, vector<8x1xf32>
    %c0_485 = arith.constant 0 : index
    %c0_486 = arith.constant 0 : index
    %c0_487 = arith.constant 0 : index
    %404 = vector.load %arg3[%c0_485, %c0_486, %c0_487] : memref<3x8x36xbf16, #tpu.memory_space<vmem>>, vector<1x8x36xbf16>
    %405 = vector.shape_cast %404 : vector<1x8x36xbf16> to vector<8x36xbf16>
    %c0_488 = arith.constant 0 : index
    %c0_489 = arith.constant 0 : index
    %c0_490 = arith.constant 0 : index
    %406 = vector.load %arg8[%c0_488, %c0_489, %c0_490] : memref<6x36x288xbf16, #tpu.memory_space<vmem>>, vector<1x36x288xbf16>
    %407 = vector.shape_cast %406 : vector<1x36x288xbf16> to vector<36x288xbf16>
    %cst = arith.constant dense<0.000000e+00> : vector<8x288xf32>
    %408 = tpu.matmul %405, %407, %cst {dimension_numbers = #tpu.dot_dimension_numbers<[1], [0], [0], [1], [0, 0, 1, 1], [], []>} : vector<8x36xbf16>, vector<36x288xbf16>, vector<8x288xf32> -> vector<8x288xf32>
    %c1_491 = arith.constant 1 : index
    %c0_492 = arith.constant 0 : index
    %c0_493 = arith.constant 0 : index
    %409 = vector.load %arg3[%c1_491, %c0_492, %c0_493] : memref<3x8x36xbf16, #tpu.memory_space<vmem>>, vector<1x8x36xbf16>
    %410 = vector.shape_cast %409 : vector<1x8x36xbf16> to vector<8x36xbf16>
    %c1_494 = arith.constant 1 : index
    %c0_495 = arith.constant 0 : index
    %c0_496 = arith.constant 0 : index
    %411 = vector.load %arg8[%c1_494, %c0_495, %c0_496] : memref<6x36x288xbf16, #tpu.memory_space<vmem>>, vector<1x36x288xbf16>
    %412 = vector.shape_cast %411 : vector<1x36x288xbf16> to vector<36x288xbf16>
    %cst_497 = arith.constant dense<0.000000e+00> : vector<8x288xf32>
    %413 = tpu.matmul %410, %412, %cst_497 {dimension_numbers = #tpu.dot_dimension_numbers<[1], [0], [0], [1], [0, 0, 1, 1], [], []>} : vector<8x36xbf16>, vector<36x288xbf16>, vector<8x288xf32> -> vector<8x288xf32>
    %414 = arith.addf %408, %413 : vector<8x288xf32>
    %c2_498 = arith.constant 2 : index
    %c0_499 = arith.constant 0 : index
    %c0_500 = arith.constant 0 : index
    %415 = vector.load %arg3[%c2_498, %c0_499, %c0_500] : memref<3x8x36xbf16, #tpu.memory_space<vmem>>, vector<1x8x36xbf16>
    %416 = vector.shape_cast %415 : vector<1x8x36xbf16> to vector<8x36xbf16>
    %c2_501 = arith.constant 2 : index
    %c0_502 = arith.constant 0 : index
    %c0_503 = arith.constant 0 : index
    %417 = vector.load %arg8[%c2_501, %c0_502, %c0_503] : memref<6x36x288xbf16, #tpu.memory_space<vmem>>, vector<1x36x288xbf16>
    %418 = vector.shape_cast %417 : vector<1x36x288xbf16> to vector<36x288xbf16>
    %cst_504 = arith.constant dense<0.000000e+00> : vector<8x288xf32>
    %419 = tpu.matmul %416, %418, %cst_504 {dimension_numbers = #tpu.dot_dimension_numbers<[1], [0], [0], [1], [0, 0, 1, 1], [], []>} : vector<8x36xbf16>, vector<36x288xbf16>, vector<8x288xf32> -> vector<8x288xf32>
    %420 = arith.addf %414, %419 : vector<8x288xf32>
    %421 = vector.broadcast %402 : vector<8x1xf32> to vector<8x288xf32>
    %422 = arith.mulf %420, %421 : vector<8x288xf32>
    %423 = vector.broadcast %403 : vector<8x1xf32> to vector<8x288xf32>
    %424 = arith.addf %422, %423 : vector<8x288xf32>
    %cst_505 = arith.constant 0.000000e+00 : f32
    %425 = vector.broadcast %cst_505 : f32 to vector<8x288xf32>
    %426 = arith.maximumf %424, %425 : vector<8x288xf32>
    %c0_506 = arith.constant 0 : index
    %c0_507 = arith.constant 0 : index
    %c0_508 = arith.constant 0 : index
    %c0_509 = arith.constant 0 : index
    %427 = vector.load %arg6[%c0_506, %c0_507, %c0_508, %c0_509] : memref<1x4x8x288xf32, #tpu.memory_space<vmem>>, vector<1x1x8x288xf32>
    %428 = vector.shape_cast %427 : vector<1x1x8x288xf32> to vector<8x288xf32>
    %429 = vector.shape_cast %426 : vector<8x288xf32> to vector<1x1x8x288xf32>
    tpu.vector_store %arg6[%c0_506, %c0_507, %c0_508, %c0_509], %429 {strides = array<i32>} : memref<1x4x8x288xf32, #tpu.memory_space<vmem>>, vector<1x1x8x288xf32>,
    %c0_510 = arith.constant 0 : index
    %c0_511 = arith.constant 0 : index
    %c0_512 = arith.constant 0 : index
    %430 = vector.load %arg3[%c0_510, %c0_511, %c0_512] : memref<3x8x36xbf16, #tpu.memory_space<vmem>>, vector<1x8x36xbf16>
    %431 = vector.shape_cast %430 : vector<1x8x36xbf16> to vector<8x36xbf16>
    %c1_513 = arith.constant 1 : index
    %c0_514 = arith.constant 0 : index
    %c0_515 = arith.constant 0 : index
    %432 = vector.load %arg8[%c1_513, %c0_514, %c0_515] : memref<6x36x288xbf16, #tpu.memory_space<vmem>>, vector<1x36x288xbf16>
    %433 = vector.shape_cast %432 : vector<1x36x288xbf16> to vector<36x288xbf16>
    %cst_516 = arith.constant dense<0.000000e+00> : vector<8x288xf32>
    %434 = tpu.matmul %431, %433, %cst_516 {dimension_numbers = #tpu.dot_dimension_numbers<[1], [0], [0], [1], [0, 0, 1, 1], [], []>} : vector<8x36xbf16>, vector<36x288xbf16>, vector<8x288xf32> -> vector<8x288xf32>
    %c1_517 = arith.constant 1 : index
    %c0_518 = arith.constant 0 : index
    %c0_519 = arith.constant 0 : index
    %435 = vector.load %arg3[%c1_517, %c0_518, %c0_519] : memref<3x8x36xbf16, #tpu.memory_space<vmem>>, vector<1x8x36xbf16>
    %436 = vector.shape_cast %435 : vector<1x8x36xbf16> to vector<8x36xbf16>
    %c2_520 = arith.constant 2 : index
    %c0_521 = arith.constant 0 : index
    %c0_522 = arith.constant 0 : index
    %437 = vector.load %arg8[%c2_520, %c0_521, %c0_522] : memref<6x36x288xbf16, #tpu.memory_space<vmem>>, vector<1x36x288xbf16>
    %438 = vector.shape_cast %437 : vector<1x36x288xbf16> to vector<36x288xbf16>
    %cst_523 = arith.constant dense<0.000000e+00> : vector<8x288xf32>
    %439 = tpu.matmul %436, %438, %cst_523 {dimension_numbers = #tpu.dot_dimension_numbers<[1], [0], [0], [1], [0, 0, 1, 1], [], []>} : vector<8x36xbf16>, vector<36x288xbf16>, vector<8x288xf32> -> vector<8x288xf32>
    %440 = arith.addf %434, %439 : vector<8x288xf32>
    %c2_524 = arith.constant 2 : index
    %c0_525 = arith.constant 0 : index
    %c0_526 = arith.constant 0 : index
    %441 = vector.load %arg3[%c2_524, %c0_525, %c0_526] : memref<3x8x36xbf16, #tpu.memory_space<vmem>>, vector<1x8x36xbf16>
    %442 = vector.shape_cast %441 : vector<1x8x36xbf16> to vector<8x36xbf16>
    %c3_527 = arith.constant 3 : index
    %c0_528 = arith.constant 0 : index
    %c0_529 = arith.constant 0 : index
    %443 = vector.load %arg8[%c3_527, %c0_528, %c0_529] : memref<6x36x288xbf16, #tpu.memory_space<vmem>>, vector<1x36x288xbf16>
    %444 = vector.shape_cast %443 : vector<1x36x288xbf16> to vector<36x288xbf16>
    %cst_530 = arith.constant dense<0.000000e+00> : vector<8x288xf32>
    %445 = tpu.matmul %442, %444, %cst_530 {dimension_numbers = #tpu.dot_dimension_numbers<[1], [0], [0], [1], [0, 0, 1, 1], [], []>} : vector<8x36xbf16>, vector<36x288xbf16>, vector<8x288xf32> -> vector<8x288xf32>
    %446 = arith.addf %440, %445 : vector<8x288xf32>
    %447 = vector.broadcast %402 : vector<8x1xf32> to vector<8x288xf32>
    %448 = arith.mulf %446, %447 : vector<8x288xf32>
    %449 = vector.broadcast %403 : vector<8x1xf32> to vector<8x288xf32>
    %450 = arith.addf %448, %449 : vector<8x288xf32>
    %cst_531 = arith.constant 0.000000e+00 : f32
    %451 = vector.broadcast %cst_531 : f32 to vector<8x288xf32>
    %452 = arith.maximumf %450, %451 : vector<8x288xf32>
    %c0_532 = arith.constant 0 : index
    %c1_533 = arith.constant 1 : index
    %c0_534 = arith.constant 0 : index
    %c0_535 = arith.constant 0 : index
    %453 = vector.load %arg6[%c0_532, %c1_533, %c0_534, %c0_535] : memref<1x4x8x288xf32, #tpu.memory_space<vmem>>, vector<1x1x8x288xf32>
    %454 = vector.shape_cast %453 : vector<1x1x8x288xf32> to vector<8x288xf32>
    %455 = vector.shape_cast %452 : vector<8x288xf32> to vector<1x1x8x288xf32>
    tpu.vector_store %arg6[%c0_532, %c1_533, %c0_534, %c0_535], %455 {strides = array<i32>} : memref<1x4x8x288xf32, #tpu.memory_space<vmem>>, vector<1x1x8x288xf32>,
    %c0_536 = arith.constant 0 : index
    %c0_537 = arith.constant 0 : index
    %c0_538 = arith.constant 0 : index
    %456 = vector.load %arg3[%c0_536, %c0_537, %c0_538] : memref<3x8x36xbf16, #tpu.memory_space<vmem>>, vector<1x8x36xbf16>
    %457 = vector.shape_cast %456 : vector<1x8x36xbf16> to vector<8x36xbf16>
    %c2_539 = arith.constant 2 : index
    %c0_540 = arith.constant 0 : index
    %c0_541 = arith.constant 0 : index
    %458 = vector.load %arg8[%c2_539, %c0_540, %c0_541] : memref<6x36x288xbf16, #tpu.memory_space<vmem>>, vector<1x36x288xbf16>
    %459 = vector.shape_cast %458 : vector<1x36x288xbf16> to vector<36x288xbf16>
    %cst_542 = arith.constant dense<0.000000e+00> : vector<8x288xf32>
    %460 = tpu.matmul %457, %459, %cst_542 {dimension_numbers = #tpu.dot_dimension_numbers<[1], [0], [0], [1], [0, 0, 1, 1], [], []>} : vector<8x36xbf16>, vector<36x288xbf16>, vector<8x288xf32> -> vector<8x288xf32>
    %c1_543 = arith.constant 1 : index
    %c0_544 = arith.constant 0 : index
    %c0_545 = arith.constant 0 : index
    %461 = vector.load %arg3[%c1_543, %c0_544, %c0_545] : memref<3x8x36xbf16, #tpu.memory_space<vmem>>, vector<1x8x36xbf16>
    %462 = vector.shape_cast %461 : vector<1x8x36xbf16> to vector<8x36xbf16>
    %c3_546 = arith.constant 3 : index
    %c0_547 = arith.constant 0 : index
    %c0_548 = arith.constant 0 : index
    %463 = vector.load %arg8[%c3_546, %c0_547, %c0_548] : memref<6x36x288xbf16, #tpu.memory_space<vmem>>, vector<1x36x288xbf16>
    %464 = vector.shape_cast %463 : vector<1x36x288xbf16> to vector<36x288xbf16>
    %cst_549 = arith.constant dense<0.000000e+00> : vector<8x288xf32>
    %465 = tpu.matmul %462, %464, %cst_549 {dimension_numbers = #tpu.dot_dimension_numbers<[1], [0], [0], [1], [0, 0, 1, 1], [], []>} : vector<8x36xbf16>, vector<36x288xbf16>, vector<8x288xf32> -> vector<8x288xf32>
    %466 = arith.addf %460, %465 : vector<8x288xf32>
    %c2_550 = arith.constant 2 : index
    %c0_551 = arith.constant 0 : index
    %c0_552 = arith.constant 0 : index
    %467 = vector.load %arg3[%c2_550, %c0_551, %c0_552] : memref<3x8x36xbf16, #tpu.memory_space<vmem>>, vector<1x8x36xbf16>
    %468 = vector.shape_cast %467 : vector<1x8x36xbf16> to vector<8x36xbf16>
    %c4_553 = arith.constant 4 : index
    %c0_554 = arith.constant 0 : index
    %c0_555 = arith.constant 0 : index
    %469 = vector.load %arg8[%c4_553, %c0_554, %c0_555] : memref<6x36x288xbf16, #tpu.memory_space<vmem>>, vector<1x36x288xbf16>
    %470 = vector.shape_cast %469 : vector<1x36x288xbf16> to vector<36x288xbf16>
    %cst_556 = arith.constant dense<0.000000e+00> : vector<8x288xf32>
    %471 = tpu.matmul %468, %470, %cst_556 {dimension_numbers = #tpu.dot_dimension_numbers<[1], [0], [0], [1], [0, 0, 1, 1], [], []>} : vector<8x36xbf16>, vector<36x288xbf16>, vector<8x288xf32> -> vector<8x288xf32>
    %472 = arith.addf %466, %471 : vector<8x288xf32>
    %473 = vector.broadcast %402 : vector<8x1xf32> to vector<8x288xf32>
    %474 = arith.mulf %472, %473 : vector<8x288xf32>
    %475 = vector.broadcast %403 : vector<8x1xf32> to vector<8x288xf32>
    %476 = arith.addf %474, %475 : vector<8x288xf32>
    %cst_557 = arith.constant 0.000000e+00 : f32
    %477 = vector.broadcast %cst_557 : f32 to vector<8x288xf32>
    %478 = arith.maximumf %476, %477 : vector<8x288xf32>
    %c0_558 = arith.constant 0 : index
    %c2_559 = arith.constant 2 : index
    %c0_560 = arith.constant 0 : index
    %c0_561 = arith.constant 0 : index
    %479 = vector.load %arg6[%c0_558, %c2_559, %c0_560, %c0_561] : memref<1x4x8x288xf32, #tpu.memory_space<vmem>>, vector<1x1x8x288xf32>
    %480 = vector.shape_cast %479 : vector<1x1x8x288xf32> to vector<8x288xf32>
    %481 = vector.shape_cast %478 : vector<8x288xf32> to vector<1x1x8x288xf32>
    tpu.vector_store %arg6[%c0_558, %c2_559, %c0_560, %c0_561], %481 {strides = array<i32>} : memref<1x4x8x288xf32, #tpu.memory_space<vmem>>, vector<1x1x8x288xf32>,
    %c0_562 = arith.constant 0 : index
    %c0_563 = arith.constant 0 : index
    %c0_564 = arith.constant 0 : index
    %482 = vector.load %arg3[%c0_562, %c0_563, %c0_564] : memref<3x8x36xbf16, #tpu.memory_space<vmem>>, vector<1x8x36xbf16>
    %483 = vector.shape_cast %482 : vector<1x8x36xbf16> to vector<8x36xbf16>
    %c3_565 = arith.constant 3 : index
    %c0_566 = arith.constant 0 : index
    %c0_567 = arith.constant 0 : index
    %484 = vector.load %arg8[%c3_565, %c0_566, %c0_567] : memref<6x36x288xbf16, #tpu.memory_space<vmem>>, vector<1x36x288xbf16>
    %485 = vector.shape_cast %484 : vector<1x36x288xbf16> to vector<36x288xbf16>
    %cst_568 = arith.constant dense<0.000000e+00> : vector<8x288xf32>
    %486 = tpu.matmul %483, %485, %cst_568 {dimension_numbers = #tpu.dot_dimension_numbers<[1], [0], [0], [1], [0, 0, 1, 1], [], []>} : vector<8x36xbf16>, vector<36x288xbf16>, vector<8x288xf32> -> vector<8x288xf32>
    %c1_569 = arith.constant 1 : index
    %c0_570 = arith.constant 0 : index
    %c0_571 = arith.constant 0 : index
    %487 = vector.load %arg3[%c1_569, %c0_570, %c0_571] : memref<3x8x36xbf16, #tpu.memory_space<vmem>>, vector<1x8x36xbf16>
    %488 = vector.shape_cast %487 : vector<1x8x36xbf16> to vector<8x36xbf16>
    %c4_572 = arith.constant 4 : index
    %c0_573 = arith.constant 0 : index
    %c0_574 = arith.constant 0 : index
    %489 = vector.load %arg8[%c4_572, %c0_573, %c0_574] : memref<6x36x288xbf16, #tpu.memory_space<vmem>>, vector<1x36x288xbf16>
    %490 = vector.shape_cast %489 : vector<1x36x288xbf16> to vector<36x288xbf16>
    %cst_575 = arith.constant dense<0.000000e+00> : vector<8x288xf32>
    %491 = tpu.matmul %488, %490, %cst_575 {dimension_numbers = #tpu.dot_dimension_numbers<[1], [0], [0], [1], [0, 0, 1, 1], [], []>} : vector<8x36xbf16>, vector<36x288xbf16>, vector<8x288xf32> -> vector<8x288xf32>
    %492 = arith.addf %486, %491 : vector<8x288xf32>
    %c2_576 = arith.constant 2 : index
    %c0_577 = arith.constant 0 : index
    %c0_578 = arith.constant 0 : index
    %493 = vector.load %arg3[%c2_576, %c0_577, %c0_578] : memref<3x8x36xbf16, #tpu.memory_space<vmem>>, vector<1x8x36xbf16>
    %494 = vector.shape_cast %493 : vector<1x8x36xbf16> to vector<8x36xbf16>
    %c5_579 = arith.constant 5 : index
    %c0_580 = arith.constant 0 : index
    %c0_581 = arith.constant 0 : index
    %495 = vector.load %arg8[%c5_579, %c0_580, %c0_581] : memref<6x36x288xbf16, #tpu.memory_space<vmem>>, vector<1x36x288xbf16>
    %496 = vector.shape_cast %495 : vector<1x36x288xbf16> to vector<36x288xbf16>
    %cst_582 = arith.constant dense<0.000000e+00> : vector<8x288xf32>
    %497 = tpu.matmul %494, %496, %cst_582 {dimension_numbers = #tpu.dot_dimension_numbers<[1], [0], [0], [1], [0, 0, 1, 1], [], []>} : vector<8x36xbf16>, vector<36x288xbf16>, vector<8x288xf32> -> vector<8x288xf32>
    %498 = arith.addf %492, %497 : vector<8x288xf32>
    %499 = vector.broadcast %402 : vector<8x1xf32> to vector<8x288xf32>
    %500 = arith.mulf %498, %499 : vector<8x288xf32>
    %501 = vector.broadcast %403 : vector<8x1xf32> to vector<8x288xf32>
    %502 = arith.addf %500, %501 : vector<8x288xf32>
    %cst_583 = arith.constant 0.000000e+00 : f32
    %503 = vector.broadcast %cst_583 : f32 to vector<8x288xf32>
    %504 = arith.maximumf %502, %503 : vector<8x288xf32>
    %c0_584 = arith.constant 0 : index
    %c3_585 = arith.constant 3 : index
    %c0_586 = arith.constant 0 : index
    %c0_587 = arith.constant 0 : index
    %505 = vector.load %arg6[%c0_584, %c3_585, %c0_586, %c0_587] : memref<1x4x8x288xf32, #tpu.memory_space<vmem>>, vector<1x1x8x288xf32>
    %506 = vector.shape_cast %505 : vector<1x1x8x288xf32> to vector<8x288xf32>
    %507 = vector.shape_cast %504 : vector<8x288xf32> to vector<1x1x8x288xf32>
    tpu.vector_store %arg6[%c0_584, %c3_585, %c0_586, %c0_587], %507 {strides = array<i32>} : memref<1x4x8x288xf32, #tpu.memory_space<vmem>>, vector<1x1x8x288xf32>,
    return
  }
  func.func @transform_1(%arg0: i32, %arg1: i32) -> (i32, i32, i32) {
    %c0_i32 = arith.constant 0 : i32
    %c0_i32_0 = arith.constant 0 : i32
    %c0_i32_1 = arith.constant 0 : i32
    %c0_i32_2 = arith.constant 0 : i32
    return %c0_i32, %c0_i32_0, %c0_i32_1 : i32, i32, i32
  }
  func.func @transform_2(%arg0: i32, %arg1: i32) -> (i32, i32) {
    %c0_i32 = arith.constant 0 : i32
    %c0_i32_0 = arith.constant 0 : i32
    %c0_i32_1 = arith.constant 0 : i32
    return %c0_i32, %c0_i32_0 : i32, i32
  }
  func.func @transform_3(%arg0: i32, %arg1: i32) -> (i32, i32) {
    %c0_i32 = arith.constant 0 : i32
    %c0_i32_0 = arith.constant 0 : i32
    %c0_i32_1 = arith.constant 0 : i32
    return %c0_i32, %c0_i32_0 : i32, i32
  }
  func.func @transform_4(%arg0: i32, %arg1: i32) -> (i32, i32, i32, i32) {
    %c0_i32 = arith.constant 0 : i32
    %c0_i32_0 = arith.constant 0 : i32
    %c0_i32_1 = arith.constant 0 : i32
    return %arg0, %arg1, %c0_i32, %c0_i32_0 : i32, i32, i32, i32
  }
}

</mosaic_0001>

<llo_original>
// kernel: tpu_custom_call.1
$region0: #{tpu_custom_call.1}
  #allocation0 [shape = 'u32[]', space=smem, size = 0x4, offset = 0x4, fixed_abs, tag = 'smem constant byte address 0x4 - core index']
  #allocation1 [shape = 'u32[144,128]{1,0:T(1,128)}', space=vmem, size = 0x12000, scoped, tag = 'internal scratch']
  #allocation2 [shape = 'bf16[2,6,4,384]{3,2,1,0:T(4,128)(2,1)}', space=vmem, size = 0x9000, scoped, tag = 'scratch operand']
  #allocation3 [shape = 'bf16[6,36,288]{2,1,0:T(8,128)(2,1)}', space=vmem, size = 0x2d000, scoped, tag = 'scratch operand']
  #allocation4 [shape = 's32[2]{0}', space=sflag, size = 0x8, scoped, tag = 'scratch operand']
  #allocation7 [shape = 's32[]', space=sflag, size = 0x4, offset = 0, fixed_abs, tag = 'sflag constant byte address 0x0 - dummy sync flag']
  #allocation8 [shape = 's32[]', space=sflag, size = 0x4, offset = 0, fixed_abs, tag = 'sflag constant byte address 0x0 - dummy sync flag']
  #allocation9 [shape = 'u32[]', space=smem, size = 0x4, offset = 0x44, fixed_abs, tag = 'smem constant byte address 0x44 - assertion arg 0']
  #allocation10 [shape = 'u32[]', space=smem, size = 0x4, offset = 0x48, fixed_abs, tag = 'smem constant byte address 0x48 - assertion arg 1']
  #allocation11 [shape = 's32[]', space=sflag, size = 0x4, offset = 0, fixed_abs, tag = 'sflag constant byte address 0x0 - dummy sync flag']
  #allocation12 [shape = 's32[]', space=sflag, size = 0x4, offset = 0, fixed_abs, tag = 'sflag constant byte address 0x0 - dummy sync flag']
  %s0 = inlined_call_operand.hbm [shape: bf16[2,10,4,384], index: 0, kind: input, shape index: {}]
  %s1 = inlined_call_operand.vmem [shape: bf16[3,8,36], index: 1, kind: input, shape index: {}]
  %s2 = inlined_call_operand.vmem [shape: f32[8,1], index: 2, kind: input, shape index: {}]
  %s3 = inlined_call_operand.vmem [shape: f32[8,1], index: 3, kind: input, shape index: {}]
  %s4 = inlined_call_operand.hbm [shape: f32[2,8,8,288], index: 4, kind: output, shape index: {}]
  %s5 = sld [smem:[#allocation0]]
  $region61: #{tpu_custom_call.1} parent=0
    _
  %s7 = ssub.s32 1, %s5
  %s8 = scalar_select 0, %s7, %s5
  $region1: #{tpu_custom_call.1} parent=0
    #allocation5 [shape = 'u8[98304]{0}', space=vmem, size = 0x18000, scoped, tag = 'output window, operand 0']
    #allocation6 [shape = 's32[2]{0}', space=sflag, size = 0x8, scoped, tag = 'scoped memory for tpu_custom_call.1']
    %9 = vsyncpa [#allocation6], 0
    %s10 = scalar_lea.sflag [#allocation6], 1
    %11 = vsyncpa %s10, 0
    loop: start=0, step=1, limit=6
    $region2: #{tpu_custom_call.1} parent=1 // loop_pre_header
      _
    $region3: #{tpu_custom_call.1} parent=1 // loop_header
      %s13 = sphi 0, %s17
      %p14 = scmp.ge.s32.totalorder %s13, 6
      %s20 = sphi 0, %s32
      %s21 = sphi 0, %s28
      %s22 = sphi 0, %s20
      %s23 = sphi 0, %s21
      %s24 = sphi 0, %s22
      %s25 = sphi 0, %s23
      %s33 = sphi 0, %s33
      %s35 = sphi 0, %s33
      %s36 = sphi 0, %s35
      %s50 = sphi 0, %s36
      %s54 = sphi 0, %s54
      %s56 = sphi 0, %s54
      %s57 = sphi 0, %s56
      %s71 = sphi 0, %s57
      %s75 = sphi 0, %s75
      %s77 = sphi 0, %s75
      %s78 = sphi 0, %s77
      %s92 = sphi 0, %s78
      %s100 = sphi 0, %s102
      %s103 = sphi 0, %s100
      %s104 = sphi 0, %s103
      %s120 = sphi 0, %s104
    $region4: #{tpu_custom_call.1} parent=1 // loop_header_branch
      %16 = sbr.rel (%p14) target = $region8
    $region5: #{tpu_custom_call.1} parent=1 // loop_body
      %s18 = ssub.s32 %s13, 1
      %s19 = ssub.s32 %s13, 2
      %s26 = sadd.s32 1, %s21
      %p27 = scmp.ge.s32.totalorder %s26, 2
      %s28 = scalar_select %p27, 0, %s26
      %s29 = sadd.s32 1, %s20
      %s30 = scalar_select %p27, %s29, %s20
      %p31 = scmp.ge.s32.totalorder %s30, 2
      %s32 = scalar_select %p31, 0, %s30
      %s34 = sadd.s32 %s33, 1
      %p37 = scmp.eq.s32.totalorder %s13, 3
      %p38 = scmp.ne.s32.totalorder %s33, %s35
      %p39 = scmp.eq.s32.totalorder %s13, 0
      %p40 = por %p38, %p39
      %p41 = scmp.ne.s32.totalorder %s33, %s35
      %p42 = scmp.eq.s32.totalorder %s18, 3
      %p43 = por %p41, %p42
      %p44 = scmp.ne.s32.totalorder %s35, %s36
      %p45 = scmp.eq.s32.totalorder %s18, 0
      %p46 = por %p44, %p45
      %p47 = scmp.ne.s32.totalorder %s35, %s36
      %p48 = scmp.eq.s32.totalorder %s19, 3
      %p49 = por %p47, %p48
      %p51 = scmp.ne.s32.totalorder %s36, %s50
      %p52 = scmp.eq.s32.totalorder %s19, 0
      %p53 = por %p51, %p52
      %s55 = sadd.s32 %s54, 1
      %p58 = scmp.eq.s32.totalorder %s13, 3
      %p59 = scmp.ne.s32.totalorder %s54, %s56
      %p60 = scmp.eq.s32.totalorder %s13, 0
      %p61 = por %p59, %p60
      %p62 = scmp.ne.s32.totalorder %s54, %s56
      %p63 = scmp.eq.s32.totalorder %s18, 3
      %p64 = por %p62, %p63
      %p65 = scmp.ne.s32.totalorder %s56, %s57
      %p66 = scmp.eq.s32.totalorder %s18, 0
      %p67 = por %p65, %p66
      %p68 = scmp.ne.s32.totalorder %s56, %s57
      %p69 = scmp.eq.s32.totalorder %s19, 3
      %p70 = por %p68, %p69
      %p72 = scmp.ne.s32.totalorder %s57, %s71
      %p73 = scmp.eq.s32.totalorder %s19, 0
      %p74 = por %p72, %p73
      %s76 = sadd.s32 %s75, 1
      %p79 = scmp.eq.s32.totalorder %s13, 3
      %p80 = scmp.ne.s32.totalorder %s75, %s77
      %p81 = scmp.eq.s32.totalorder %s13, 0
      %p82 = por %p80, %p81
      %p83 = scmp.ne.s32.totalorder %s75, %s77
      %p84 = scmp.eq.s32.totalorder %s18, 3
      %p85 = por %p83, %p84
      %p86 = scmp.ne.s32.totalorder %s77, %s78
      %p87 = scmp.eq.s32.totalorder %s18, 0
      %p88 = por %p86, %p87
      %p89 = scmp.ne.s32.totalorder %s77, %s78
      %p90 = scmp.eq.s32.totalorder %s19, 3
      %p91 = por %p89, %p90
      %p93 = scmp.ne.s32.totalorder %s78, %s92
      %p94 = scmp.eq.s32.totalorder %s19, 0
      %p95 = por %p93, %p94
      %s96 = ssub.s32 %s20, %s32
      %s97 = ssub.s32 %s21, %s28
      %s98 = sor.u32 %s96, %s97
      %p99 = scmp.eq.s32.totalorder %s98, 0
      %s101 = sadd.s32 %s100, 1
      %s102 = scalar_select %p99, %s100, %s101
      %p105 = pneg %p99
      %p106 = scmp.eq.s32.totalorder %s13, 3
      %p107 = por %p105, %p106
      %p108 = scmp.ne.s32.totalorder %s100, %s103
      %p109 = scmp.eq.s32.totalorder %s13, 0
      %p110 = por %p108, %p109
      %p111 = scmp.ne.s32.totalorder %s100, %s103
      %p112 = scmp.eq.s32.totalorder %s18, 3
      %p113 = por %p111, %p112
      %p114 = scmp.ne.s32.totalorder %s103, %s104
      %p115 = scmp.eq.s32.totalorder %s18, 0
      %p116 = por %p114, %p115
      %p117 = scmp.ne.s32.totalorder %s103, %s104
      %p118 = scmp.eq.s32.totalorder %s19, 3
      %p119 = por %p117, %p118
      %p121 = scmp.ne.s32.totalorder %s104, %s120
      %p122 = scmp.eq.s32.totalorder %s19, 0
      %p123 = por %p121, %p122
      %p124 = scmp.le.s32.totalorder 1, %s13
      %p125 = scmp.lt.s32.totalorder %s13, 5
      %p126 = pnand %p124, %p125
      %p127 = pneg %p126
      // Predicated region
      $region9: #{tpu_custom_call.1} parent=5 // pred_check
        _
      $region10: #{tpu_custom_call.1} parent=5 // pred_check_branch
        %129 = sbr.rel (%p126) target = $region12
      $region11: #{tpu_custom_call.1} parent=5 // pred_region
        %s130 = ssub.s32 %s13, 1
        // Predicated region
        $region13: #{tpu_custom_call.1} parent=11 // pred_check
          %p131 = pneg %p46
        $region14: #{tpu_custom_call.1} parent=11 // pred_check_branch
          %133 = sbr.rel (%p131) target = $region16
        $region15: #{tpu_custom_call.1} parent=11 // pred_region
          _
        $region16: #{tpu_custom_call.1} parent=11 // pred_fallthru
          _
        // Predicated region
        $region17: #{tpu_custom_call.1} parent=11 // pred_check
          %p134 = pneg %p67
        $region18: #{tpu_custom_call.1} parent=11 // pred_check_branch
          %136 = sbr.rel (%p134) target = $region20
        $region19: #{tpu_custom_call.1} parent=11 // pred_region
          _
        $region20: #{tpu_custom_call.1} parent=11 // pred_fallthru
          _
        // Predicated region
        $region21: #{tpu_custom_call.1} parent=11 // pred_check
          %p137 = pneg %p88
        $region22: #{tpu_custom_call.1} parent=11 // pred_check_branch
          %139 = sbr.rel (%p137) target = $region24
        $region23: #{tpu_custom_call.1} parent=11 // pred_region
          _
        $region24: #{tpu_custom_call.1} parent=11 // pred_fallthru
          _
      $region12: #{tpu_custom_call.1} parent=5 // pred_fallthru
        _
      %p140 = scmp.lt.s32.totalorder %s13, 4
      // Predicated region
      $region25: #{tpu_custom_call.1} parent=5 // pred_check
        %p141 = pneg %p140
      $region26: #{tpu_custom_call.1} parent=5 // pred_check_branch
        %143 = sbr.rel (%p141) target = $region28
      $region27: #{tpu_custom_call.1} parent=5 // pred_region
        _
      $region28: #{tpu_custom_call.1} parent=5 // pred_fallthru
        _
      %p144 = scmp.le.s32.totalorder 1, %s13
      %p145 = scmp.lt.s32.totalorder %s13, 5
      %p146 = pnand %p144, %p145
      %p147 = pneg %p146
      // Predicated region
      $region29: #{tpu_custom_call.1} parent=5 // pred_check
        _
      $region30: #{tpu_custom_call.1} parent=5 // pred_check_branch
        %149 = sbr.rel (%p146) target = $region32
      $region31: #{tpu_custom_call.1} parent=5 // pred_region
        %s150 = ssub.s32 %s13, 1
        %p151 = pneg %p46
        %p152 = pneg %p43
        %p153 = pneg %p67
        %p154 = pneg %p64
        %p155 = pneg %p88
        %p156 = pneg %p85
        %p157 = pneg %p116
        %p158 = pneg %p113
        %s159 = sand.u32 %s103, 1
        %s160 = scalar_lea.sflag [#allocation6], %s159
        %s161 = sand.u32 %s103, 1
        %s162 = smul.addr %s161, 96
        %s163 = scalar_lea.vmem [#allocation5], %s162
        %s164 = smul.u32 4, %s23
        %p166 = scmp.lt.s32.totalorder %s23, 0
        %s167 = ssub.s32 0, %s23
        %s168 = scalar_select %p166, %s167, %s23
        %s169 = sand.u32 %s168, 1
        %s170 = ssub.s32 0, %s169
        %s171 = scalar_select %p166, %s170, %s169
        %p172 = scmp.ne.s32.totalorder %s171, 0
        %p173 = scmp.lt.s32.totalorder %s171, 0
        %p174 = pnand %p173, %p172
        %p175 = pneg %p174
        %s176 = sadd.s32 %s171, 2
        %s177 = scalar_select %p175, %s176, %s171
        %p178 = scmp.eq.s32.totalorder %s23, 0
        // Predicated region
        $region33: #{tpu_custom_call.1} parent=31 // pred_check
          %p179 = pneg %p178
        $region34: #{tpu_custom_call.1} parent=31 // pred_check_branch
          %181 = sbr.rel (%p179) target = $region36
        $region35: #{tpu_custom_call.1} parent=31 // pred_region
          %s182 = smul.u32 %s22, 30
          %s183 = smul.addr %s182, 32
          %s184 = scalar_lea.hbm %s0, %s183
          %s185 = smul.u32 %s177, 18
          %s186 = smul.addr %s185, 2
          %s187 = scalar_lea.vmem [#allocation2], %s186
          %s188 = scalar_lea.sflag [#allocation4], %s177
          // Predicated region
          $region37: #{tpu_custom_call.1} parent=35 // pred_check
            _
          $region38: #{tpu_custom_call.1} parent=35 // pred_check_branch
            %190 = sbr.rel target = $region40
          $region39: #{tpu_custom_call.1} parent=35 // pred_region
            %191 = sst [smem:[#allocation9]] [#allocation8]
            %192 = sst [smem:[#allocation10]] [#allocation7]
          $region40: #{tpu_custom_call.1} parent=35 // pred_fallthru
            _
          %194 = shalt.err (0)
          %s196 = sshll.u32 %s187, 4
          %s197 = int_to_ptr.vmem [resolvable:$true] %s196
          %199 = dma.hbm_to_vmem [thread:$0]  %s184, 576, %s197, %s188
        $region36: #{tpu_custom_call.1} parent=31 // pred_fallthru
          _
        %s200 = sadd.s32 %s23, 1
        %p201 = scmp.lt.s32.totalorder %s200, 2
        // Predicated region
        $region41: #{tpu_custom_call.1} parent=31 // pred_check
          %p202 = pneg %p201
        $region42: #{tpu_custom_call.1} parent=31 // pred_check_branch
          %204 = sbr.rel (%p202) target = $region44
        $region43: #{tpu_custom_call.1} parent=31 // pred_region
          %s205 = ssub.s32 1, %s177
          %s206 = smul.u32 %s200, 4
          %s207 = smul.u32 %s206, 3
          %s208 = smul.u32 %s22, 30
          %s209 = sadd.s32 %s207, %s208
          %s210 = smul.addr %s209, 32
          %s211 = scalar_lea.hbm %s0, %s210
          %s212 = smul.u32 %s205, 18
          %s213 = smul.addr %s212, 2
          %s214 = scalar_lea.vmem [#allocation2], %s213
          %s215 = scalar_lea.sflag [#allocation4], %s205
          // Predicated region
          $region45: #{tpu_custom_call.1} parent=43 // pred_check
            _
          $region46: #{tpu_custom_call.1} parent=43 // pred_check_branch
            %217 = sbr.rel target = $region48
          $region47: #{tpu_custom_call.1} parent=43 // pred_region
            %218 = sst [smem:[#allocation9]] [#allocation12]
            %219 = sst [smem:[#allocation10]] [#allocation11]
          $region48: #{tpu_custom_call.1} parent=43 // pred_fallthru
            _
          %221 = shalt.err (0)
          %s223 = sshll.u32 %s214, 4
          %s224 = int_to_ptr.vmem [resolvable:$true] %s223
          %226 = dma.hbm_to_vmem [thread:$0]  %s211, 576, %s224, %s215
        $region44: #{tpu_custom_call.1} parent=31 // pred_fallthru
          _
        %s227 = smul.u32 %s177, 18
        %s228 = smul.addr %s227, 2
        %s229 = scalar_lea.vmem [#allocation2], %s228
        %s230 = scalar_lea.sflag [#allocation4], %s177
        %s231 = smul.u32 2, 6
        %s232 = smul.u32 %s231, 1
        %s233 = smul.u32 %s232, 3
        %s234 = sshll.u32 %s233, 4
        %235 = dma.done %s230, %s234
        %v236 = vld [vmem:[%s229] sm:$0x3f]
        %v238 = vcombine.high %v236, %v236
        %v240 = vunpack.c.l.s4 1983009808
        %v241 = vunpack.c.0.s8 %v240
        %v242 = vlaneseq
        %v243 = vshrl.u32 %v242, 7
        %v244 = vsub.s32 %v241, %v243
        %v245 = vrot.slane %v236, %v244
        %v247 = vunpack.c.l.s4 1983009808
        %v248 = vunpack.c.0.s8 %v247
        %v249 = vlaneseq
        %v250 = vshrl.u32 %v249, 7
        %v251 = vsub.s32 %v248, %v250
        %v252 = vrot.slane %v238, %v251
        %255 = vst [vmem:[#allocation3] sm:$0x33] %v245
        %vm256 = vcmask 254976
        %257 = vst.msk [vmem:[#allocation3 + $0x8] sm:$0x3] %vm256, %v252
        %v258 = vld [vmem:[%s229] sm:$0x3f]
        %v260 = vcombine.low %v258, %v258
        %v262 = vunpack.c.l.s4 1983009808
        %v263 = vunpack.c.0.s8 %v262
        %v264 = vlaneseq
        %v265 = vshrl.u32 %v264, 7
        %v266 = vsub.s32 %v263, %v265
        %v267 = vrot.slane %v260, %v266
        %v269 = vunpack.c.l.s4 1983009808
        %v270 = vunpack.c.0.s8 %v269
        %v271 = vlaneseq
        %v272 = vshrl.u32 %v271, 7
        %v273 = vsub.s32 %v270, %v272
        %v274 = vrot.slane %v258, %v273
        %275 = vrot.lane.b32.xlu0 %v267, 127
        %v276 = vpop.permute.xlu0 %275
        %277 = vrot.lane.b32.xlu0 %v274, 127
        %v278 = vpop.permute.xlu0 %277
        %v279 = vrot.slane %v276, 4
        %v280 = vrot.slane %v278, 4
        %vm281 = vcmask 1043456
        %v282 = vsel %vm281, %v279, %v280
        %vm283 = vcmask 1039360
        %v284 = vsel %vm283, %v276, %v282
        %287 = vst [vmem:[#allocation3] sm:$0xcc] %v284
        %vm288 = vcmask 257026
        %289 = vst.msk [vmem:[#allocation3 + $0x8] sm:$0xc] %vm288, %v278
        %v290 = vld [vmem:[%s229] sm:$0x3f]
        %v292 = vcombine.high %v290, %v290
        %v294 = vunpack.c.l.s4 1983009808
        %v295 = vunpack.c.0.s8 %v294
        %v296 = vlaneseq
        %v297 = vshrl.u32 %v296, 7
        %v298 = vsub.s32 %v295, %v297
        %v299 = vrot.slane %v290, %v298
        %v301 = vunpack.c.l.s4 1983009808
        %v302 = vunpack.c.0.s8 %v301
        %v303 = vlaneseq
        %v304 = vshrl.u32 %v303, 7
        %v305 = vsub.s32 %v302, %v304
        %v306 = vrot.slane %v292, %v305
        %307 = vrot.lane.b32.xlu0 %v299, 126
        %v308 = vpop.permute.xlu0 %307
        %309 = vrot.lane.b32.xlu0 %v306, 126
        %v310 = vpop.permute.xlu0 %309
        %v311 = vrot.slane %v308, 4
        %v312 = vrot.slane %v310, 4
        %v313 = vsel %vm281, %v311, %v312
        %vm314 = vcmask 1031168
        %v315 = vsel %vm314, %v308, %v313
        %318 = vst [vmem:[#allocation3 + $0xc] sm:$0x33] %v315
        %319 = vst.msk [vmem:[#allocation3 + $0x14] sm:$0x3] %vm256, %v310
        %v320 = vld [vmem:[%s229] sm:$0x3f]
        %v322 = vcombine.low %v320, %v320
        %v324 = vunpack.c.l.s4 1983009808
        %v325 = vunpack.c.0.s8 %v324
        %v326 = vlaneseq
        %v327 = vshrl.u32 %v326, 7
        %v328 = vsub.s32 %v325, %v327
        %v329 = vrot.slane %v322, %v328
        %v331 = vunpack.c.l.s4 1983009808
        %v332 = vunpack.c.0.s8 %v331
        %v333 = vlaneseq
        %v334 = vshrl.u32 %v333, 7
        %v335 = vsub.s32 %v332, %v334
        %v336 = vrot.slane %v320, %v335
        %337 = vrot.lane.b32.xlu0 %v329, 110
        %v338 = vpop.permute.xlu0 %337
        %339 = vrot.lane.b32.xlu0 %v336, 110
        %v340 = vpop.permute.xlu0 %339
        %v341 = vrot.slane %v338, 4
        %v342 = vrot.slane %v340, 4
        %v343 = vsel %vm281, %v341, %v342
        %vm344 = vcmask 900096
        %v345 = vsel %vm344, %v338, %v343
        %348 = vst [vmem:[#allocation3 + $0xc] sm:$0xcc] %v345
        %349 = vst.msk [vmem:[#allocation3 + $0x14] sm:$0xc] %vm288, %v340
        %v350 = vld [vmem:[%s229] sm:$0x3f]
        %v352 = vcombine.high %v350, %v350
        %v354 = vunpack.c.l.s4 1983009808
        %v355 = vunpack.c.0.s8 %v354
        %v356 = vlaneseq
        %v357 = vshrl.u32 %v356, 7
        %v358 = vsub.s32 %v355, %v357
        %v359 = vrot.slane %v350, %v358
        %v361 = vunpack.c.l.s4 1983009808
        %v362 = vunpack.c.0.s8 %v361
        %v363 = vlaneseq
        %v364 = vshrl.u32 %v363, 7
        %v365 = vsub.s32 %v362, %v364
        %v366 = vrot.slane %v352, %v365
        %367 = vrot.lane.b32.xlu0 %v359, 109
        %v368 = vpop.permute.xlu0 %367
        %369 = vrot.lane.b32.xlu0 %v366, 109
        %v370 = vpop.permute.xlu0 %369
        %v371 = vrot.slane %v368, 4
        %v372 = vrot.slane %v370, 4
        %v373 = vsel %vm281, %v371, %v372
        %vm374 = vcmask 891904
        %v375 = vsel %vm374, %v368, %v373
        %378 = vst [vmem:[#allocation3 + $0x18] sm:$0x33] %v375
        %379 = vst.msk [vmem:[#allocation3 + $0x20] sm:$0x3] %vm256, %v370
        %v380 = vld [vmem:[%s229] sm:$0x3f]
        %v382 = vcombine.low %v380, %v380
        %v384 = vunpack.c.l.s4 1983009808
        %v385 = vunpack.c.0.s8 %v384
        %v386 = vlaneseq
        %v387 = vshrl.u32 %v386, 7
        %v388 = vsub.s32 %v385, %v387
        %v389 = vrot.slane %v382, %v388
        %v391 = vunpack.c.l.s4 1983009808
        %v392 = vunpack.c.0.s8 %v391
        %v393 = vlaneseq
        %v394 = vshrl.u32 %v393, 7
        %v395 = vsub.s32 %v392, %v394
        %v396 = vrot.slane %v380, %v395
        %397 = vrot.lane.b32.xlu0 %v389, 108
        %v398 = vpop.permute.xlu0 %397
        %399 = vrot.lane.b32.xlu0 %v396, 108
        %v400 = vpop.permute.xlu0 %399
        %v401 = vrot.slane %v398, 4
        %v402 = vrot.slane %v400, 4
        %v403 = vsel %vm281, %v401, %v402
        %vm404 = vcmask 883712
        %v405 = vsel %vm404, %v398, %v403
        %408 = vst [vmem:[#allocation3 + $0x18] sm:$0xcc] %v405
        %409 = vst.msk [vmem:[#allocation3 + $0x20] sm:$0xc] %vm288, %v400
        %v410 = vld [vmem:[%s229] sm:$0x3f]
        %v412 = vcombine.high %v410, %v410
        %v414 = vunpack.c.l.s4 1983009808
        %v415 = vunpack.c.0.s8 %v414
        %v416 = vlaneseq
        %v417 = vshrl.u32 %v416, 7
        %v418 = vsub.s32 %v415, %v417
        %v419 = vrot.slane %v410, %v418
        %v421 = vunpack.c.l.s4 1983009808
        %v422 = vunpack.c.0.s8 %v421
        %v423 = vlaneseq
        %v424 = vshrl.u32 %v423, 7
        %v425 = vsub.s32 %v422, %v424
        %v426 = vrot.slane %v412, %v425
        %427 = vrot.lane.b32.xlu0 %v419, 92
        %v428 = vpop.permute.xlu0 %427
        %429 = vrot.lane.b32.xlu0 %v426, 92
        %v430 = vpop.permute.xlu0 %429
        %v431 = vrot.slane %v428, 4
        %v432 = vrot.slane %v430, 4
        %v433 = vsel %vm281, %v431, %v432
        %vm434 = vcmask 752640
        %v435 = vsel %vm434, %v428, %v433
        %438 = vst [vmem:[#allocation3 + $0x24] sm:$0x33] %v435
        %439 = vst.msk [vmem:[#allocation3 + $0x2c] sm:$0x3] %vm256, %v430
        %v440 = vld [vmem:[%s229] sm:$0x3f]
        %v442 = vcombine.low %v440, %v440
        %v444 = vunpack.c.l.s4 1983009808
        %v445 = vunpack.c.0.s8 %v444
        %v446 = vlaneseq
        %v447 = vshrl.u32 %v446, 7
        %v448 = vsub.s32 %v445, %v447
        %v449 = vrot.slane %v442, %v448
        %v451 = vunpack.c.l.s4 1983009808
        %v452 = vunpack.c.0.s8 %v451
        %v453 = vlaneseq
        %v454 = vshrl.u32 %v453, 7
        %v455 = vsub.s32 %v452, %v454
        %v456 = vrot.slane %v440, %v455
        %457 = vrot.lane.b32.xlu0 %v449, 91
        %v458 = vpop.permute.xlu0 %457
        %459 = vrot.lane.b32.xlu0 %v456, 91
        %v460 = vpop.permute.xlu0 %459
        %v461 = vrot.slane %v458, 4
        %v462 = vrot.slane %v460, 4
        %v463 = vsel %vm281, %v461, %v462
        %vm464 = vcmask 744448
        %v465 = vsel %vm464, %v458, %v463
        %468 = vst [vmem:[#allocation3 + $0x24] sm:$0xcc] %v465
        %469 = vst.msk [vmem:[#allocation3 + $0x2c] sm:$0xc] %vm288, %v460
        %v470 = vld [vmem:[%s229] sm:$0x3f]
        %v472 = vcombine.high %v470, %v470
        %v474 = vunpack.c.l.s4 1983009808
        %v475 = vunpack.c.0.s8 %v474
        %v476 = vlaneseq
        %v477 = vshrl.u32 %v476, 7
        %v478 = vsub.s32 %v475, %v477
        %v479 = vrot.slane %v470, %v478
        %v481 = vunpack.c.l.s4 1983009808
        %v482 = vunpack.c.0.s8 %v481
        %v483 = vlaneseq
        %v484 = vshrl.u32 %v483, 7
        %v485 = vsub.s32 %v482, %v484
        %v486 = vrot.slane %v472, %v485
        %487 = vrot.lane.b32.xlu0 %v479, 90
        %v488 = vpop.permute.xlu0 %487
        %489 = vrot.lane.b32.xlu0 %v486, 90
        %v490 = vpop.permute.xlu0 %489
        %v491 = vrot.slane %v488, 4
        %v492 = vrot.slane %v490, 4
        %v493 = vsel %vm281, %v491, %v492
        %vm494 = vcmask 736256
        %v495 = vsel %vm494, %v488, %v493
        %498 = vst [vmem:[#allocation3 + $0x30] sm:$0x33] %v495
        %499 = vst.msk [vmem:[#allocation3 + $0x38] sm:$0x3] %vm256, %v490
        %s500 = scalar_lea.vmem %s229, 6 [#allocation2]
        %v501 = vld [vmem:[%s500] sm:$0x3f]
        %v503 = vcombine.high %v501, %v501
        %v505 = vunpack.c.l.s4 1983009808
        %v506 = vunpack.c.0.s8 %v505
        %v507 = vlaneseq
        %v508 = vshrl.u32 %v507, 7
        %v509 = vsub.s32 %v506, %v508
        %v510 = vrot.slane %v501, %v509
        %v512 = vunpack.c.l.s4 1983009808
        %v513 = vunpack.c.0.s8 %v512
        %v514 = vlaneseq
        %v515 = vshrl.u32 %v514, 7
        %v516 = vsub.s32 %v513, %v515
        %v517 = vrot.slane %v503, %v516
        %s520 = scalar_lea.vmem [#allocation3], 60
        %521 = vst [vmem:[%s520] sm:$0x33] %v510
        %522 = vst.msk [vmem:[%s520 + $0x8] sm:$0x3] %vm256, %v517
        %v523 = vld [vmem:[%s500] sm:$0x3f]
        %v525 = vcombine.low %v523, %v523
        %v527 = vunpack.c.l.s4 1983009808
        %v528 = vunpack.c.0.s8 %v527
        %v529 = vlaneseq
        %v530 = vshrl.u32 %v529, 7
        %v531 = vsub.s32 %v528, %v530
        %v532 = vrot.slane %v525, %v531
        %v534 = vunpack.c.l.s4 1983009808
        %v535 = vunpack.c.0.s8 %v534
        %v536 = vlaneseq
        %v537 = vshrl.u32 %v536, 7
        %v538 = vsub.s32 %v535, %v537
        %v539 = vrot.slane %v523, %v538
        %540 = vrot.lane.b32.xlu0 %v532, 127
        %v541 = vpop.permute.xlu0 %540
        %542 = vrot.lane.b32.xlu0 %v539, 127
        %v543 = vpop.permute.xlu0 %542
        %v544 = vrot.slane %v541, 4
        %v545 = vrot.slane %v543, 4
        %v546 = vsel %vm281, %v544, %v545
        %v547 = vsel %vm283, %v541, %v546
        %550 = vst [vmem:[%s520] sm:$0xcc] %v547
        %551 = vst.msk [vmem:[%s520 + $0x8] sm:$0xc] %vm288, %v543
        %v552 = vld [vmem:[%s500] sm:$0x3f]
        %v554 = vcombine.high %v552, %v552
        %v556 = vunpack.c.l.s4 1983009808
        %v557 = vunpack.c.0.s8 %v556
        %v558 = vlaneseq
        %v559 = vshrl.u32 %v558, 7
        %v560 = vsub.s32 %v557, %v559
        %v561 = vrot.slane %v552, %v560
        %v563 = vunpack.c.l.s4 1983009808
        %v564 = vunpack.c.0.s8 %v563
        %v565 = vlaneseq
        %v566 = vshrl.u32 %v565, 7
        %v567 = vsub.s32 %v564, %v566
        %v568 = vrot.slane %v554, %v567
        %569 = vrot.lane.b32.xlu0 %v561, 126
        %v570 = vpop.permute.xlu0 %569
        %571 = vrot.lane.b32.xlu0 %v568, 126
        %v572 = vpop.permute.xlu0 %571
        %v573 = vrot.slane %v570, 4
        %v574 = vrot.slane %v572, 4
        %v575 = vsel %vm281, %v573, %v574
        %v576 = vsel %vm314, %v570, %v575
        %579 = vst [vmem:[%s520 + $0xc] sm:$0x33] %v576
        %580 = vst.msk [vmem:[%s520 + $0x14] sm:$0x3] %vm256, %v572
        %v581 = vld [vmem:[%s500] sm:$0x3f]
        %v583 = vcombine.low %v581, %v581
        %v585 = vunpack.c.l.s4 1983009808
        %v586 = vunpack.c.0.s8 %v585
        %v587 = vlaneseq
        %v588 = vshrl.u32 %v587, 7
        %v589 = vsub.s32 %v586, %v588
        %v590 = vrot.slane %v583, %v589
        %v592 = vunpack.c.l.s4 1983009808
        %v593 = vunpack.c.0.s8 %v592
        %v594 = vlaneseq
        %v595 = vshrl.u32 %v594, 7
        %v596 = vsub.s32 %v593, %v595
        %v597 = vrot.slane %v581, %v596
        %598 = vrot.lane.b32.xlu0 %v590, 110
        %v599 = vpop.permute.xlu0 %598
        %600 = vrot.lane.b32.xlu0 %v597, 110
        %v601 = vpop.permute.xlu0 %600
        %v602 = vrot.slane %v599, 4
        %v603 = vrot.slane %v601, 4
        %v604 = vsel %vm281, %v602, %v603
        %v605 = vsel %vm344, %v599, %v604
        %608 = vst [vmem:[%s520 + $0xc] sm:$0xcc] %v605
        %609 = vst.msk [vmem:[%s520 + $0x14] sm:$0xc] %vm288, %v601
        %v610 = vld [vmem:[%s500] sm:$0x3f]
        %v612 = vcombine.high %v610, %v610
        %v614 = vunpack.c.l.s4 1983009808
        %v615 = vunpack.c.0.s8 %v614
        %v616 = vlaneseq
        %v617 = vshrl.u32 %v616, 7
        %v618 = vsub.s32 %v615, %v617
        %v619 = vrot.slane %v610, %v618
        %v621 = vunpack.c.l.s4 1983009808
        %v622 = vunpack.c.0.s8 %v621
        %v623 = vlaneseq
        %v624 = vshrl.u32 %v623, 7
        %v625 = vsub.s32 %v622, %v624
        %v626 = vrot.slane %v612, %v625
        %627 = vrot.lane.b32.xlu0 %v619, 109
        %v628 = vpop.permute.xlu0 %627
        %629 = vrot.lane.b32.xlu0 %v626, 109
        %v630 = vpop.permute.xlu0 %629
        %v631 = vrot.slane %v628, 4
        %v632 = vrot.slane %v630, 4
        %v633 = vsel %vm281, %v631, %v632
        %v634 = vsel %vm374, %v628, %v633
        %637 = vst [vmem:[%s520 + $0x18] sm:$0x33] %v634
        %638 = vst.msk [vmem:[%s520 + $0x20] sm:$0x3] %vm256, %v630
        %v639 = vld [vmem:[%s500] sm:$0x3f]
        %v641 = vcombine.low %v639, %v639
        %v643 = vunpack.c.l.s4 1983009808
        %v644 = vunpack.c.0.s8 %v643
        %v645 = vlaneseq
        %v646 = vshrl.u32 %v645, 7
        %v647 = vsub.s32 %v644, %v646
        %v648 = vrot.slane %v641, %v647
        %v650 = vunpack.c.l.s4 1983009808
        %v651 = vunpack.c.0.s8 %v650
        %v652 = vlaneseq
        %v653 = vshrl.u32 %v652, 7
        %v654 = vsub.s32 %v651, %v653
        %v655 = vrot.slane %v639, %v654
        %656 = vrot.lane.b32.xlu0 %v648, 108
        %v657 = vpop.permute.xlu0 %656
        %658 = vrot.lane.b32.xlu0 %v655, 108
        %v659 = vpop.permute.xlu0 %658
        %v660 = vrot.slane %v657, 4
        %v661 = vrot.slane %v659, 4
        %v662 = vsel %vm281, %v660, %v661
        %v663 = vsel %vm404, %v657, %v662
        %666 = vst [vmem:[%s520 + $0x18] sm:$0xcc] %v663
        %667 = vst.msk [vmem:[%s520 + $0x20] sm:$0xc] %vm288, %v659
        %v668 = vld [vmem:[%s500] sm:$0x3f]
        %v670 = vcombine.high %v668, %v668
        %v672 = vunpack.c.l.s4 1983009808
        %v673 = vunpack.c.0.s8 %v672
        %v674 = vlaneseq
        %v675 = vshrl.u32 %v674, 7
        %v676 = vsub.s32 %v673, %v675
        %v677 = vrot.slane %v668, %v676
        %v679 = vunpack.c.l.s4 1983009808
        %v680 = vunpack.c.0.s8 %v679
        %v681 = vlaneseq
        %v682 = vshrl.u32 %v681, 7
        %v683 = vsub.s32 %v680, %v682
        %v684 = vrot.slane %v670, %v683
        %685 = vrot.lane.b32.xlu0 %v677, 92
        %v686 = vpop.permute.xlu0 %685
        %687 = vrot.lane.b32.xlu0 %v684, 92
        %v688 = vpop.permute.xlu0 %687
        %v689 = vrot.slane %v686, 4
        %v690 = vrot.slane %v688, 4
        %v691 = vsel %vm281, %v689, %v690
        %v692 = vsel %vm434, %v686, %v691
        %695 = vst [vmem:[%s520 + $0x24] sm:$0x33] %v692
        %696 = vst.msk [vmem:[%s520 + $0x2c] sm:$0x3] %vm256, %v688
        %v697 = vld [vmem:[%s500] sm:$0x3f]
        %v699 = vcombine.low %v697, %v697
        %v701 = vunpack.c.l.s4 1983009808
        %v702 = vunpack.c.0.s8 %v701
        %v703 = vlaneseq
        %v704 = vshrl.u32 %v703, 7
        %v705 = vsub.s32 %v702, %v704
        %v706 = vrot.slane %v699, %v705
        %v708 = vunpack.c.l.s4 1983009808
        %v709 = vunpack.c.0.s8 %v708
        %v710 = vlaneseq
        %v711 = vshrl.u32 %v710, 7
        %v712 = vsub.s32 %v709, %v711
        %v713 = vrot.slane %v697, %v712
        %714 = vrot.lane.b32.xlu0 %v706, 91
        %v715 = vpop.permute.xlu0 %714
        %716 = vrot.lane.b32.xlu0 %v713, 91
        %v717 = vpop.permute.xlu0 %716
        %v718 = vrot.slane %v715, 4
        %v719 = vrot.slane %v717, 4
        %v720 = vsel %vm281, %v718, %v719
        %v721 = vsel %vm464, %v715, %v720
        %724 = vst [vmem:[%s520 + $0x24] sm:$0xcc] %v721
        %725 = vst.msk [vmem:[%s520 + $0x2c] sm:$0xc] %vm288, %v717
        %v726 = vld [vmem:[%s500] sm:$0x3f]
        %v728 = vcombine.high %v726, %v726
        %v730 = vunpack.c.l.s4 1983009808
        %v731 = vunpack.c.0.s8 %v730
        %v732 = vlaneseq
        %v733 = vshrl.u32 %v732, 7
        %v734 = vsub.s32 %v731, %v733
        %v735 = vrot.slane %v726, %v734
        %v737 = vunpack.c.l.s4 1983009808
        %v738 = vunpack.c.0.s8 %v737
        %v739 = vlaneseq
        %v740 = vshrl.u32 %v739, 7
        %v741 = vsub.s32 %v738, %v740
        %v742 = vrot.slane %v728, %v741
        %743 = vrot.lane.b32.xlu0 %v735, 90
        %v744 = vpop.permute.xlu0 %743
        %745 = vrot.lane.b32.xlu0 %v742, 90
        %v746 = vpop.permute.xlu0 %745
        %v747 = vrot.slane %v744, 4
        %v748 = vrot.slane %v746, 4
        %v749 = vsel %vm281, %v747, %v748
        %v750 = vsel %vm494, %v744, %v749
        %753 = vst [vmem:[%s520 + $0x30] sm:$0x33] %v750
        %754 = vst.msk [vmem:[%s520 + $0x38] sm:$0x3] %vm256, %v746
        %s755 = scalar_lea.vmem %s229, 12 [#allocation2]
        %v756 = vld [vmem:[%s755] sm:$0x3f]
        %v758 = vcombine.high %v756, %v756
        %v760 = vunpack.c.l.s4 1983009808
        %v761 = vunpack.c.0.s8 %v760
        %v762 = vlaneseq
        %v763 = vshrl.u32 %v762, 7
        %v764 = vsub.s32 %v761, %v763
        %v765 = vrot.slane %v756, %v764
        %v767 = vunpack.c.l.s4 1983009808
        %v768 = vunpack.c.0.s8 %v767
        %v769 = vlaneseq
        %v770 = vshrl.u32 %v769, 7
        %v771 = vsub.s32 %v768, %v770
        %v772 = vrot.slane %v758, %v771
        %s775 = scalar_lea.vmem [#allocation3], 120
        %776 = vst [vmem:[%s775] sm:$0x33] %v765
        %777 = vst.msk [vmem:[%s775 + $0x8] sm:$0x3] %vm256, %v772
        %v778 = vld [vmem:[%s755] sm:$0x3f]
        %v780 = vcombine.low %v778, %v778
        %v782 = vunpack.c.l.s4 1983009808
        %v783 = vunpack.c.0.s8 %v782
        %v784 = vlaneseq
        %v785 = vshrl.u32 %v784, 7
        %v786 = vsub.s32 %v783, %v785
        %v787 = vrot.slane %v780, %v786
        %v789 = vunpack.c.l.s4 1983009808
        %v790 = vunpack.c.0.s8 %v789
        %v791 = vlaneseq
        %v792 = vshrl.u32 %v791, 7
        %v793 = vsub.s32 %v790, %v792
        %v794 = vrot.slane %v778, %v793
        %795 = vrot.lane.b32.xlu0 %v787, 127
        %v796 = vpop.permute.xlu0 %795
        %797 = vrot.lane.b32.xlu0 %v794, 127
        %v798 = vpop.permute.xlu0 %797
        %v799 = vrot.slane %v796, 4
        %v800 = vrot.slane %v798, 4
        %v801 = vsel %vm281, %v799, %v800
        %v802 = vsel %vm283, %v796, %v801
        %805 = vst [vmem:[%s775] sm:$0xcc] %v802
        %806 = vst.msk [vmem:[%s775 + $0x8] sm:$0xc] %vm288, %v798
        %v807 = vld [vmem:[%s755] sm:$0x3f]
        %v809 = vcombine.high %v807, %v807
        %v811 = vunpack.c.l.s4 1983009808
        %v812 = vunpack.c.0.s8 %v811
        %v813 = vlaneseq
        %v814 = vshrl.u32 %v813, 7
        %v815 = vsub.s32 %v812, %v814
        %v816 = vrot.slane %v807, %v815
        %v818 = vunpack.c.l.s4 1983009808
        %v819 = vunpack.c.0.s8 %v818
        %v820 = vlaneseq
        %v821 = vshrl.u32 %v820, 7
        %v822 = vsub.s32 %v819, %v821
        %v823 = vrot.slane %v809, %v822
        %824 = vrot.lane.b32.xlu0 %v816, 126
        %v825 = vpop.permute.xlu0 %824
        %826 = vrot.lane.b32.xlu0 %v823, 126
        %v827 = vpop.permute.xlu0 %826
        %v828 = vrot.slane %v825, 4
        %v829 = vrot.slane %v827, 4
        %v830 = vsel %vm281, %v828, %v829
        %v831 = vsel %vm314, %v825, %v830
        %834 = vst [vmem:[%s775 + $0xc] sm:$0x33] %v831
        %835 = vst.msk [vmem:[%s775 + $0x14] sm:$0x3] %vm256, %v827
        %v836 = vld [vmem:[%s755] sm:$0x3f]
        %v838 = vcombine.low %v836, %v836
        %v840 = vunpack.c.l.s4 1983009808
        %v841 = vunpack.c.0.s8 %v840
        %v842 = vlaneseq
        %v843 = vshrl.u32 %v842, 7
        %v844 = vsub.s32 %v841, %v843
        %v845 = vrot.slane %v838, %v844
        %v847 = vunpack.c.l.s4 1983009808
        %v848 = vunpack.c.0.s8 %v847
        %v849 = vlaneseq
        %v850 = vshrl.u32 %v849, 7
        %v851 = vsub.s32 %v848, %v850
        %v852 = vrot.slane %v836, %v851
        %853 = vrot.lane.b32.xlu0 %v845, 110
        %v854 = vpop.permute.xlu0 %853
        %855 = vrot.lane.b32.xlu0 %v852, 110
        %v856 = vpop.permute.xlu0 %855
        %v857 = vrot.slane %v854, 4
        %v858 = vrot.slane %v856, 4
        %v859 = vsel %vm281, %v857, %v858
        %v860 = vsel %vm344, %v854, %v859
        %863 = vst [vmem:[%s775 + $0xc] sm:$0xcc] %v860
        %864 = vst.msk [vmem:[%s775 + $0x14] sm:$0xc] %vm288, %v856
        %v865 = vld [vmem:[%s755] sm:$0x3f]
        %v867 = vcombine.high %v865, %v865
        %v869 = vunpack.c.l.s4 1983009808
        %v870 = vunpack.c.0.s8 %v869
        %v871 = vlaneseq
        %v872 = vshrl.u32 %v871, 7
        %v873 = vsub.s32 %v870, %v872
        %v874 = vrot.slane %v865, %v873
        %v876 = vunpack.c.l.s4 1983009808
        %v877 = vunpack.c.0.s8 %v876
        %v878 = vlaneseq
        %v879 = vshrl.u32 %v878, 7
        %v880 = vsub.s32 %v877, %v879
        %v881 = vrot.slane %v867, %v880
        %882 = vrot.lane.b32.xlu0 %v874, 109
        %v883 = vpop.permute.xlu0 %882
        %884 = vrot.lane.b32.xlu0 %v881, 109
        %v885 = vpop.permute.xlu0 %884
        %v886 = vrot.slane %v883, 4
        %v887 = vrot.slane %v885, 4
        %v888 = vsel %vm281, %v886, %v887
        %v889 = vsel %vm374, %v883, %v888
        %892 = vst [vmem:[%s775 + $0x18] sm:$0x33] %v889
        %893 = vst.msk [vmem:[%s775 + $0x20] sm:$0x3] %vm256, %v885
        %v894 = vld [vmem:[%s755] sm:$0x3f]
        %v896 = vcombine.low %v894, %v894
        %v898 = vunpack.c.l.s4 1983009808
        %v899 = vunpack.c.0.s8 %v898
        %v900 = vlaneseq
        %v901 = vshrl.u32 %v900, 7
        %v902 = vsub.s32 %v899, %v901
        %v903 = vrot.slane %v896, %v902
        %v905 = vunpack.c.l.s4 1983009808
        %v906 = vunpack.c.0.s8 %v905
        %v907 = vlaneseq
        %v908 = vshrl.u32 %v907, 7
        %v909 = vsub.s32 %v906, %v908
        %v910 = vrot.slane %v894, %v909
        %911 = vrot.lane.b32.xlu0 %v903, 108
        %v912 = vpop.permute.xlu0 %911
        %913 = vrot.lane.b32.xlu0 %v910, 108
        %v914 = vpop.permute.xlu0 %913
        %v915 = vrot.slane %v912, 4
        %v916 = vrot.slane %v914, 4
        %v917 = vsel %vm281, %v915, %v916
        %v918 = vsel %vm404, %v912, %v917
        %921 = vst [vmem:[%s775 + $0x18] sm:$0xcc] %v918
        %922 = vst.msk [vmem:[%s775 + $0x20] sm:$0xc] %vm288, %v914
        %v923 = vld [vmem:[%s755] sm:$0x3f]
        %v925 = vcombine.high %v923, %v923
        %v927 = vunpack.c.l.s4 1983009808
        %v928 = vunpack.c.0.s8 %v927
        %v929 = vlaneseq
        %v930 = vshrl.u32 %v929, 7
        %v931 = vsub.s32 %v928, %v930
        %v932 = vrot.slane %v923, %v931
        %v934 = vunpack.c.l.s4 1983009808
        %v935 = vunpack.c.0.s8 %v934
        %v936 = vlaneseq
        %v937 = vshrl.u32 %v936, 7
        %v938 = vsub.s32 %v935, %v937
        %v939 = vrot.slane %v925, %v938
        %940 = vrot.lane.b32.xlu0 %v932, 92
        %v941 = vpop.permute.xlu0 %940
        %942 = vrot.lane.b32.xlu0 %v939, 92
        %v943 = vpop.permute.xlu0 %942
        %v944 = vrot.slane %v941, 4
        %v945 = vrot.slane %v943, 4
        %v946 = vsel %vm281, %v944, %v945
        %v947 = vsel %vm434, %v941, %v946
        %950 = vst [vmem:[%s775 + $0x24] sm:$0x33] %v947
        %951 = vst.msk [vmem:[%s775 + $0x2c] sm:$0x3] %vm256, %v943
        %v952 = vld [vmem:[%s755] sm:$0x3f]
        %v954 = vcombine.low %v952, %v952
        %v956 = vunpack.c.l.s4 1983009808
        %v957 = vunpack.c.0.s8 %v956
        %v958 = vlaneseq
        %v959 = vshrl.u32 %v958, 7
        %v960 = vsub.s32 %v957, %v959
        %v961 = vrot.slane %v954, %v960
        %v963 = vunpack.c.l.s4 1983009808
        %v964 = vunpack.c.0.s8 %v963
        %v965 = vlaneseq
        %v966 = vshrl.u32 %v965, 7
        %v967 = vsub.s32 %v964, %v966
        %v968 = vrot.slane %v952, %v967
        %969 = vrot.lane.b32.xlu0 %v961, 91
        %v970 = vpop.permute.xlu0 %969
        %971 = vrot.lane.b32.xlu0 %v968, 91
        %v972 = vpop.permute.xlu0 %971
        %v973 = vrot.slane %v970, 4
        %v974 = vrot.slane %v972, 4
        %v975 = vsel %vm281, %v973, %v974
        %v976 = vsel %vm464, %v970, %v975
        %979 = vst [vmem:[%s775 + $0x24] sm:$0xcc] %v976
        %980 = vst.msk [vmem:[%s775 + $0x2c] sm:$0xc] %vm288, %v972
        %v981 = vld [vmem:[%s755] sm:$0x3f]
        %v983 = vcombine.high %v981, %v981
        %v985 = vunpack.c.l.s4 1983009808
        %v986 = vunpack.c.0.s8 %v985
        %v987 = vlaneseq
        %v988 = vshrl.u32 %v987, 7
        %v989 = vsub.s32 %v986, %v988
        %v990 = vrot.slane %v981, %v989
        %v992 = vunpack.c.l.s4 1983009808
        %v993 = vunpack.c.0.s8 %v992
        %v994 = vlaneseq
        %v995 = vshrl.u32 %v994, 7
        %v996 = vsub.s32 %v993, %v995
        %v997 = vrot.slane %v983, %v996
        %998 = vrot.lane.b32.xlu0 %v990, 90
        %v999 = vpop.permute.xlu0 %998
        %1000 = vrot.lane.b32.xlu0 %v997, 90
        %v1001 = vpop.permute.xlu0 %1000
        %v1002 = vrot.slane %v999, 4
        %v1003 = vrot.slane %v1001, 4
        %v1004 = vsel %vm281, %v1002, %v1003
        %v1005 = vsel %vm494, %v999, %v1004
        %1008 = vst [vmem:[%s775 + $0x30] sm:$0x33] %v1005
        %1009 = vst.msk [vmem:[%s775 + $0x38] sm:$0x3] %vm256, %v1001
        %s1010 = scalar_lea.vmem %s229, 18 [#allocation2]
        %v1011 = vld [vmem:[%s1010] sm:$0x3f]
        %v1013 = vcombine.high %v1011, %v1011
        %v1015 = vunpack.c.l.s4 1983009808
        %v1016 = vunpack.c.0.s8 %v1015
        %v1017 = vlaneseq
        %v1018 = vshrl.u32 %v1017, 7
        %v1019 = vsub.s32 %v1016, %v1018
        %v1020 = vrot.slane %v1011, %v1019
        %v1022 = vunpack.c.l.s4 1983009808
        %v1023 = vunpack.c.0.s8 %v1022
        %v1024 = vlaneseq
        %v1025 = vshrl.u32 %v1024, 7
        %v1026 = vsub.s32 %v1023, %v1025
        %v1027 = vrot.slane %v1013, %v1026
        %s1030 = scalar_lea.vmem [#allocation3], 180
        %1031 = vst [vmem:[%s1030] sm:$0x33] %v1020
        %1032 = vst.msk [vmem:[%s1030 + $0x8] sm:$0x3] %vm256, %v1027
        %v1033 = vld [vmem:[%s1010] sm:$0x3f]
        %v1035 = vcombine.low %v1033, %v1033
        %v1037 = vunpack.c.l.s4 1983009808
        %v1038 = vunpack.c.0.s8 %v1037
        %v1039 = vlaneseq
        %v1040 = vshrl.u32 %v1039, 7
        %v1041 = vsub.s32 %v1038, %v1040
        %v1042 = vrot.slane %v1035, %v1041
        %v1044 = vunpack.c.l.s4 1983009808
        %v1045 = vunpack.c.0.s8 %v1044
        %v1046 = vlaneseq
        %v1047 = vshrl.u32 %v1046, 7
        %v1048 = vsub.s32 %v1045, %v1047
        %v1049 = vrot.slane %v1033, %v1048
        %1050 = vrot.lane.b32.xlu0 %v1042, 127
        %v1051 = vpop.permute.xlu0 %1050
        %1052 = vrot.lane.b32.xlu0 %v1049, 127
        %v1053 = vpop.permute.xlu0 %1052
        %v1054 = vrot.slane %v1051, 4
        %v1055 = vrot.slane %v1053, 4
        %v1056 = vsel %vm281, %v1054, %v1055
        %v1057 = vsel %vm283, %v1051, %v1056
        %1060 = vst [vmem:[%s1030] sm:$0xcc] %v1057
        %1061 = vst.msk [vmem:[%s1030 + $0x8] sm:$0xc] %vm288, %v1053
        %v1062 = vld [vmem:[%s1010] sm:$0x3f]
        %v1064 = vcombine.high %v1062, %v1062
        %v1066 = vunpack.c.l.s4 1983009808
        %v1067 = vunpack.c.0.s8 %v1066
        %v1068 = vlaneseq
        %v1069 = vshrl.u32 %v1068, 7
        %v1070 = vsub.s32 %v1067, %v1069
        %v1071 = vrot.slane %v1062, %v1070
        %v1073 = vunpack.c.l.s4 1983009808
        %v1074 = vunpack.c.0.s8 %v1073
        %v1075 = vlaneseq
        %v1076 = vshrl.u32 %v1075, 7
        %v1077 = vsub.s32 %v1074, %v1076
        %v1078 = vrot.slane %v1064, %v1077
        %1079 = vrot.lane.b32.xlu0 %v1071, 126
        %v1080 = vpop.permute.xlu0 %1079
        %1081 = vrot.lane.b32.xlu0 %v1078, 126
        %v1082 = vpop.permute.xlu0 %1081
        %v1083 = vrot.slane %v1080, 4
        %v1084 = vrot.slane %v1082, 4
        %v1085 = vsel %vm281, %v1083, %v1084
        %v1086 = vsel %vm314, %v1080, %v1085
        %1089 = vst [vmem:[%s1030 + $0xc] sm:$0x33] %v1086
        %1090 = vst.msk [vmem:[%s1030 + $0x14] sm:$0x3] %vm256, %v1082
        %v1091 = vld [vmem:[%s1010] sm:$0x3f]
        %v1093 = vcombine.low %v1091, %v1091
        %v1095 = vunpack.c.l.s4 1983009808
        %v1096 = vunpack.c.0.s8 %v1095
        %v1097 = vlaneseq
        %v1098 = vshrl.u32 %v1097, 7
        %v1099 = vsub.s32 %v1096, %v1098
        %v1100 = vrot.slane %v1093, %v1099
        %v1102 = vunpack.c.l.s4 1983009808
        %v1103 = vunpack.c.0.s8 %v1102
        %v1104 = vlaneseq
        %v1105 = vshrl.u32 %v1104, 7
        %v1106 = vsub.s32 %v1103, %v1105
        %v1107 = vrot.slane %v1091, %v1106
        %1108 = vrot.lane.b32.xlu0 %v1100, 110
        %v1109 = vpop.permute.xlu0 %1108
        %1110 = vrot.lane.b32.xlu0 %v1107, 110
        %v1111 = vpop.permute.xlu0 %1110
        %v1112 = vrot.slane %v1109, 4
        %v1113 = vrot.slane %v1111, 4
        %v1114 = vsel %vm281, %v1112, %v1113
        %v1115 = vsel %vm344, %v1109, %v1114
        %1118 = vst [vmem:[%s1030 + $0xc] sm:$0xcc] %v1115
        %1119 = vst.msk [vmem:[%s1030 + $0x14] sm:$0xc] %vm288, %v1111
        %v1120 = vld [vmem:[%s1010] sm:$0x3f]
        %v1122 = vcombine.high %v1120, %v1120
        %v1124 = vunpack.c.l.s4 1983009808
        %v1125 = vunpack.c.0.s8 %v1124
        %v1126 = vlaneseq
        %v1127 = vshrl.u32 %v1126, 7
        %v1128 = vsub.s32 %v1125, %v1127
        %v1129 = vrot.slane %v1120, %v1128
        %v1131 = vunpack.c.l.s4 1983009808
        %v1132 = vunpack.c.0.s8 %v1131
        %v1133 = vlaneseq
        %v1134 = vshrl.u32 %v1133, 7
        %v1135 = vsub.s32 %v1132, %v1134
        %v1136 = vrot.slane %v1122, %v1135
        %1137 = vrot.lane.b32.xlu0 %v1129, 109
        %v1138 = vpop.permute.xlu0 %1137
        %1139 = vrot.lane.b32.xlu0 %v1136, 109
        %v1140 = vpop.permute.xlu0 %1139
        %v1141 = vrot.slane %v1138, 4
        %v1142 = vrot.slane %v1140, 4
        %v1143 = vsel %vm281, %v1141, %v1142
        %v1144 = vsel %vm374, %v1138, %v1143
        %1147 = vst [vmem:[%s1030 + $0x18] sm:$0x33] %v1144
        %1148 = vst.msk [vmem:[%s1030 + $0x20] sm:$0x3] %vm256, %v1140
        %v1149 = vld [vmem:[%s1010] sm:$0x3f]
        %v1151 = vcombine.low %v1149, %v1149
        %v1153 = vunpack.c.l.s4 1983009808
        %v1154 = vunpack.c.0.s8 %v1153
        %v1155 = vlaneseq
        %v1156 = vshrl.u32 %v1155, 7
        %v1157 = vsub.s32 %v1154, %v1156
        %v1158 = vrot.slane %v1151, %v1157
        %v1160 = vunpack.c.l.s4 1983009808
        %v1161 = vunpack.c.0.s8 %v1160
        %v1162 = vlaneseq
        %v1163 = vshrl.u32 %v1162, 7
        %v1164 = vsub.s32 %v1161, %v1163
        %v1165 = vrot.slane %v1149, %v1164
        %1166 = vrot.lane.b32.xlu0 %v1158, 108
        %v1167 = vpop.permute.xlu0 %1166
        %1168 = vrot.lane.b32.xlu0 %v1165, 108
        %v1169 = vpop.permute.xlu0 %1168
        %v1170 = vrot.slane %v1167, 4
        %v1171 = vrot.slane %v1169, 4
        %v1172 = vsel %vm281, %v1170, %v1171
        %v1173 = vsel %vm404, %v1167, %v1172
        %1176 = vst [vmem:[%s1030 + $0x18] sm:$0xcc] %v1173
        %1177 = vst.msk [vmem:[%s1030 + $0x20] sm:$0xc] %vm288, %v1169
        %v1178 = vld [vmem:[%s1010] sm:$0x3f]
        %v1180 = vcombine.high %v1178, %v1178
        %v1182 = vunpack.c.l.s4 1983009808
        %v1183 = vunpack.c.0.s8 %v1182
        %v1184 = vlaneseq
        %v1185 = vshrl.u32 %v1184, 7
        %v1186 = vsub.s32 %v1183, %v1185
        %v1187 = vrot.slane %v1178, %v1186
        %v1189 = vunpack.c.l.s4 1983009808
        %v1190 = vunpack.c.0.s8 %v1189
        %v1191 = vlaneseq
        %v1192 = vshrl.u32 %v1191, 7
        %v1193 = vsub.s32 %v1190, %v1192
        %v1194 = vrot.slane %v1180, %v1193
        %1195 = vrot.lane.b32.xlu0 %v1187, 92
        %v1196 = vpop.permute.xlu0 %1195
        %1197 = vrot.lane.b32.xlu0 %v1194, 92
        %v1198 = vpop.permute.xlu0 %1197
        %v1199 = vrot.slane %v1196, 4
        %v1200 = vrot.slane %v1198, 4
        %v1201 = vsel %vm281, %v1199, %v1200
        %v1202 = vsel %vm434, %v1196, %v1201
        %1205 = vst [vmem:[%s1030 + $0x24] sm:$0x33] %v1202
        %1206 = vst.msk [vmem:[%s1030 + $0x2c] sm:$0x3] %vm256, %v1198
        %v1207 = vld [vmem:[%s1010] sm:$0x3f]
        %v1209 = vcombine.low %v1207, %v1207
        %v1211 = vunpack.c.l.s4 1983009808
        %v1212 = vunpack.c.0.s8 %v1211
        %v1213 = vlaneseq
        %v1214 = vshrl.u32 %v1213, 7
        %v1215 = vsub.s32 %v1212, %v1214
        %v1216 = vrot.slane %v1209, %v1215
        %v1218 = vunpack.c.l.s4 1983009808
        %v1219 = vunpack.c.0.s8 %v1218
        %v1220 = vlaneseq
        %v1221 = vshrl.u32 %v1220, 7
        %v1222 = vsub.s32 %v1219, %v1221
        %v1223 = vrot.slane %v1207, %v1222
        %1224 = vrot.lane.b32.xlu0 %v1216, 91
        %v1225 = vpop.permute.xlu0 %1224
        %1226 = vrot.lane.b32.xlu0 %v1223, 91
        %v1227 = vpop.permute.xlu0 %1226
        %v1228 = vrot.slane %v1225, 4
        %v1229 = vrot.slane %v1227, 4
        %v1230 = vsel %vm281, %v1228, %v1229
        %v1231 = vsel %vm464, %v1225, %v1230
        %1234 = vst [vmem:[%s1030 + $0x24] sm:$0xcc] %v1231
        %1235 = vst.msk [vmem:[%s1030 + $0x2c] sm:$0xc] %vm288, %v1227
        %v1236 = vld [vmem:[%s1010] sm:$0x3f]
        %v1238 = vcombine.high %v1236, %v1236
        %v1240 = vunpack.c.l.s4 1983009808
        %v1241 = vunpack.c.0.s8 %v1240
        %v1242 = vlaneseq
        %v1243 = vshrl.u32 %v1242, 7
        %v1244 = vsub.s32 %v1241, %v1243
        %v1245 = vrot.slane %v1236, %v1244
        %v1247 = vunpack.c.l.s4 1983009808
        %v1248 = vunpack.c.0.s8 %v1247
        %v1249 = vlaneseq
        %v1250 = vshrl.u32 %v1249, 7
        %v1251 = vsub.s32 %v1248, %v1250
        %v1252 = vrot.slane %v1238, %v1251
        %1253 = vrot.lane.b32.xlu0 %v1245, 90
        %v1254 = vpop.permute.xlu0 %1253
        %1255 = vrot.lane.b32.xlu0 %v1252, 90
        %v1256 = vpop.permute.xlu0 %1255
        %v1257 = vrot.slane %v1254, 4
        %v1258 = vrot.slane %v1256, 4
        %v1259 = vsel %vm281, %v1257, %v1258
        %v1260 = vsel %vm494, %v1254, %v1259
        %1263 = vst [vmem:[%s1030 + $0x30] sm:$0x33] %v1260
        %1264 = vst.msk [vmem:[%s1030 + $0x38] sm:$0x3] %vm256, %v1256
        %s1265 = scalar_lea.vmem %s229, 24 [#allocation2]
        %v1266 = vld [vmem:[%s1265] sm:$0x3f]
        %v1268 = vcombine.high %v1266, %v1266
        %v1270 = vunpack.c.l.s4 1983009808
        %v1271 = vunpack.c.0.s8 %v1270
        %v1272 = vlaneseq
        %v1273 = vshrl.u32 %v1272, 7
        %v1274 = vsub.s32 %v1271, %v1273
        %v1275 = vrot.slane %v1266, %v1274
        %v1277 = vunpack.c.l.s4 1983009808
        %v1278 = vunpack.c.0.s8 %v1277
        %v1279 = vlaneseq
        %v1280 = vshrl.u32 %v1279, 7
        %v1281 = vsub.s32 %v1278, %v1280
        %v1282 = vrot.slane %v1268, %v1281
        %s1285 = scalar_lea.vmem [#allocation3], 240
        %1286 = vst [vmem:[%s1285] sm:$0x33] %v1275
        %1287 = vst.msk [vmem:[%s1285 + $0x8] sm:$0x3] %vm256, %v1282
        %v1288 = vld [vmem:[%s1265] sm:$0x3f]
        %v1290 = vcombine.low %v1288, %v1288
        %v1292 = vunpack.c.l.s4 1983009808
        %v1293 = vunpack.c.0.s8 %v1292
        %v1294 = vlaneseq
        %v1295 = vshrl.u32 %v1294, 7
        %v1296 = vsub.s32 %v1293, %v1295
        %v1297 = vrot.slane %v1290, %v1296
        %v1299 = vunpack.c.l.s4 1983009808
        %v1300 = vunpack.c.0.s8 %v1299
        %v1301 = vlaneseq
        %v1302 = vshrl.u32 %v1301, 7
        %v1303 = vsub.s32 %v1300, %v1302
        %v1304 = vrot.slane %v1288, %v1303
        %1305 = vrot.lane.b32.xlu0 %v1297, 127
        %v1306 = vpop.permute.xlu0 %1305
        %1307 = vrot.lane.b32.xlu0 %v1304, 127
        %v1308 = vpop.permute.xlu0 %1307
        %v1309 = vrot.slane %v1306, 4
        %v1310 = vrot.slane %v1308, 4
        %v1311 = vsel %vm281, %v1309, %v1310
        %v1312 = vsel %vm283, %v1306, %v1311
        %1315 = vst [vmem:[%s1285] sm:$0xcc] %v1312
        %1316 = vst.msk [vmem:[%s1285 + $0x8] sm:$0xc] %vm288, %v1308
        %v1317 = vld [vmem:[%s1265] sm:$0x3f]
        %v1319 = vcombine.high %v1317, %v1317
        %v1321 = vunpack.c.l.s4 1983009808
        %v1322 = vunpack.c.0.s8 %v1321
        %v1323 = vlaneseq
        %v1324 = vshrl.u32 %v1323, 7
        %v1325 = vsub.s32 %v1322, %v1324
        %v1326 = vrot.slane %v1317, %v1325
        %v1328 = vunpack.c.l.s4 1983009808
        %v1329 = vunpack.c.0.s8 %v1328
        %v1330 = vlaneseq
        %v1331 = vshrl.u32 %v1330, 7
        %v1332 = vsub.s32 %v1329, %v1331
        %v1333 = vrot.slane %v1319, %v1332
        %1334 = vrot.lane.b32.xlu0 %v1326, 126
        %v1335 = vpop.permute.xlu0 %1334
        %1336 = vrot.lane.b32.xlu0 %v1333, 126
        %v1337 = vpop.permute.xlu0 %1336
        %v1338 = vrot.slane %v1335, 4
        %v1339 = vrot.slane %v1337, 4
        %v1340 = vsel %vm281, %v1338, %v1339
        %v1341 = vsel %vm314, %v1335, %v1340
        %1344 = vst [vmem:[%s1285 + $0xc] sm:$0x33] %v1341
        %1345 = vst.msk [vmem:[%s1285 + $0x14] sm:$0x3] %vm256, %v1337
        %v1346 = vld [vmem:[%s1265] sm:$0x3f]
        %v1348 = vcombine.low %v1346, %v1346
        %v1350 = vunpack.c.l.s4 1983009808
        %v1351 = vunpack.c.0.s8 %v1350
        %v1352 = vlaneseq
        %v1353 = vshrl.u32 %v1352, 7
        %v1354 = vsub.s32 %v1351, %v1353
        %v1355 = vrot.slane %v1348, %v1354
        %v1357 = vunpack.c.l.s4 1983009808
        %v1358 = vunpack.c.0.s8 %v1357
        %v1359 = vlaneseq
        %v1360 = vshrl.u32 %v1359, 7
        %v1361 = vsub.s32 %v1358, %v1360
        %v1362 = vrot.slane %v1346, %v1361
        %1363 = vrot.lane.b32.xlu0 %v1355, 110
        %v1364 = vpop.permute.xlu0 %1363
        %1365 = vrot.lane.b32.xlu0 %v1362, 110
        %v1366 = vpop.permute.xlu0 %1365
        %v1367 = vrot.slane %v1364, 4
        %v1368 = vrot.slane %v1366, 4
        %v1369 = vsel %vm281, %v1367, %v1368
        %v1370 = vsel %vm344, %v1364, %v1369
        %1373 = vst [vmem:[%s1285 + $0xc] sm:$0xcc] %v1370
        %1374 = vst.msk [vmem:[%s1285 + $0x14] sm:$0xc] %vm288, %v1366
        %v1375 = vld [vmem:[%s1265] sm:$0x3f]
        %v1377 = vcombine.high %v1375, %v1375
        %v1379 = vunpack.c.l.s4 1983009808
        %v1380 = vunpack.c.0.s8 %v1379
        %v1381 = vlaneseq
        %v1382 = vshrl.u32 %v1381, 7
        %v1383 = vsub.s32 %v1380, %v1382
        %v1384 = vrot.slane %v1375, %v1383
        %v1386 = vunpack.c.l.s4 1983009808
        %v1387 = vunpack.c.0.s8 %v1386
        %v1388 = vlaneseq
        %v1389 = vshrl.u32 %v1388, 7
        %v1390 = vsub.s32 %v1387, %v1389
        %v1391 = vrot.slane %v1377, %v1390
        %1392 = vrot.lane.b32.xlu0 %v1384, 109
        %v1393 = vpop.permute.xlu0 %1392
        %1394 = vrot.lane.b32.xlu0 %v1391, 109
        %v1395 = vpop.permute.xlu0 %1394
        %v1396 = vrot.slane %v1393, 4
        %v1397 = vrot.slane %v1395, 4
        %v1398 = vsel %vm281, %v1396, %v1397
        %v1399 = vsel %vm374, %v1393, %v1398
        %1402 = vst [vmem:[%s1285 + $0x18] sm:$0x33] %v1399
        %1403 = vst.msk [vmem:[%s1285 + $0x20] sm:$0x3] %vm256, %v1395
        %v1404 = vld [vmem:[%s1265] sm:$0x3f]
        %v1406 = vcombine.low %v1404, %v1404
        %v1408 = vunpack.c.l.s4 1983009808
        %v1409 = vunpack.c.0.s8 %v1408
        %v1410 = vlaneseq
        %v1411 = vshrl.u32 %v1410, 7
        %v1412 = vsub.s32 %v1409, %v1411
        %v1413 = vrot.slane %v1406, %v1412
        %v1415 = vunpack.c.l.s4 1983009808
        %v1416 = vunpack.c.0.s8 %v1415
        %v1417 = vlaneseq
        %v1418 = vshrl.u32 %v1417, 7
        %v1419 = vsub.s32 %v1416, %v1418
        %v1420 = vrot.slane %v1404, %v1419
        %1421 = vrot.lane.b32.xlu0 %v1413, 108
        %v1422 = vpop.permute.xlu0 %1421
        %1423 = vrot.lane.b32.xlu0 %v1420, 108
        %v1424 = vpop.permute.xlu0 %1423
        %v1425 = vrot.slane %v1422, 4
        %v1426 = vrot.slane %v1424, 4
        %v1427 = vsel %vm281, %v1425, %v1426
        %v1428 = vsel %vm404, %v1422, %v1427
        %1431 = vst [vmem:[%s1285 + $0x18] sm:$0xcc] %v1428
        %1432 = vst.msk [vmem:[%s1285 + $0x20] sm:$0xc] %vm288, %v1424
        %v1433 = vld [vmem:[%s1265] sm:$0x3f]
        %v1435 = vcombine.high %v1433, %v1433
        %v1437 = vunpack.c.l.s4 1983009808
        %v1438 = vunpack.c.0.s8 %v1437
        %v1439 = vlaneseq
        %v1440 = vshrl.u32 %v1439, 7
        %v1441 = vsub.s32 %v1438, %v1440
        %v1442 = vrot.slane %v1433, %v1441
        %v1444 = vunpack.c.l.s4 1983009808
        %v1445 = vunpack.c.0.s8 %v1444
        %v1446 = vlaneseq
        %v1447 = vshrl.u32 %v1446, 7
        %v1448 = vsub.s32 %v1445, %v1447
        %v1449 = vrot.slane %v1435, %v1448
        %1450 = vrot.lane.b32.xlu0 %v1442, 92
        %v1451 = vpop.permute.xlu0 %1450
        %1452 = vrot.lane.b32.xlu0 %v1449, 92
        %v1453 = vpop.permute.xlu0 %1452
        %v1454 = vrot.slane %v1451, 4
        %v1455 = vrot.slane %v1453, 4
        %v1456 = vsel %vm281, %v1454, %v1455
        %v1457 = vsel %vm434, %v1451, %v1456
        %1460 = vst [vmem:[%s1285 + $0x24] sm:$0x33] %v1457
        %1461 = vst.msk [vmem:[%s1285 + $0x2c] sm:$0x3] %vm256, %v1453
        %v1462 = vld [vmem:[%s1265] sm:$0x3f]
        %v1464 = vcombine.low %v1462, %v1462
        %v1466 = vunpack.c.l.s4 1983009808
        %v1467 = vunpack.c.0.s8 %v1466
        %v1468 = vlaneseq
        %v1469 = vshrl.u32 %v1468, 7
        %v1470 = vsub.s32 %v1467, %v1469
        %v1471 = vrot.slane %v1464, %v1470
        %v1473 = vunpack.c.l.s4 1983009808
        %v1474 = vunpack.c.0.s8 %v1473
        %v1475 = vlaneseq
        %v1476 = vshrl.u32 %v1475, 7
        %v1477 = vsub.s32 %v1474, %v1476
        %v1478 = vrot.slane %v1462, %v1477
        %1479 = vrot.lane.b32.xlu0 %v1471, 91
        %v1480 = vpop.permute.xlu0 %1479
        %1481 = vrot.lane.b32.xlu0 %v1478, 91
        %v1482 = vpop.permute.xlu0 %1481
        %v1483 = vrot.slane %v1480, 4
        %v1484 = vrot.slane %v1482, 4
        %v1485 = vsel %vm281, %v1483, %v1484
        %v1486 = vsel %vm464, %v1480, %v1485
        %1489 = vst [vmem:[%s1285 + $0x24] sm:$0xcc] %v1486
        %1490 = vst.msk [vmem:[%s1285 + $0x2c] sm:$0xc] %vm288, %v1482
        %v1491 = vld [vmem:[%s1265] sm:$0x3f]
        %v1493 = vcombine.high %v1491, %v1491
        %v1495 = vunpack.c.l.s4 1983009808
        %v1496 = vunpack.c.0.s8 %v1495
        %v1497 = vlaneseq
        %v1498 = vshrl.u32 %v1497, 7
        %v1499 = vsub.s32 %v1496, %v1498
        %v1500 = vrot.slane %v1491, %v1499
        %v1502 = vunpack.c.l.s4 1983009808
        %v1503 = vunpack.c.0.s8 %v1502
        %v1504 = vlaneseq
        %v1505 = vshrl.u32 %v1504, 7
        %v1506 = vsub.s32 %v1503, %v1505
        %v1507 = vrot.slane %v1493, %v1506
        %1508 = vrot.lane.b32.xlu0 %v1500, 90
        %v1509 = vpop.permute.xlu0 %1508
        %1510 = vrot.lane.b32.xlu0 %v1507, 90
        %v1511 = vpop.permute.xlu0 %1510
        %v1512 = vrot.slane %v1509, 4
        %v1513 = vrot.slane %v1511, 4
        %v1514 = vsel %vm281, %v1512, %v1513
        %v1515 = vsel %vm494, %v1509, %v1514
        %1518 = vst [vmem:[%s1285 + $0x30] sm:$0x33] %v1515
        %1519 = vst.msk [vmem:[%s1285 + $0x38] sm:$0x3] %vm256, %v1511
        %s1520 = scalar_lea.vmem %s229, 30 [#allocation2]
        %v1521 = vld [vmem:[%s1520] sm:$0x3f]
        %v1523 = vcombine.high %v1521, %v1521
        %v1525 = vunpack.c.l.s4 1983009808
        %v1526 = vunpack.c.0.s8 %v1525
        %v1527 = vlaneseq
        %v1528 = vshrl.u32 %v1527, 7
        %v1529 = vsub.s32 %v1526, %v1528
        %v1530 = vrot.slane %v1521, %v1529
        %v1532 = vunpack.c.l.s4 1983009808
        %v1533 = vunpack.c.0.s8 %v1532
        %v1534 = vlaneseq
        %v1535 = vshrl.u32 %v1534, 7
        %v1536 = vsub.s32 %v1533, %v1535
        %v1537 = vrot.slane %v1523, %v1536
        %s1540 = scalar_lea.vmem [#allocation3], 300
        %1541 = vst [vmem:[%s1540] sm:$0x33] %v1530
        %1542 = vst.msk [vmem:[%s1540 + $0x8] sm:$0x3] %vm256, %v1537
        %v1543 = vld [vmem:[%s1520] sm:$0x3f]
        %v1545 = vcombine.low %v1543, %v1543
        %v1547 = vunpack.c.l.s4 1983009808
        %v1548 = vunpack.c.0.s8 %v1547
        %v1549 = vlaneseq
        %v1550 = vshrl.u32 %v1549, 7
        %v1551 = vsub.s32 %v1548, %v1550
        %v1552 = vrot.slane %v1545, %v1551
        %v1554 = vunpack.c.l.s4 1983009808
        %v1555 = vunpack.c.0.s8 %v1554
        %v1556 = vlaneseq
        %v1557 = vshrl.u32 %v1556, 7
        %v1558 = vsub.s32 %v1555, %v1557
        %v1559 = vrot.slane %v1543, %v1558
        %1560 = vrot.lane.b32.xlu0 %v1552, 127
        %v1561 = vpop.permute.xlu0 %1560
        %1562 = vrot.lane.b32.xlu0 %v1559, 127
        %v1563 = vpop.permute.xlu0 %1562
        %v1564 = vrot.slane %v1561, 4
        %v1565 = vrot.slane %v1563, 4
        %v1566 = vsel %vm281, %v1564, %v1565
        %v1567 = vsel %vm283, %v1561, %v1566
        %1570 = vst [vmem:[%s1540] sm:$0xcc] %v1567
        %1571 = vst.msk [vmem:[%s1540 + $0x8] sm:$0xc] %vm288, %v1563
        %v1572 = vld [vmem:[%s1520] sm:$0x3f]
        %v1574 = vcombine.high %v1572, %v1572
        %v1576 = vunpack.c.l.s4 1983009808
        %v1577 = vunpack.c.0.s8 %v1576
        %v1578 = vlaneseq
        %v1579 = vshrl.u32 %v1578, 7
        %v1580 = vsub.s32 %v1577, %v1579
        %v1581 = vrot.slane %v1572, %v1580
        %v1583 = vunpack.c.l.s4 1983009808
        %v1584 = vunpack.c.0.s8 %v1583
        %v1585 = vlaneseq
        %v1586 = vshrl.u32 %v1585, 7
        %v1587 = vsub.s32 %v1584, %v1586
        %v1588 = vrot.slane %v1574, %v1587
        %1589 = vrot.lane.b32.xlu0 %v1581, 126
        %v1590 = vpop.permute.xlu0 %1589
        %1591 = vrot.lane.b32.xlu0 %v1588, 126
        %v1592 = vpop.permute.xlu0 %1591
        %v1593 = vrot.slane %v1590, 4
        %v1594 = vrot.slane %v1592, 4
        %v1595 = vsel %vm281, %v1593, %v1594
        %v1596 = vsel %vm314, %v1590, %v1595
        %1599 = vst [vmem:[%s1540 + $0xc] sm:$0x33] %v1596
        %1600 = vst.msk [vmem:[%s1540 + $0x14] sm:$0x3] %vm256, %v1592
        %v1601 = vld [vmem:[%s1520] sm:$0x3f]
        %v1603 = vcombine.low %v1601, %v1601
        %v1605 = vunpack.c.l.s4 1983009808
        %v1606 = vunpack.c.0.s8 %v1605
        %v1607 = vlaneseq
        %v1608 = vshrl.u32 %v1607, 7
        %v1609 = vsub.s32 %v1606, %v1608
        %v1610 = vrot.slane %v1603, %v1609
        %v1612 = vunpack.c.l.s4 1983009808
        %v1613 = vunpack.c.0.s8 %v1612
        %v1614 = vlaneseq
        %v1615 = vshrl.u32 %v1614, 7
        %v1616 = vsub.s32 %v1613, %v1615
        %v1617 = vrot.slane %v1601, %v1616
        %1618 = vrot.lane.b32.xlu0 %v1610, 110
        %v1619 = vpop.permute.xlu0 %1618
        %1620 = vrot.lane.b32.xlu0 %v1617, 110
        %v1621 = vpop.permute.xlu0 %1620
        %v1622 = vrot.slane %v1619, 4
        %v1623 = vrot.slane %v1621, 4
        %v1624 = vsel %vm281, %v1622, %v1623
        %v1625 = vsel %vm344, %v1619, %v1624
        %1628 = vst [vmem:[%s1540 + $0xc] sm:$0xcc] %v1625
        %1629 = vst.msk [vmem:[%s1540 + $0x14] sm:$0xc] %vm288, %v1621
        %v1630 = vld [vmem:[%s1520] sm:$0x3f]
        %v1632 = vcombine.high %v1630, %v1630
        %v1634 = vunpack.c.l.s4 1983009808
        %v1635 = vunpack.c.0.s8 %v1634
        %v1636 = vlaneseq
        %v1637 = vshrl.u32 %v1636, 7
        %v1638 = vsub.s32 %v1635, %v1637
        %v1639 = vrot.slane %v1630, %v1638
        %v1641 = vunpack.c.l.s4 1983009808
        %v1642 = vunpack.c.0.s8 %v1641
        %v1643 = vlaneseq
        %v1644 = vshrl.u32 %v1643, 7
        %v1645 = vsub.s32 %v1642, %v1644
        %v1646 = vrot.slane %v1632, %v1645
        %1647 = vrot.lane.b32.xlu0 %v1639, 109
        %v1648 = vpop.permute.xlu0 %1647
        %1649 = vrot.lane.b32.xlu0 %v1646, 109
        %v1650 = vpop.permute.xlu0 %1649
        %v1651 = vrot.slane %v1648, 4
        %v1652 = vrot.slane %v1650, 4
        %v1653 = vsel %vm281, %v1651, %v1652
        %v1654 = vsel %vm374, %v1648, %v1653
        %1657 = vst [vmem:[%s1540 + $0x18] sm:$0x33] %v1654
        %1658 = vst.msk [vmem:[%s1540 + $0x20] sm:$0x3] %vm256, %v1650
        %v1659 = vld [vmem:[%s1520] sm:$0x3f]
        %v1661 = vcombine.low %v1659, %v1659
        %v1663 = vunpack.c.l.s4 1983009808
        %v1664 = vunpack.c.0.s8 %v1663
        %v1665 = vlaneseq
        %v1666 = vshrl.u32 %v1665, 7
        %v1667 = vsub.s32 %v1664, %v1666
        %v1668 = vrot.slane %v1661, %v1667
        %v1670 = vunpack.c.l.s4 1983009808
        %v1671 = vunpack.c.0.s8 %v1670
        %v1672 = vlaneseq
        %v1673 = vshrl.u32 %v1672, 7
        %v1674 = vsub.s32 %v1671, %v1673
        %v1675 = vrot.slane %v1659, %v1674
        %1676 = vrot.lane.b32.xlu0 %v1668, 108
        %v1677 = vpop.permute.xlu0 %1676
        %1678 = vrot.lane.b32.xlu0 %v1675, 108
        %v1679 = vpop.permute.xlu0 %1678
        %v1680 = vrot.slane %v1677, 4
        %v1681 = vrot.slane %v1679, 4
        %v1682 = vsel %vm281, %v1680, %v1681
        %v1683 = vsel %vm404, %v1677, %v1682
        %1686 = vst [vmem:[%s1540 + $0x18] sm:$0xcc] %v1683
        %1687 = vst.msk [vmem:[%s1540 + $0x20] sm:$0xc] %vm288, %v1679
        %v1688 = vld [vmem:[%s1520] sm:$0x3f]
        %v1690 = vcombine.high %v1688, %v1688
        %v1692 = vunpack.c.l.s4 1983009808
        %v1693 = vunpack.c.0.s8 %v1692
        %v1694 = vlaneseq
        %v1695 = vshrl.u32 %v1694, 7
        %v1696 = vsub.s32 %v1693, %v1695
        %v1697 = vrot.slane %v1688, %v1696
        %v1699 = vunpack.c.l.s4 1983009808
        %v1700 = vunpack.c.0.s8 %v1699
        %v1701 = vlaneseq
        %v1702 = vshrl.u32 %v1701, 7
        %v1703 = vsub.s32 %v1700, %v1702
        %v1704 = vrot.slane %v1690, %v1703
        %1705 = vrot.lane.b32.xlu0 %v1697, 92
        %v1706 = vpop.permute.xlu0 %1705
        %1707 = vrot.lane.b32.xlu0 %v1704, 92
        %v1708 = vpop.permute.xlu0 %1707
        %v1709 = vrot.slane %v1706, 4
        %v1710 = vrot.slane %v1708, 4
        %v1711 = vsel %vm281, %v1709, %v1710
        %v1712 = vsel %vm434, %v1706, %v1711
        %1715 = vst [vmem:[%s1540 + $0x24] sm:$0x33] %v1712
        %1716 = vst.msk [vmem:[%s1540 + $0x2c] sm:$0x3] %vm256, %v1708
        %v1717 = vld [vmem:[%s1520] sm:$0x3f]
        %v1719 = vcombine.low %v1717, %v1717
        %v1721 = vunpack.c.l.s4 1983009808
        %v1722 = vunpack.c.0.s8 %v1721
        %v1723 = vlaneseq
        %v1724 = vshrl.u32 %v1723, 7
        %v1725 = vsub.s32 %v1722, %v1724
        %v1726 = vrot.slane %v1719, %v1725
        %v1728 = vunpack.c.l.s4 1983009808
        %v1729 = vunpack.c.0.s8 %v1728
        %v1730 = vlaneseq
        %v1731 = vshrl.u32 %v1730, 7
        %v1732 = vsub.s32 %v1729, %v1731
        %v1733 = vrot.slane %v1717, %v1732
        %1734 = vrot.lane.b32.xlu0 %v1726, 91
        %v1735 = vpop.permute.xlu0 %1734
        %1736 = vrot.lane.b32.xlu0 %v1733, 91
        %v1737 = vpop.permute.xlu0 %1736
        %v1738 = vrot.slane %v1735, 4
        %v1739 = vrot.slane %v1737, 4
        %v1740 = vsel %vm281, %v1738, %v1739
        %v1741 = vsel %vm464, %v1735, %v1740
        %1744 = vst [vmem:[%s1540 + $0x24] sm:$0xcc] %v1741
        %1745 = vst.msk [vmem:[%s1540 + $0x2c] sm:$0xc] %vm288, %v1737
        %v1746 = vld [vmem:[%s1520] sm:$0x3f]
        %v1748 = vcombine.high %v1746, %v1746
        %v1750 = vunpack.c.l.s4 1983009808
        %v1751 = vunpack.c.0.s8 %v1750
        %v1752 = vlaneseq
        %v1753 = vshrl.u32 %v1752, 7
        %v1754 = vsub.s32 %v1751, %v1753
        %v1755 = vrot.slane %v1746, %v1754
        %v1757 = vunpack.c.l.s4 1983009808
        %v1758 = vunpack.c.0.s8 %v1757
        %v1759 = vlaneseq
        %v1760 = vshrl.u32 %v1759, 7
        %v1761 = vsub.s32 %v1758, %v1760
        %v1762 = vrot.slane %v1748, %v1761
        %1763 = vrot.lane.b32.xlu0 %v1755, 90
        %v1764 = vpop.permute.xlu0 %1763
        %1765 = vrot.lane.b32.xlu0 %v1762, 90
        %v1766 = vpop.permute.xlu0 %1765
        %v1767 = vrot.slane %v1764, 4
        %v1768 = vrot.slane %v1766, 4
        %v1769 = vsel %vm281, %v1767, %v1768
        %v1770 = vsel %vm494, %v1764, %v1769
        %1773 = vst [vmem:[%s1540 + $0x30] sm:$0x33] %v1770
        %1774 = vst.msk [vmem:[%s1540 + $0x38] sm:$0x3] %vm256, %v1766
        %v1775 = vld [vmem:[%s2] sm:$0xff]
        %v1776 = vld [vmem:[%s3] sm:$0xff]
        %v1777 = vld [vmem:[%s1] sm:$0xf]
        %v1778 = vld [vmem:[#allocation3] sm:$0xff]
        %v1779 = vld [vmem:[#allocation3 + $0x8] sm:$0xf]
        %v1780 = vld [vmem:[#allocation3 + $0xc] sm:$0xff]
        %v1781 = vld [vmem:[#allocation3 + $0x14] sm:$0xf]
        %v1782 = vld [vmem:[#allocation3 + $0x18] sm:$0xff]
        %v1783 = vld [vmem:[#allocation3 + $0x20] sm:$0xf]
        %v1784 = vld [vmem:[#allocation3 + $0x24] sm:$0xff]
        %v1785 = vld [vmem:[#allocation3 + $0x2c] sm:$0xf]
        %v1786 = vld [vmem:[#allocation3 + $0x30] sm:$0x33]
        %v1787 = vld [vmem:[#allocation3 + $0x38] sm:$0x3]
        %s1788 = scalar_lea.vmem %s1, 4
        %v1789 = vld [vmem:[%s1788] sm:$0xf]
        %v1790 = vld [vmem:[%s520] sm:$0xff]
        %v1791 = vld [vmem:[%s520 + $0x8] sm:$0xf]
        %v1792 = vld [vmem:[%s520 + $0xc] sm:$0xff]
        %v1793 = vld [vmem:[%s520 + $0x14] sm:$0xf]
        %v1794 = vld [vmem:[%s520 + $0x18] sm:$0xff]
        %v1795 = vld [vmem:[%s520 + $0x20] sm:$0xf]
        %v1796 = vld [vmem:[%s520 + $0x24] sm:$0xff]
        %v1797 = vld [vmem:[%s520 + $0x2c] sm:$0xf]
        %v1798 = vld [vmem:[%s520 + $0x30] sm:$0x33]
        %v1799 = vld [vmem:[%s520 + $0x38] sm:$0x3]
        %v1810 = vunpack.c.l.b16 %v1790
        %v1811 = vunpack.c.h.b16 %v1790
        %v1812 = vunpack.c.l.b16 %v1791
        %v1813 = vunpack.c.l.b16 %v1792
        %v1814 = vunpack.c.h.b16 %v1792
        %v1815 = vunpack.c.l.b16 %v1793
        %v1816 = vunpack.c.l.b16 %v1794
        %v1817 = vunpack.c.h.b16 %v1794
        %v1818 = vunpack.c.l.b16 %v1795
        %v1819 = vunpack.c.l.b16 %v1796
        %v1820 = vunpack.c.h.b16 %v1796
        %v1821 = vunpack.c.l.b16 %v1797
        %v1822 = vunpack.c.l.b16 %v1798
        %v1823 = vunpack.c.h.b16 %v1798
        %v1824 = vunpack.c.l.b16 %v1799
        %v1825 = vpack.c.b16 %v1813, %v1810
        %v1826 = vpack.c.b16 %v1814, %v1811
        %v1827 = vpack.c.b16 %v1815, %v1812
        %v1828 = vpack.c.b16 %v1819, %v1816
        %v1829 = vpack.c.b16 %v1820, %v1817
        %v1830 = vpack.c.b16 %v1821, %v1818
        %v1831 = vpack.c.b16 %v1822, %v1822
        %v1832 = vpack.c.b16 %v1823, %v1823
        %v1833 = vpack.c.b16 %v1824, %v1824
        %vm1840 = vcmask 293888
        %v1842 = vsel %vm1840, %v1789, 0
        %vm1844 = vcmask 1041408
        %v1846 = vsel %vm1844, %v1831, 0
        %v1849 = vsel %vm1844, %v1832, 0
        %v1852 = vsel %vm1844, %v1833, 0
        %1854 = vmatprep.subr.bf16.mxu0 %v1826
        %1855 = vmatpush1.bf16.msra.mxu0 %v1825
        %1856 = vmatprep.subr.bf16.mxu0 %v1829
        %1857 = vmatpush1.bf16.msra.mxu0 %v1828
        %1858 = vmatprep.subr.bf16.mxu0 %v1849
        %1859 = vmatpush1.bf16.msra.mxu0 %v1846
        %1860 = vmatprep.subr.bf16.mxu0 0
        %1861 = vmatpush1.bf16.msra.mxu0 0
        %1862 = vmatprep.subr.bf16.mxu0 0
        %1863 = vmatpush1.bf16.msra.mxu0 0
        %1864 = vmatprep.subr.bf16.mxu0 0
        %1865 = vmatpush1.bf16.msra.mxu0 0
        %1866 = vmatprep.subr.bf16.mxu0 0
        %1867 = vmatpush1.bf16.msra.mxu0 0
        %1868 = vmatprep.subr.bf16.mxu0 0
        %1869 = vmatpush1.bf16.msra.mxu0 0
        %1870 = vmatprep.subr.bf16.mxu0 0
        %1871 = vmatpush1.bf16.msra.mxu0 0
        %1872 = vmatprep.subr.bf16.mxu0 0
        %1873 = vmatpush1.bf16.msra.mxu0 0
        %1874 = vmatprep.subr.bf16.mxu0 0
        %1875 = vmatpush1.bf16.msra.mxu0 0
        %1876 = vmatprep.subr.bf16.mxu0 0
        %1877 = vmatpush1.bf16.msra.mxu0 0
        %1878 = vmatprep.subr.bf16.mxu0 0
        %1879 = vmatpush1.bf16.msra.mxu0 0
        %1880 = vmatprep.subr.bf16.mxu0 0
        %1881 = vmatpush1.bf16.msra.mxu0 0
        %1882 = vmatprep.subr.bf16.mxu0 0
        %1883 = vmatpush1.bf16.msra.mxu0 0
        %1884 = vmatprep.subr.bf16.mxu0 0
        %1885 = vmatpush1.bf16.msra.mxu0 0
        %1886 = vmatprep.mubr.bf16.mxu0 0
        %1887 = vmatmul.mubr.bf16.gmra.mrb[0].mxu0 %v1842
        %v1888 = vpop.f32.mrb[0].mxu0
        %v1889 = vadd.f32 0.0, %v1888
        %v1890 = vpop.f32.mrb[0].mxu0
        %v1891 = vadd.f32 0.0, %v1890
        %v1892 = vpop.f32.mrb[0].mxu0
        %v1893 = vpop.f32.mrb[0].mxu0
        %1894 = vdwg.mxu0
        %1895 = vmatprep.subr.bf16.mxu0 0
        %1896 = vmatpush1.bf16.msra.mxu0 %v1827
        %1897 = vmatprep.subr.bf16.mxu0 0
        %1898 = vmatpush1.bf16.msra.mxu0 %v1830
        %1899 = vmatprep.subr.bf16.mxu0 0
        %1900 = vmatpush1.bf16.msra.mxu0 %v1852
        %1901 = vmatprep.subr.bf16.mxu0 0
        %1902 = vmatpush1.bf16.msra.mxu0 0
        %1903 = vmatprep.subr.bf16.mxu0 0
        %1904 = vmatpush1.bf16.msra.mxu0 0
        %1905 = vmatprep.subr.bf16.mxu0 0
        %1906 = vmatpush1.bf16.msra.mxu0 0
        %1907 = vmatprep.subr.bf16.mxu0 0
        %1908 = vmatpush1.bf16.msra.mxu0 0
        %1909 = vmatprep.subr.bf16.mxu0 0
        %1910 = vmatpush1.bf16.msra.mxu0 0
        %1911 = vmatprep.subr.bf16.mxu0 0
        %1912 = vmatpush1.bf16.msra.mxu0 0
        %1913 = vmatprep.subr.bf16.mxu0 0
        %1914 = vmatpush1.bf16.msra.mxu0 0
        %1915 = vmatprep.subr.bf16.mxu0 0
        %1916 = vmatpush1.bf16.msra.mxu0 0
        %1917 = vmatprep.subr.bf16.mxu0 0
        %1918 = vmatpush1.bf16.msra.mxu0 0
        %1919 = vmatprep.subr.bf16.mxu0 0
        %1920 = vmatpush1.bf16.msra.mxu0 0
        %1921 = vmatprep.subr.bf16.mxu0 0
        %1922 = vmatpush1.bf16.msra.mxu0 0
        %1923 = vmatprep.subr.bf16.mxu0 0
        %1924 = vmatpush1.bf16.msra.mxu0 0
        %1925 = vmatprep.subr.bf16.mxu0 0
        %1926 = vmatpush1.bf16.msra.mxu0 0
        %1927 = vmatprep.mubr.bf16.mxu0 0
        %1928 = vmatmul.mubr.bf16.gmra.mrb[0].mxu0 %v1842
        %v1929 = vpop.f32.mrb[0].mxu0
        %v1930 = vadd.f32 0.0, %v1929
        %v1931 = vpop.f32.mrb[0].mxu0
        %v1932 = vpop.f32.mrb[0].mxu0
        %v1933 = vpop.f32.mrb[0].mxu0
        %1934 = vdwg.mxu0
        %v1945 = vunpack.c.l.b16 %v1778
        %v1946 = vunpack.c.h.b16 %v1778
        %v1947 = vunpack.c.l.b16 %v1779
        %v1948 = vunpack.c.l.b16 %v1780
        %v1949 = vunpack.c.h.b16 %v1780
        %v1950 = vunpack.c.l.b16 %v1781
        %v1951 = vunpack.c.l.b16 %v1782
        %v1952 = vunpack.c.h.b16 %v1782
        %v1953 = vunpack.c.l.b16 %v1783
        %v1954 = vunpack.c.l.b16 %v1784
        %v1955 = vunpack.c.h.b16 %v1784
        %v1956 = vunpack.c.l.b16 %v1785
        %v1957 = vunpack.c.l.b16 %v1786
        %v1958 = vunpack.c.h.b16 %v1786
        %v1959 = vunpack.c.l.b16 %v1787
        %v1960 = vpack.c.b16 %v1948, %v1945
        %v1961 = vpack.c.b16 %v1949, %v1946
        %v1962 = vpack.c.b16 %v1950, %v1947
        %v1963 = vpack.c.b16 %v1954, %v1951
        %v1964 = vpack.c.b16 %v1955, %v1952
        %v1965 = vpack.c.b16 %v1956, %v1953
        %v1966 = vpack.c.b16 %v1957, %v1957
        %v1967 = vpack.c.b16 %v1958, %v1958
        %v1968 = vpack.c.b16 %v1959, %v1959
        %v1976 = vsel %vm1840, %v1777, 0
        %v1979 = vsel %vm1844, %v1966, 0
        %v1982 = vsel %vm1844, %v1967, 0
        %v1985 = vsel %vm1844, %v1968, 0
        %1987 = vmatprep.subr.bf16.mxu0 %v1961
        %1988 = vmatpush1.bf16.msra.mxu0 %v1960
        %1989 = vmatprep.subr.bf16.mxu0 %v1964
        %1990 = vmatpush1.bf16.msra.mxu0 %v1963
        %1991 = vmatprep.subr.bf16.mxu0 %v1982
        %1992 = vmatpush1.bf16.msra.mxu0 %v1979
        %1993 = vmatprep.subr.bf16.mxu0 0
        %1994 = vmatpush1.bf16.msra.mxu0 0
        %1995 = vmatprep.subr.bf16.mxu0 0
        %1996 = vmatpush1.bf16.msra.mxu0 0
        %1997 = vmatprep.subr.bf16.mxu0 0
        %1998 = vmatpush1.bf16.msra.mxu0 0
        %1999 = vmatprep.subr.bf16.mxu0 0
        %2000 = vmatpush1.bf16.msra.mxu0 0
        %2001 = vmatprep.subr.bf16.mxu0 0
        %2002 = vmatpush1.bf16.msra.mxu0 0
        %2003 = vmatprep.subr.bf16.mxu0 0
        %2004 = vmatpush1.bf16.msra.mxu0 0
        %2005 = vmatprep.subr.bf16.mxu0 0
        %2006 = vmatpush1.bf16.msra.mxu0 0
        %2007 = vmatprep.subr.bf16.mxu0 0
        %2008 = vmatpush1.bf16.msra.mxu0 0
        %2009 = vmatprep.subr.bf16.mxu0 0
        %2010 = vmatpush1.bf16.msra.mxu0 0
        %2011 = vmatprep.subr.bf16.mxu0 0
        %2012 = vmatpush1.bf16.msra.mxu0 0
        %2013 = vmatprep.subr.bf16.mxu0 0
        %2014 = vmatpush1.bf16.msra.mxu0 0
        %2015 = vmatprep.subr.bf16.mxu0 0
        %2016 = vmatpush1.bf16.msra.mxu0 0
        %2017 = vmatprep.subr.bf16.mxu0 0
        %2018 = vmatpush1.bf16.msra.mxu0 0
        %2019 = vmatprep.mubr.bf16.mxu0 0
        %2020 = vmatmul.mubr.bf16.gmra.mrb[0].mxu0 %v1976
        %v2021 = vpop.f32.mrb[0].mxu0
        %v2022 = vadd.f32 %v1889, %v2021
        %v2023 = vpop.f32.mrb[0].mxu0
        %v2024 = vadd.f32 %v1891, %v2023
        %v2025 = vpop.f32.mrb[0].mxu0
        %v2026 = vpop.f32.mrb[0].mxu0
        %2027 = vdwg.mxu0
        %2028 = vmatprep.subr.bf16.mxu0 0
        %2029 = vmatpush1.bf16.msra.mxu0 %v1962
        %2030 = vmatprep.subr.bf16.mxu0 0
        %2031 = vmatpush1.bf16.msra.mxu0 %v1965
        %2032 = vmatprep.subr.bf16.mxu0 0
        %2033 = vmatpush1.bf16.msra.mxu0 %v1985
        %2034 = vmatprep.subr.bf16.mxu0 0
        %2035 = vmatpush1.bf16.msra.mxu0 0
        %2036 = vmatprep.subr.bf16.mxu0 0
        %2037 = vmatpush1.bf16.msra.mxu0 0
        %2038 = vmatprep.subr.bf16.mxu0 0
        %2039 = vmatpush1.bf16.msra.mxu0 0
        %2040 = vmatprep.subr.bf16.mxu0 0
        %2041 = vmatpush1.bf16.msra.mxu0 0
        %2042 = vmatprep.subr.bf16.mxu0 0
        %2043 = vmatpush1.bf16.msra.mxu0 0
        %2044 = vmatprep.subr.bf16.mxu0 0
        %2045 = vmatpush1.bf16.msra.mxu0 0
        %2046 = vmatprep.subr.bf16.mxu0 0
        %2047 = vmatpush1.bf16.msra.mxu0 0
        %2048 = vmatprep.subr.bf16.mxu0 0
        %2049 = vmatpush1.bf16.msra.mxu0 0
        %2050 = vmatprep.subr.bf16.mxu0 0
        %2051 = vmatpush1.bf16.msra.mxu0 0
        %2052 = vmatprep.subr.bf16.mxu0 0
        %2053 = vmatpush1.bf16.msra.mxu0 0
        %2054 = vmatprep.subr.bf16.mxu0 0
        %2055 = vmatpush1.bf16.msra.mxu0 0
        %2056 = vmatprep.subr.bf16.mxu0 0
        %2057 = vmatpush1.bf16.msra.mxu0 0
        %2058 = vmatprep.subr.bf16.mxu0 0
        %2059 = vmatpush1.bf16.msra.mxu0 0
        %2060 = vmatprep.mubr.bf16.mxu0 0
        %2061 = vmatmul.mubr.bf16.gmra.mrb[0].mxu0 %v1976
        %v2062 = vpop.f32.mrb[0].mxu0
        %v2063 = vadd.f32 %v1930, %v2062
        %v2064 = vpop.f32.mrb[0].mxu0
        %v2065 = vpop.f32.mrb[0].mxu0
        %v2066 = vpop.f32.mrb[0].mxu0
        %2067 = vdwg.mxu0
        %s2068 = scalar_lea.vmem %s1, 8
        %v2069 = vld [vmem:[%s2068] sm:$0xf]
        %v2070 = vld [vmem:[%s775] sm:$0xff]
        %v2071 = vld [vmem:[%s775 + $0x8] sm:$0xf]
        %v2072 = vld [vmem:[%s775 + $0xc] sm:$0xff]
        %v2073 = vld [vmem:[%s775 + $0x14] sm:$0xf]
        %v2074 = vld [vmem:[%s775 + $0x18] sm:$0xff]
        %v2075 = vld [vmem:[%s775 + $0x20] sm:$0xf]
        %v2076 = vld [vmem:[%s775 + $0x24] sm:$0xff]
        %v2077 = vld [vmem:[%s775 + $0x2c] sm:$0xf]
        %v2078 = vld [vmem:[%s775 + $0x30] sm:$0x33]
        %v2079 = vld [vmem:[%s775 + $0x38] sm:$0x3]
        %v2090 = vunpack.c.l.b16 %v2070
        %v2091 = vunpack.c.h.b16 %v2070
        %v2092 = vunpack.c.l.b16 %v2071
        %v2093 = vunpack.c.l.b16 %v2072
        %v2094 = vunpack.c.h.b16 %v2072
        %v2095 = vunpack.c.l.b16 %v2073
        %v2096 = vunpack.c.l.b16 %v2074
        %v2097 = vunpack.c.h.b16 %v2074
        %v2098 = vunpack.c.l.b16 %v2075
        %v2099 = vunpack.c.l.b16 %v2076
        %v2100 = vunpack.c.h.b16 %v2076
        %v2101 = vunpack.c.l.b16 %v2077
        %v2102 = vunpack.c.l.b16 %v2078
        %v2103 = vunpack.c.h.b16 %v2078
        %v2104 = vunpack.c.l.b16 %v2079
        %v2105 = vpack.c.b16 %v2093, %v2090
        %v2106 = vpack.c.b16 %v2094, %v2091
        %v2107 = vpack.c.b16 %v2095, %v2092
        %v2108 = vpack.c.b16 %v2099, %v2096
        %v2109 = vpack.c.b16 %v2100, %v2097
        %v2110 = vpack.c.b16 %v2101, %v2098
        %v2111 = vpack.c.b16 %v2102, %v2102
        %v2112 = vpack.c.b16 %v2103, %v2103
        %v2113 = vpack.c.b16 %v2104, %v2104
        %v2121 = vsel %vm1840, %v2069, 0
        %v2124 = vsel %vm1844, %v2111, 0
        %v2127 = vsel %vm1844, %v2112, 0
        %v2130 = vsel %vm1844, %v2113, 0
        %2132 = vmatprep.subr.bf16.mxu0 %v2106
        %2133 = vmatpush1.bf16.msra.mxu0 %v2105
        %2134 = vmatprep.subr.bf16.mxu0 %v2109
        %2135 = vmatpush1.bf16.msra.mxu0 %v2108
        %2136 = vmatprep.subr.bf16.mxu0 %v2127
        %2137 = vmatpush1.bf16.msra.mxu0 %v2124
        %2138 = vmatprep.subr.bf16.mxu0 0
        %2139 = vmatpush1.bf16.msra.mxu0 0
        %2140 = vmatprep.subr.bf16.mxu0 0
        %2141 = vmatpush1.bf16.msra.mxu0 0
        %2142 = vmatprep.subr.bf16.mxu0 0
        %2143 = vmatpush1.bf16.msra.mxu0 0
        %2144 = vmatprep.subr.bf16.mxu0 0
        %2145 = vmatpush1.bf16.msra.mxu0 0
        %2146 = vmatprep.subr.bf16.mxu0 0
        %2147 = vmatpush1.bf16.msra.mxu0 0
        %2148 = vmatprep.subr.bf16.mxu0 0
        %2149 = vmatpush1.bf16.msra.mxu0 0
        %2150 = vmatprep.subr.bf16.mxu0 0
        %2151 = vmatpush1.bf16.msra.mxu0 0
        %2152 = vmatprep.subr.bf16.mxu0 0
        %2153 = vmatpush1.bf16.msra.mxu0 0
        %2154 = vmatprep.subr.bf16.mxu0 0
        %2155 = vmatpush1.bf16.msra.mxu0 0
        %2156 = vmatprep.subr.bf16.mxu0 0
        %2157 = vmatpush1.bf16.msra.mxu0 0
        %2158 = vmatprep.subr.bf16.mxu0 0
        %2159 = vmatpush1.bf16.msra.mxu0 0
        %2160 = vmatprep.subr.bf16.mxu0 0
        %2161 = vmatpush1.bf16.msra.mxu0 0
        %2162 = vmatprep.subr.bf16.mxu0 0
        %2163 = vmatpush1.bf16.msra.mxu0 0
        %2164 = vmatprep.mubr.bf16.mxu0 0
        %2165 = vmatmul.mubr.bf16.gmra.mrb[0].mxu0 %v2121
        %v2166 = vpop.f32.mrb[0].mxu0
        %v2167 = vadd.f32 0.0, %v2166
        %v2168 = vpop.f32.mrb[0].mxu0
        %v2169 = vadd.f32 0.0, %v2168
        %v2170 = vpop.f32.mrb[0].mxu0
        %v2171 = vpop.f32.mrb[0].mxu0
        %2172 = vdwg.mxu0
        %2173 = vmatprep.subr.bf16.mxu0 0
        %2174 = vmatpush1.bf16.msra.mxu0 %v2107
        %2175 = vmatprep.subr.bf16.mxu0 0
        %2176 = vmatpush1.bf16.msra.mxu0 %v2110
        %2177 = vmatprep.subr.bf16.mxu0 0
        %2178 = vmatpush1.bf16.msra.mxu0 %v2130
        %2179 = vmatprep.subr.bf16.mxu0 0
        %2180 = vmatpush1.bf16.msra.mxu0 0
        %2181 = vmatprep.subr.bf16.mxu0 0
        %2182 = vmatpush1.bf16.msra.mxu0 0
        %2183 = vmatprep.subr.bf16.mxu0 0
        %2184 = vmatpush1.bf16.msra.mxu0 0
        %2185 = vmatprep.subr.bf16.mxu0 0
        %2186 = vmatpush1.bf16.msra.mxu0 0
        %2187 = vmatprep.subr.bf16.mxu0 0
        %2188 = vmatpush1.bf16.msra.mxu0 0
        %2189 = vmatprep.subr.bf16.mxu0 0
        %2190 = vmatpush1.bf16.msra.mxu0 0
        %2191 = vmatprep.subr.bf16.mxu0 0
        %2192 = vmatpush1.bf16.msra.mxu0 0
        %2193 = vmatprep.subr.bf16.mxu0 0
        %2194 = vmatpush1.bf16.msra.mxu0 0
        %2195 = vmatprep.subr.bf16.mxu0 0
        %2196 = vmatpush1.bf16.msra.mxu0 0
        %2197 = vmatprep.subr.bf16.mxu0 0
        %2198 = vmatpush1.bf16.msra.mxu0 0
        %2199 = vmatprep.subr.bf16.mxu0 0
        %2200 = vmatpush1.bf16.msra.mxu0 0
        %2201 = vmatprep.subr.bf16.mxu0 0
        %2202 = vmatpush1.bf16.msra.mxu0 0
        %2203 = vmatprep.subr.bf16.mxu0 0
        %2204 = vmatpush1.bf16.msra.mxu0 0
        %2205 = vmatprep.mubr.bf16.mxu0 0
        %2206 = vmatmul.mubr.bf16.gmra.mrb[0].mxu0 %v2121
        %v2207 = vpop.f32.mrb[0].mxu0
        %v2208 = vadd.f32 0.0, %v2207
        %v2209 = vpop.f32.mrb[0].mxu0
        %v2210 = vpop.f32.mrb[0].mxu0
        %v2211 = vpop.f32.mrb[0].mxu0
        %2212 = vdwg.mxu0
        %v2213 = vadd.f32 %v2022, %v2167
        %v2214 = vadd.f32 %v2024, %v2169
        %v2215 = vadd.f32 %v2063, %v2208
        %2217 = vset.pattern.permute.xlu0 0
        %2218 = vperm.xlu0 %2217, %v1775
        %v2219 = vpop.permute.xlu0 %2218
        %v2221 = vmul.f32 %v2213, %v2219
        %v2222 = vmul.f32 %v2214, %v2219
        %v2223 = vmul.f32 %v2215, %v2219
        %2225 = vset.pattern.permute.xlu0 0
        %2226 = vperm.xlu0 %2225, %v1776
        %v2227 = vpop.permute.xlu0 %2226
        %v2229 = vadd.f32 %v2221, %v2227
        %v2230 = vadd.f32 %v2222, %v2227
        %v2231 = vadd.f32 %v2223, %v2227
        %v2232 = vmax.f32 %v2229, 0.0
        %v2233 = vmax.f32 %v2230, 0.0
        %v2234 = vmax.f32 %v2231, 0.0
        %2235 = vst [vmem:[%s163] sm:$0xff] %v2232
        %2236 = vst [vmem:[%s163 + $0x8] sm:$0xff] %v2233
        %vm2237 = vcmask 261120
        %2238 = vst.msk [vmem:[%s163 + $0x10] sm:$0xff] %vm2237, %v2234
        %v2239 = vld [vmem:[%s1] sm:$0xf]
        %v2240 = vld [vmem:[%s520] sm:$0xff]
        %v2241 = vld [vmem:[%s520 + $0x8] sm:$0xf]
        %v2242 = vld [vmem:[%s520 + $0xc] sm:$0xff]
        %v2243 = vld [vmem:[%s520 + $0x14] sm:$0xf]
        %v2244 = vld [vmem:[%s520 + $0x18] sm:$0xff]
        %v2245 = vld [vmem:[%s520 + $0x20] sm:$0xf]
        %v2246 = vld [vmem:[%s520 + $0x24] sm:$0xff]
        %v2247 = vld [vmem:[%s520 + $0x2c] sm:$0xf]
        %v2248 = vld [vmem:[%s520 + $0x30] sm:$0x33]
        %v2249 = vld [vmem:[%s520 + $0x38] sm:$0x3]
        %v2250 = vld [vmem:[%s1788] sm:$0xf]
        %v2251 = vld [vmem:[%s775] sm:$0xff]
        %v2252 = vld [vmem:[%s775 + $0x8] sm:$0xf]
        %v2253 = vld [vmem:[%s775 + $0xc] sm:$0xff]
        %v2254 = vld [vmem:[%s775 + $0x14] sm:$0xf]
        %v2255 = vld [vmem:[%s775 + $0x18] sm:$0xff]
        %v2256 = vld [vmem:[%s775 + $0x20] sm:$0xf]
        %v2257 = vld [vmem:[%s775 + $0x24] sm:$0xff]
        %v2258 = vld [vmem:[%s775 + $0x2c] sm:$0xf]
        %v2259 = vld [vmem:[%s775 + $0x30] sm:$0x33]
        %v2260 = vld [vmem:[%s775 + $0x38] sm:$0x3]
        %v2271 = vunpack.c.l.b16 %v2251
        %v2272 = vunpack.c.h.b16 %v2251
        %v2273 = vunpack.c.l.b16 %v2252
        %v2274 = vunpack.c.l.b16 %v2253
        %v2275 = vunpack.c.h.b16 %v2253
        %v2276 = vunpack.c.l.b16 %v2254
        %v2277 = vunpack.c.l.b16 %v2255
        %v2278 = vunpack.c.h.b16 %v2255
        %v2279 = vunpack.c.l.b16 %v2256
        %v2280 = vunpack.c.l.b16 %v2257
        %v2281 = vunpack.c.h.b16 %v2257
        %v2282 = vunpack.c.l.b16 %v2258
        %v2283 = vunpack.c.l.b16 %v2259
        %v2284 = vunpack.c.h.b16 %v2259
        %v2285 = vunpack.c.l.b16 %v2260
        %v2286 = vpack.c.b16 %v2274, %v2271
        %v2287 = vpack.c.b16 %v2275, %v2272
        %v2288 = vpack.c.b16 %v2276, %v2273
        %v2289 = vpack.c.b16 %v2280, %v2277
        %v2290 = vpack.c.b16 %v2281, %v2278
        %v2291 = vpack.c.b16 %v2282, %v2279
        %v2292 = vpack.c.b16 %v2283, %v2283
        %v2293 = vpack.c.b16 %v2284, %v2284
        %v2294 = vpack.c.b16 %v2285, %v2285
        %v2302 = vsel %vm1840, %v2250, 0
        %v2305 = vsel %vm1844, %v2292, 0
        %v2308 = vsel %vm1844, %v2293, 0
        %v2311 = vsel %vm1844, %v2294, 0
        %2313 = vmatprep.subr.bf16.mxu0 %v2287
        %2314 = vmatpush1.bf16.msra.mxu0 %v2286
        %2315 = vmatprep.subr.bf16.mxu0 %v2290
        %2316 = vmatpush1.bf16.msra.mxu0 %v2289
        %2317 = vmatprep.subr.bf16.mxu0 %v2308
        %2318 = vmatpush1.bf16.msra.mxu0 %v2305
        %2319 = vmatprep.subr.bf16.mxu0 0
        %2320 = vmatpush1.bf16.msra.mxu0 0
        %2321 = vmatprep.subr.bf16.mxu0 0
        %2322 = vmatpush1.bf16.msra.mxu0 0
        %2323 = vmatprep.subr.bf16.mxu0 0
        %2324 = vmatpush1.bf16.msra.mxu0 0
        %2325 = vmatprep.subr.bf16.mxu0 0
        %2326 = vmatpush1.bf16.msra.mxu0 0
        %2327 = vmatprep.subr.bf16.mxu0 0
        %2328 = vmatpush1.bf16.msra.mxu0 0
        %2329 = vmatprep.subr.bf16.mxu0 0
        %2330 = vmatpush1.bf16.msra.mxu0 0
        %2331 = vmatprep.subr.bf16.mxu0 0
        %2332 = vmatpush1.bf16.msra.mxu0 0
        %2333 = vmatprep.subr.bf16.mxu0 0
        %2334 = vmatpush1.bf16.msra.mxu0 0
        %2335 = vmatprep.subr.bf16.mxu0 0
        %2336 = vmatpush1.bf16.msra.mxu0 0
        %2337 = vmatprep.subr.bf16.mxu0 0
        %2338 = vmatpush1.bf16.msra.mxu0 0
        %2339 = vmatprep.subr.bf16.mxu0 0
        %2340 = vmatpush1.bf16.msra.mxu0 0
        %2341 = vmatprep.subr.bf16.mxu0 0
        %2342 = vmatpush1.bf16.msra.mxu0 0
        %2343 = vmatprep.subr.bf16.mxu0 0
        %2344 = vmatpush1.bf16.msra.mxu0 0
        %2345 = vmatprep.mubr.bf16.mxu0 0
        %2346 = vmatmul.mubr.bf16.gmra.mrb[0].mxu0 %v2302
        %v2347 = vpop.f32.mrb[0].mxu0
        %v2348 = vadd.f32 0.0, %v2347
        %v2349 = vpop.f32.mrb[0].mxu0
        %v2350 = vadd.f32 0.0, %v2349
        %v2351 = vpop.f32.mrb[0].mxu0
        %v2352 = vpop.f32.mrb[0].mxu0
        %2353 = vdwg.mxu0
        %2354 = vmatprep.subr.bf16.mxu0 0
        %2355 = vmatpush1.bf16.msra.mxu0 %v2288
        %2356 = vmatprep.subr.bf16.mxu0 0
        %2357 = vmatpush1.bf16.msra.mxu0 %v2291
        %2358 = vmatprep.subr.bf16.mxu0 0
        %2359 = vmatpush1.bf16.msra.mxu0 %v2311
        %2360 = vmatprep.subr.bf16.mxu0 0
        %2361 = vmatpush1.bf16.msra.mxu0 0
        %2362 = vmatprep.subr.bf16.mxu0 0
        %2363 = vmatpush1.bf16.msra.mxu0 0
        %2364 = vmatprep.subr.bf16.mxu0 0
        %2365 = vmatpush1.bf16.msra.mxu0 0
        %2366 = vmatprep.subr.bf16.mxu0 0
        %2367 = vmatpush1.bf16.msra.mxu0 0
        %2368 = vmatprep.subr.bf16.mxu0 0
        %2369 = vmatpush1.bf16.msra.mxu0 0
        %2370 = vmatprep.subr.bf16.mxu0 0
        %2371 = vmatpush1.bf16.msra.mxu0 0
        %2372 = vmatprep.subr.bf16.mxu0 0
        %2373 = vmatpush1.bf16.msra.mxu0 0
        %2374 = vmatprep.subr.bf16.mxu0 0
        %2375 = vmatpush1.bf16.msra.mxu0 0
        %2376 = vmatprep.subr.bf16.mxu0 0
        %2377 = vmatpush1.bf16.msra.mxu0 0
        %2378 = vmatprep.subr.bf16.mxu0 0
        %2379 = vmatpush1.bf16.msra.mxu0 0
        %2380 = vmatprep.subr.bf16.mxu0 0
        %2381 = vmatpush1.bf16.msra.mxu0 0
        %2382 = vmatprep.subr.bf16.mxu0 0
        %2383 = vmatpush1.bf16.msra.mxu0 0
        %2384 = vmatprep.subr.bf16.mxu0 0
        %2385 = vmatpush1.bf16.msra.mxu0 0
        %2386 = vmatprep.mubr.bf16.mxu0 0
        %2387 = vmatmul.mubr.bf16.gmra.mrb[0].mxu0 %v2302
        %v2388 = vpop.f32.mrb[0].mxu0
        %v2389 = vadd.f32 0.0, %v2388
        %v2390 = vpop.f32.mrb[0].mxu0
        %v2391 = vpop.f32.mrb[0].mxu0
        %v2392 = vpop.f32.mrb[0].mxu0
        %2393 = vdwg.mxu0
        %v2404 = vunpack.c.l.b16 %v2240
        %v2405 = vunpack.c.h.b16 %v2240
        %v2406 = vunpack.c.l.b16 %v2241
        %v2407 = vunpack.c.l.b16 %v2242
        %v2408 = vunpack.c.h.b16 %v2242
        %v2409 = vunpack.c.l.b16 %v2243
        %v2410 = vunpack.c.l.b16 %v2244
        %v2411 = vunpack.c.h.b16 %v2244
        %v2412 = vunpack.c.l.b16 %v2245
        %v2413 = vunpack.c.l.b16 %v2246
        %v2414 = vunpack.c.h.b16 %v2246
        %v2415 = vunpack.c.l.b16 %v2247
        %v2416 = vunpack.c.l.b16 %v2248
        %v2417 = vunpack.c.h.b16 %v2248
        %v2418 = vunpack.c.l.b16 %v2249
        %v2419 = vpack.c.b16 %v2407, %v2404
        %v2420 = vpack.c.b16 %v2408, %v2405
        %v2421 = vpack.c.b16 %v2409, %v2406
        %v2422 = vpack.c.b16 %v2413, %v2410
        %v2423 = vpack.c.b16 %v2414, %v2411
        %v2424 = vpack.c.b16 %v2415, %v2412
        %v2425 = vpack.c.b16 %v2416, %v2416
        %v2426 = vpack.c.b16 %v2417, %v2417
        %v2427 = vpack.c.b16 %v2418, %v2418
        %v2435 = vsel %vm1840, %v2239, 0
        %v2438 = vsel %vm1844, %v2425, 0
        %v2441 = vsel %vm1844, %v2426, 0
        %v2444 = vsel %vm1844, %v2427, 0
        %2446 = vmatprep.subr.bf16.mxu0 %v2420
        %2447 = vmatpush1.bf16.msra.mxu0 %v2419
        %2448 = vmatprep.subr.bf16.mxu0 %v2423
        %2449 = vmatpush1.bf16.msra.mxu0 %v2422
        %2450 = vmatprep.subr.bf16.mxu0 %v2441
        %2451 = vmatpush1.bf16.msra.mxu0 %v2438
        %2452 = vmatprep.subr.bf16.mxu0 0
        %2453 = vmatpush1.bf16.msra.mxu0 0
        %2454 = vmatprep.subr.bf16.mxu0 0
        %2455 = vmatpush1.bf16.msra.mxu0 0
        %2456 = vmatprep.subr.bf16.mxu0 0
        %2457 = vmatpush1.bf16.msra.mxu0 0
        %2458 = vmatprep.subr.bf16.mxu0 0
        %2459 = vmatpush1.bf16.msra.mxu0 0
        %2460 = vmatprep.subr.bf16.mxu0 0
        %2461 = vmatpush1.bf16.msra.mxu0 0
        %2462 = vmatprep.subr.bf16.mxu0 0
        %2463 = vmatpush1.bf16.msra.mxu0 0
        %2464 = vmatprep.subr.bf16.mxu0 0
        %2465 = vmatpush1.bf16.msra.mxu0 0
        %2466 = vmatprep.subr.bf16.mxu0 0
        %2467 = vmatpush1.bf16.msra.mxu0 0
        %2468 = vmatprep.subr.bf16.mxu0 0
        %2469 = vmatpush1.bf16.msra.mxu0 0
        %2470 = vmatprep.subr.bf16.mxu0 0
        %2471 = vmatpush1.bf16.msra.mxu0 0
        %2472 = vmatprep.subr.bf16.mxu0 0
        %2473 = vmatpush1.bf16.msra.mxu0 0
        %2474 = vmatprep.subr.bf16.mxu0 0
        %2475 = vmatpush1.bf16.msra.mxu0 0
        %2476 = vmatprep.subr.bf16.mxu0 0
        %2477 = vmatpush1.bf16.msra.mxu0 0
        %2478 = vmatprep.mubr.bf16.mxu0 0
        %2479 = vmatmul.mubr.bf16.gmra.mrb[0].mxu0 %v2435
        %v2480 = vpop.f32.mrb[0].mxu0
        %v2481 = vadd.f32 %v2348, %v2480
        %v2482 = vpop.f32.mrb[0].mxu0
        %v2483 = vadd.f32 %v2350, %v2482
        %v2484 = vpop.f32.mrb[0].mxu0
        %v2485 = vpop.f32.mrb[0].mxu0
        %2486 = vdwg.mxu0
        %2487 = vmatprep.subr.bf16.mxu0 0
        %2488 = vmatpush1.bf16.msra.mxu0 %v2421
        %2489 = vmatprep.subr.bf16.mxu0 0
        %2490 = vmatpush1.bf16.msra.mxu0 %v2424
        %2491 = vmatprep.subr.bf16.mxu0 0
        %2492 = vmatpush1.bf16.msra.mxu0 %v2444
        %2493 = vmatprep.subr.bf16.mxu0 0
        %2494 = vmatpush1.bf16.msra.mxu0 0
        %2495 = vmatprep.subr.bf16.mxu0 0
        %2496 = vmatpush1.bf16.msra.mxu0 0
        %2497 = vmatprep.subr.bf16.mxu0 0
        %2498 = vmatpush1.bf16.msra.mxu0 0
        %2499 = vmatprep.subr.bf16.mxu0 0
        %2500 = vmatpush1.bf16.msra.mxu0 0
        %2501 = vmatprep.subr.bf16.mxu0 0
        %2502 = vmatpush1.bf16.msra.mxu0 0
        %2503 = vmatprep.subr.bf16.mxu0 0
        %2504 = vmatpush1.bf16.msra.mxu0 0
        %2505 = vmatprep.subr.bf16.mxu0 0
        %2506 = vmatpush1.bf16.msra.mxu0 0
        %2507 = vmatprep.subr.bf16.mxu0 0
        %2508 = vmatpush1.bf16.msra.mxu0 0
        %2509 = vmatprep.subr.bf16.mxu0 0
        %2510 = vmatpush1.bf16.msra.mxu0 0
        %2511 = vmatprep.subr.bf16.mxu0 0
        %2512 = vmatpush1.bf16.msra.mxu0 0
        %2513 = vmatprep.subr.bf16.mxu0 0
        %2514 = vmatpush1.bf16.msra.mxu0 0
        %2515 = vmatprep.subr.bf16.mxu0 0
        %2516 = vmatpush1.bf16.msra.mxu0 0
        %2517 = vmatprep.subr.bf16.mxu0 0
        %2518 = vmatpush1.bf16.msra.mxu0 0
        %2519 = vmatprep.mubr.bf16.mxu0 0
        %2520 = vmatmul.mubr.bf16.gmra.mrb[0].mxu0 %v2435
        %v2521 = vpop.f32.mrb[0].mxu0
        %v2522 = vadd.f32 %v2389, %v2521
        %v2523 = vpop.f32.mrb[0].mxu0
        %v2524 = vpop.f32.mrb[0].mxu0
        %v2525 = vpop.f32.mrb[0].mxu0
        %2526 = vdwg.mxu0
        %v2527 = vld [vmem:[%s2068] sm:$0xf]
        %v2528 = vld [vmem:[%s1030] sm:$0xff]
        %v2529 = vld [vmem:[%s1030 + $0x8] sm:$0xf]
        %v2530 = vld [vmem:[%s1030 + $0xc] sm:$0xff]
        %v2531 = vld [vmem:[%s1030 + $0x14] sm:$0xf]
        %v2532 = vld [vmem:[%s1030 + $0x18] sm:$0xff]
        %v2533 = vld [vmem:[%s1030 + $0x20] sm:$0xf]
        %v2534 = vld [vmem:[%s1030 + $0x24] sm:$0xff]
        %v2535 = vld [vmem:[%s1030 + $0x2c] sm:$0xf]
        %v2536 = vld [vmem:[%s1030 + $0x30] sm:$0x33]
        %v2537 = vld [vmem:[%s1030 + $0x38] sm:$0x3]
        %v2548 = vunpack.c.l.b16 %v2528
        %v2549 = vunpack.c.h.b16 %v2528
        %v2550 = vunpack.c.l.b16 %v2529
        %v2551 = vunpack.c.l.b16 %v2530
        %v2552 = vunpack.c.h.b16 %v2530
        %v2553 = vunpack.c.l.b16 %v2531
        %v2554 = vunpack.c.l.b16 %v2532
        %v2555 = vunpack.c.h.b16 %v2532
        %v2556 = vunpack.c.l.b16 %v2533
        %v2557 = vunpack.c.l.b16 %v2534
        %v2558 = vunpack.c.h.b16 %v2534
        %v2559 = vunpack.c.l.b16 %v2535
        %v2560 = vunpack.c.l.b16 %v2536
        %v2561 = vunpack.c.h.b16 %v2536
        %v2562 = vunpack.c.l.b16 %v2537
        %v2563 = vpack.c.b16 %v2551, %v2548
        %v2564 = vpack.c.b16 %v2552, %v2549
        %v2565 = vpack.c.b16 %v2553, %v2550
        %v2566 = vpack.c.b16 %v2557, %v2554
        %v2567 = vpack.c.b16 %v2558, %v2555
        %v2568 = vpack.c.b16 %v2559, %v2556
        %v2569 = vpack.c.b16 %v2560, %v2560
        %v2570 = vpack.c.b16 %v2561, %v2561
        %v2571 = vpack.c.b16 %v2562, %v2562
        %v2579 = vsel %vm1840, %v2527, 0
        %v2582 = vsel %vm1844, %v2569, 0
        %v2585 = vsel %vm1844, %v2570, 0
        %v2588 = vsel %vm1844, %v2571, 0
        %2590 = vmatprep.subr.bf16.mxu0 %v2564
        %2591 = vmatpush1.bf16.msra.mxu0 %v2563
        %2592 = vmatprep.subr.bf16.mxu0 %v2567
        %2593 = vmatpush1.bf16.msra.mxu0 %v2566
        %2594 = vmatprep.subr.bf16.mxu0 %v2585
        %2595 = vmatpush1.bf16.msra.mxu0 %v2582
        %2596 = vmatprep.subr.bf16.mxu0 0
        %2597 = vmatpush1.bf16.msra.mxu0 0
        %2598 = vmatprep.subr.bf16.mxu0 0
        %2599 = vmatpush1.bf16.msra.mxu0 0
        %2600 = vmatprep.subr.bf16.mxu0 0
        %2601 = vmatpush1.bf16.msra.mxu0 0
        %2602 = vmatprep.subr.bf16.mxu0 0
        %2603 = vmatpush1.bf16.msra.mxu0 0
        %2604 = vmatprep.subr.bf16.mxu0 0
        %2605 = vmatpush1.bf16.msra.mxu0 0
        %2606 = vmatprep.subr.bf16.mxu0 0
        %2607 = vmatpush1.bf16.msra.mxu0 0
        %2608 = vmatprep.subr.bf16.mxu0 0
        %2609 = vmatpush1.bf16.msra.mxu0 0
        %2610 = vmatprep.subr.bf16.mxu0 0
        %2611 = vmatpush1.bf16.msra.mxu0 0
        %2612 = vmatprep.subr.bf16.mxu0 0
        %2613 = vmatpush1.bf16.msra.mxu0 0
        %2614 = vmatprep.subr.bf16.mxu0 0
        %2615 = vmatpush1.bf16.msra.mxu0 0
        %2616 = vmatprep.subr.bf16.mxu0 0
        %2617 = vmatpush1.bf16.msra.mxu0 0
        %2618 = vmatprep.subr.bf16.mxu0 0
        %2619 = vmatpush1.bf16.msra.mxu0 0
        %2620 = vmatprep.subr.bf16.mxu0 0
        %2621 = vmatpush1.bf16.msra.mxu0 0
        %2622 = vmatprep.mubr.bf16.mxu0 0
        %2623 = vmatmul.mubr.bf16.gmra.mrb[0].mxu0 %v2579
        %v2624 = vpop.f32.mrb[0].mxu0
        %v2625 = vadd.f32 0.0, %v2624
        %v2626 = vpop.f32.mrb[0].mxu0
        %v2627 = vadd.f32 0.0, %v2626
        %v2628 = vpop.f32.mrb[0].mxu0
        %v2629 = vpop.f32.mrb[0].mxu0
        %2630 = vdwg.mxu0
        %2631 = vmatprep.subr.bf16.mxu0 0
        %2632 = vmatpush1.bf16.msra.mxu0 %v2565
        %2633 = vmatprep.subr.bf16.mxu0 0
        %2634 = vmatpush1.bf16.msra.mxu0 %v2568
        %2635 = vmatprep.subr.bf16.mxu0 0
        %2636 = vmatpush1.bf16.msra.mxu0 %v2588
        %2637 = vmatprep.subr.bf16.mxu0 0
        %2638 = vmatpush1.bf16.msra.mxu0 0
        %2639 = vmatprep.subr.bf16.mxu0 0
        %2640 = vmatpush1.bf16.msra.mxu0 0
        %2641 = vmatprep.subr.bf16.mxu0 0
        %2642 = vmatpush1.bf16.msra.mxu0 0
        %2643 = vmatprep.subr.bf16.mxu0 0
        %2644 = vmatpush1.bf16.msra.mxu0 0
        %2645 = vmatprep.subr.bf16.mxu0 0
        %2646 = vmatpush1.bf16.msra.mxu0 0
        %2647 = vmatprep.subr.bf16.mxu0 0
        %2648 = vmatpush1.bf16.msra.mxu0 0
        %2649 = vmatprep.subr.bf16.mxu0 0
        %2650 = vmatpush1.bf16.msra.mxu0 0
        %2651 = vmatprep.subr.bf16.mxu0 0
        %2652 = vmatpush1.bf16.msra.mxu0 0
        %2653 = vmatprep.subr.bf16.mxu0 0
        %2654 = vmatpush1.bf16.msra.mxu0 0
        %2655 = vmatprep.subr.bf16.mxu0 0
        %2656 = vmatpush1.bf16.msra.mxu0 0
        %2657 = vmatprep.subr.bf16.mxu0 0
        %2658 = vmatpush1.bf16.msra.mxu0 0
        %2659 = vmatprep.subr.bf16.mxu0 0
        %2660 = vmatpush1.bf16.msra.mxu0 0
        %2661 = vmatprep.subr.bf16.mxu0 0
        %2662 = vmatpush1.bf16.msra.mxu0 0
        %2663 = vmatprep.mubr.bf16.mxu0 0
        %2664 = vmatmul.mubr.bf16.gmra.mrb[0].mxu0 %v2579
        %v2665 = vpop.f32.mrb[0].mxu0
        %v2666 = vadd.f32 0.0, %v2665
        %v2667 = vpop.f32.mrb[0].mxu0
        %v2668 = vpop.f32.mrb[0].mxu0
        %v2669 = vpop.f32.mrb[0].mxu0
        %2670 = vdwg.mxu0
        %v2671 = vadd.f32 %v2481, %v2625
        %v2672 = vadd.f32 %v2483, %v2627
        %v2673 = vadd.f32 %v2522, %v2666
        %v2674 = vmul.f32 %v2671, %v2219
        %v2675 = vmul.f32 %v2672, %v2219
        %v2676 = vmul.f32 %v2673, %v2219
        %v2677 = vadd.f32 %v2674, %v2227
        %v2678 = vadd.f32 %v2675, %v2227
        %v2679 = vadd.f32 %v2676, %v2227
        %v2680 = vmax.f32 %v2677, 0.0
        %v2681 = vmax.f32 %v2678, 0.0
        %v2682 = vmax.f32 %v2679, 0.0
        %s2683 = scalar_lea.vmem %s163, 24 [#allocation5]
        %2684 = vst [vmem:[%s2683] sm:$0xff] %v2680
        %2685 = vst [vmem:[%s2683 + $0x8] sm:$0xff] %v2681
        %2686 = vst.msk [vmem:[%s2683 + $0x10] sm:$0xff] %vm2237, %v2682
        %v2687 = vld [vmem:[%s1] sm:$0xf]
        %v2688 = vld [vmem:[%s775] sm:$0xff]
        %v2689 = vld [vmem:[%s775 + $0x8] sm:$0xf]
        %v2690 = vld [vmem:[%s775 + $0xc] sm:$0xff]
        %v2691 = vld [vmem:[%s775 + $0x14] sm:$0xf]
        %v2692 = vld [vmem:[%s775 + $0x18] sm:$0xff]
        %v2693 = vld [vmem:[%s775 + $0x20] sm:$0xf]
        %v2694 = vld [vmem:[%s775 + $0x24] sm:$0xff]
        %v2695 = vld [vmem:[%s775 + $0x2c] sm:$0xf]
        %v2696 = vld [vmem:[%s775 + $0x30] sm:$0x33]
        %v2697 = vld [vmem:[%s775 + $0x38] sm:$0x3]
        %v2698 = vld [vmem:[%s1788] sm:$0xf]
        %v2699 = vld [vmem:[%s1030] sm:$0xff]
        %v2700 = vld [vmem:[%s1030 + $0x8] sm:$0xf]
        %v2701 = vld [vmem:[%s1030 + $0xc] sm:$0xff]
        %v2702 = vld [vmem:[%s1030 + $0x14] sm:$0xf]
        %v2703 = vld [vmem:[%s1030 + $0x18] sm:$0xff]
        %v2704 = vld [vmem:[%s1030 + $0x20] sm:$0xf]
        %v2705 = vld [vmem:[%s1030 + $0x24] sm:$0xff]
        %v2706 = vld [vmem:[%s1030 + $0x2c] sm:$0xf]
        %v2707 = vld [vmem:[%s1030 + $0x30] sm:$0x33]
        %v2708 = vld [vmem:[%s1030 + $0x38] sm:$0x3]
        %v2719 = vunpack.c.l.b16 %v2699
        %v2720 = vunpack.c.h.b16 %v2699
        %v2721 = vunpack.c.l.b16 %v2700
        %v2722 = vunpack.c.l.b16 %v2701
        %v2723 = vunpack.c.h.b16 %v2701
        %v2724 = vunpack.c.l.b16 %v2702
        %v2725 = vunpack.c.l.b16 %v2703
        %v2726 = vunpack.c.h.b16 %v2703
        %v2727 = vunpack.c.l.b16 %v2704
        %v2728 = vunpack.c.l.b16 %v2705
        %v2729 = vunpack.c.h.b16 %v2705
        %v2730 = vunpack.c.l.b16 %v2706
        %v2731 = vunpack.c.l.b16 %v2707
        %v2732 = vunpack.c.h.b16 %v2707
        %v2733 = vunpack.c.l.b16 %v2708
        %v2734 = vpack.c.b16 %v2722, %v2719
        %v2735 = vpack.c.b16 %v2723, %v2720
        %v2736 = vpack.c.b16 %v2724, %v2721
        %v2737 = vpack.c.b16 %v2728, %v2725
        %v2738 = vpack.c.b16 %v2729, %v2726
        %v2739 = vpack.c.b16 %v2730, %v2727
        %v2740 = vpack.c.b16 %v2731, %v2731
        %v2741 = vpack.c.b16 %v2732, %v2732
        %v2742 = vpack.c.b16 %v2733, %v2733
        %v2750 = vsel %vm1840, %v2698, 0
        %v2753 = vsel %vm1844, %v2740, 0
        %v2756 = vsel %vm1844, %v2741, 0
        %v2759 = vsel %vm1844, %v2742, 0
        %2761 = vmatprep.subr.bf16.mxu0 %v2735
        %2762 = vmatpush1.bf16.msra.mxu0 %v2734
        %2763 = vmatprep.subr.bf16.mxu0 %v2738
        %2764 = vmatpush1.bf16.msra.mxu0 %v2737
        %2765 = vmatprep.subr.bf16.mxu0 %v2756
        %2766 = vmatpush1.bf16.msra.mxu0 %v2753
        %2767 = vmatprep.subr.bf16.mxu0 0
        %2768 = vmatpush1.bf16.msra.mxu0 0
        %2769 = vmatprep.subr.bf16.mxu0 0
        %2770 = vmatpush1.bf16.msra.mxu0 0
        %2771 = vmatprep.subr.bf16.mxu0 0
        %2772 = vmatpush1.bf16.msra.mxu0 0
        %2773 = vmatprep.subr.bf16.mxu0 0
        %2774 = vmatpush1.bf16.msra.mxu0 0
        %2775 = vmatprep.subr.bf16.mxu0 0
        %2776 = vmatpush1.bf16.msra.mxu0 0
        %2777 = vmatprep.subr.bf16.mxu0 0
        %2778 = vmatpush1.bf16.msra.mxu0 0
        %2779 = vmatprep.subr.bf16.mxu0 0
        %2780 = vmatpush1.bf16.msra.mxu0 0
        %2781 = vmatprep.subr.bf16.mxu0 0
        %2782 = vmatpush1.bf16.msra.mxu0 0
        %2783 = vmatprep.subr.bf16.mxu0 0
        %2784 = vmatpush1.bf16.msra.mxu0 0
        %2785 = vmatprep.subr.bf16.mxu0 0
        %2786 = vmatpush1.bf16.msra.mxu0 0
        %2787 = vmatprep.subr.bf16.mxu0 0
        %2788 = vmatpush1.bf16.msra.mxu0 0
        %2789 = vmatprep.subr.bf16.mxu0 0
        %2790 = vmatpush1.bf16.msra.mxu0 0
        %2791 = vmatprep.subr.bf16.mxu0 0
        %2792 = vmatpush1.bf16.msra.mxu0 0
        %2793 = vmatprep.mubr.bf16.mxu0 0
        %2794 = vmatmul.mubr.bf16.gmra.mrb[0].mxu0 %v2750
        %v2795 = vpop.f32.mrb[0].mxu0
        %v2796 = vadd.f32 0.0, %v2795
        %v2797 = vpop.f32.mrb[0].mxu0
        %v2798 = vadd.f32 0.0, %v2797
        %v2799 = vpop.f32.mrb[0].mxu0
        %v2800 = vpop.f32.mrb[0].mxu0
        %2801 = vdwg.mxu0
        %2802 = vmatprep.subr.bf16.mxu0 0
        %2803 = vmatpush1.bf16.msra.mxu0 %v2736
        %2804 = vmatprep.subr.bf16.mxu0 0
        %2805 = vmatpush1.bf16.msra.mxu0 %v2739
        %2806 = vmatprep.subr.bf16.mxu0 0
        %2807 = vmatpush1.bf16.msra.mxu0 %v2759
        %2808 = vmatprep.subr.bf16.mxu0 0
        %2809 = vmatpush1.bf16.msra.mxu0 0
        %2810 = vmatprep.subr.bf16.mxu0 0
        %2811 = vmatpush1.bf16.msra.mxu0 0
        %2812 = vmatprep.subr.bf16.mxu0 0
        %2813 = vmatpush1.bf16.msra.mxu0 0
        %2814 = vmatprep.subr.bf16.mxu0 0
        %2815 = vmatpush1.bf16.msra.mxu0 0
        %2816 = vmatprep.subr.bf16.mxu0 0
        %2817 = vmatpush1.bf16.msra.mxu0 0
        %2818 = vmatprep.subr.bf16.mxu0 0
        %2819 = vmatpush1.bf16.msra.mxu0 0
        %2820 = vmatprep.subr.bf16.mxu0 0
        %2821 = vmatpush1.bf16.msra.mxu0 0
        %2822 = vmatprep.subr.bf16.mxu0 0
        %2823 = vmatpush1.bf16.msra.mxu0 0
        %2824 = vmatprep.subr.bf16.mxu0 0
        %2825 = vmatpush1.bf16.msra.mxu0 0
        %2826 = vmatprep.subr.bf16.mxu0 0
        %2827 = vmatpush1.bf16.msra.mxu0 0
        %2828 = vmatprep.subr.bf16.mxu0 0
        %2829 = vmatpush1.bf16.msra.mxu0 0
        %2830 = vmatprep.subr.bf16.mxu0 0
        %2831 = vmatpush1.bf16.msra.mxu0 0
        %2832 = vmatprep.subr.bf16.mxu0 0
        %2833 = vmatpush1.bf16.msra.mxu0 0
        %2834 = vmatprep.mubr.bf16.mxu0 0
        %2835 = vmatmul.mubr.bf16.gmra.mrb[0].mxu0 %v2750
        %v2836 = vpop.f32.mrb[0].mxu0
        %v2837 = vadd.f32 0.0, %v2836
        %v2838 = vpop.f32.mrb[0].mxu0
        %v2839 = vpop.f32.mrb[0].mxu0
        %v2840 = vpop.f32.mrb[0].mxu0
        %2841 = vdwg.mxu0
        %v2852 = vunpack.c.l.b16 %v2688
        %v2853 = vunpack.c.h.b16 %v2688
        %v2854 = vunpack.c.l.b16 %v2689
        %v2855 = vunpack.c.l.b16 %v2690
        %v2856 = vunpack.c.h.b16 %v2690
        %v2857 = vunpack.c.l.b16 %v2691
        %v2858 = vunpack.c.l.b16 %v2692
        %v2859 = vunpack.c.h.b16 %v2692
        %v2860 = vunpack.c.l.b16 %v2693
        %v2861 = vunpack.c.l.b16 %v2694
        %v2862 = vunpack.c.h.b16 %v2694
        %v2863 = vunpack.c.l.b16 %v2695
        %v2864 = vunpack.c.l.b16 %v2696
        %v2865 = vunpack.c.h.b16 %v2696
        %v2866 = vunpack.c.l.b16 %v2697
        %v2867 = vpack.c.b16 %v2855, %v2852
        %v2868 = vpack.c.b16 %v2856, %v2853
        %v2869 = vpack.c.b16 %v2857, %v2854
        %v2870 = vpack.c.b16 %v2861, %v2858
        %v2871 = vpack.c.b16 %v2862, %v2859
        %v2872 = vpack.c.b16 %v2863, %v2860
        %v2873 = vpack.c.b16 %v2864, %v2864
        %v2874 = vpack.c.b16 %v2865, %v2865
        %v2875 = vpack.c.b16 %v2866, %v2866
        %v2883 = vsel %vm1840, %v2687, 0
        %v2886 = vsel %vm1844, %v2873, 0
        %v2889 = vsel %vm1844, %v2874, 0
        %v2892 = vsel %vm1844, %v2875, 0
        %2894 = vmatprep.subr.bf16.mxu0 %v2868
        %2895 = vmatpush1.bf16.msra.mxu0 %v2867
        %2896 = vmatprep.subr.bf16.mxu0 %v2871
        %2897 = vmatpush1.bf16.msra.mxu0 %v2870
        %2898 = vmatprep.subr.bf16.mxu0 %v2889
        %2899 = vmatpush1.bf16.msra.mxu0 %v2886
        %2900 = vmatprep.subr.bf16.mxu0 0
        %2901 = vmatpush1.bf16.msra.mxu0 0
        %2902 = vmatprep.subr.bf16.mxu0 0
        %2903 = vmatpush1.bf16.msra.mxu0 0
        %2904 = vmatprep.subr.bf16.mxu0 0
        %2905 = vmatpush1.bf16.msra.mxu0 0
        %2906 = vmatprep.subr.bf16.mxu0 0
        %2907 = vmatpush1.bf16.msra.mxu0 0
        %2908 = vmatprep.subr.bf16.mxu0 0
        %2909 = vmatpush1.bf16.msra.mxu0 0
        %2910 = vmatprep.subr.bf16.mxu0 0
        %2911 = vmatpush1.bf16.msra.mxu0 0
        %2912 = vmatprep.subr.bf16.mxu0 0
        %2913 = vmatpush1.bf16.msra.mxu0 0
        %2914 = vmatprep.subr.bf16.mxu0 0
        %2915 = vmatpush1.bf16.msra.mxu0 0
        %2916 = vmatprep.subr.bf16.mxu0 0
        %2917 = vmatpush1.bf16.msra.mxu0 0
        %2918 = vmatprep.subr.bf16.mxu0 0
        %2919 = vmatpush1.bf16.msra.mxu0 0
        %2920 = vmatprep.subr.bf16.mxu0 0
        %2921 = vmatpush1.bf16.msra.mxu0 0
        %2922 = vmatprep.subr.bf16.mxu0 0
        %2923 = vmatpush1.bf16.msra.mxu0 0
        %2924 = vmatprep.subr.bf16.mxu0 0
        %2925 = vmatpush1.bf16.msra.mxu0 0
        %2926 = vmatprep.mubr.bf16.mxu0 0
        %2927 = vmatmul.mubr.bf16.gmra.mrb[0].mxu0 %v2883
        %v2928 = vpop.f32.mrb[0].mxu0
        %v2929 = vadd.f32 %v2796, %v2928
        %v2930 = vpop.f32.mrb[0].mxu0
        %v2931 = vadd.f32 %v2798, %v2930
        %v2932 = vpop.f32.mrb[0].mxu0
        %v2933 = vpop.f32.mrb[0].mxu0
        %2934 = vdwg.mxu0
        %2935 = vmatprep.subr.bf16.mxu0 0
        %2936 = vmatpush1.bf16.msra.mxu0 %v2869
        %2937 = vmatprep.subr.bf16.mxu0 0
        %2938 = vmatpush1.bf16.msra.mxu0 %v2872
        %2939 = vmatprep.subr.bf16.mxu0 0
        %2940 = vmatpush1.bf16.msra.mxu0 %v2892
        %2941 = vmatprep.subr.bf16.mxu0 0
        %2942 = vmatpush1.bf16.msra.mxu0 0
        %2943 = vmatprep.subr.bf16.mxu0 0
        %2944 = vmatpush1.bf16.msra.mxu0 0
        %2945 = vmatprep.subr.bf16.mxu0 0
        %2946 = vmatpush1.bf16.msra.mxu0 0
        %2947 = vmatprep.subr.bf16.mxu0 0
        %2948 = vmatpush1.bf16.msra.mxu0 0
        %2949 = vmatprep.subr.bf16.mxu0 0
        %2950 = vmatpush1.bf16.msra.mxu0 0
        %2951 = vmatprep.subr.bf16.mxu0 0
        %2952 = vmatpush1.bf16.msra.mxu0 0
        %2953 = vmatprep.subr.bf16.mxu0 0
        %2954 = vmatpush1.bf16.msra.mxu0 0
        %2955 = vmatprep.subr.bf16.mxu0 0
        %2956 = vmatpush1.bf16.msra.mxu0 0
        %2957 = vmatprep.subr.bf16.mxu0 0
        %2958 = vmatpush1.bf16.msra.mxu0 0
        %2959 = vmatprep.subr.bf16.mxu0 0
        %2960 = vmatpush1.bf16.msra.mxu0 0
        %2961 = vmatprep.subr.bf16.mxu0 0
        %2962 = vmatpush1.bf16.msra.mxu0 0
        %2963 = vmatprep.subr.bf16.mxu0 0
        %2964 = vmatpush1.bf16.msra.mxu0 0
        %2965 = vmatprep.subr.bf16.mxu0 0
        %2966 = vmatpush1.bf16.msra.mxu0 0
        %2967 = vmatprep.mubr.bf16.mxu0 0
        %2968 = vmatmul.mubr.bf16.gmra.mrb[0].mxu0 %v2883
        %v2969 = vpop.f32.mrb[0].mxu0
        %v2970 = vadd.f32 %v2837, %v2969
        %v2971 = vpop.f32.mrb[0].mxu0
        %v2972 = vpop.f32.mrb[0].mxu0
        %v2973 = vpop.f32.mrb[0].mxu0
        %2974 = vdwg.mxu0
        %v2975 = vld [vmem:[%s2068] sm:$0xf]
        %v2976 = vld [vmem:[%s1285] sm:$0xff]
        %v2977 = vld [vmem:[%s1285 + $0x8] sm:$0xf]
        %v2978 = vld [vmem:[%s1285 + $0xc] sm:$0xff]
        %v2979 = vld [vmem:[%s1285 + $0x14] sm:$0xf]
        %v2980 = vld [vmem:[%s1285 + $0x18] sm:$0xff]
        %v2981 = vld [vmem:[%s1285 + $0x20] sm:$0xf]
        %v2982 = vld [vmem:[%s1285 + $0x24] sm:$0xff]
        %v2983 = vld [vmem:[%s1285 + $0x2c] sm:$0xf]
        %v2984 = vld [vmem:[%s1285 + $0x30] sm:$0x33]
        %v2985 = vld [vmem:[%s1285 + $0x38] sm:$0x3]
        %v2996 = vunpack.c.l.b16 %v2976
        %v2997 = vunpack.c.h.b16 %v2976
        %v2998 = vunpack.c.l.b16 %v2977
        %v2999 = vunpack.c.l.b16 %v2978
        %v3000 = vunpack.c.h.b16 %v2978
        %v3001 = vunpack.c.l.b16 %v2979
        %v3002 = vunpack.c.l.b16 %v2980
        %v3003 = vunpack.c.h.b16 %v2980
        %v3004 = vunpack.c.l.b16 %v2981
        %v3005 = vunpack.c.l.b16 %v2982
        %v3006 = vunpack.c.h.b16 %v2982
        %v3007 = vunpack.c.l.b16 %v2983
        %v3008 = vunpack.c.l.b16 %v2984
        %v3009 = vunpack.c.h.b16 %v2984
        %v3010 = vunpack.c.l.b16 %v2985
        %v3011 = vpack.c.b16 %v2999, %v2996
        %v3012 = vpack.c.b16 %v3000, %v2997
        %v3013 = vpack.c.b16 %v3001, %v2998
        %v3014 = vpack.c.b16 %v3005, %v3002
        %v3015 = vpack.c.b16 %v3006, %v3003
        %v3016 = vpack.c.b16 %v3007, %v3004
        %v3017 = vpack.c.b16 %v3008, %v3008
        %v3018 = vpack.c.b16 %v3009, %v3009
        %v3019 = vpack.c.b16 %v3010, %v3010
        %v3027 = vsel %vm1840, %v2975, 0
        %v3030 = vsel %vm1844, %v3017, 0
        %v3033 = vsel %vm1844, %v3018, 0
        %v3036 = vsel %vm1844, %v3019, 0
        %3038 = vmatprep.subr.bf16.mxu0 %v3012
        %3039 = vmatpush1.bf16.msra.mxu0 %v3011
        %3040 = vmatprep.subr.bf16.mxu0 %v3015
        %3041 = vmatpush1.bf16.msra.mxu0 %v3014
        %3042 = vmatprep.subr.bf16.mxu0 %v3033
        %3043 = vmatpush1.bf16.msra.mxu0 %v3030
        %3044 = vmatprep.subr.bf16.mxu0 0
        %3045 = vmatpush1.bf16.msra.mxu0 0
        %3046 = vmatprep.subr.bf16.mxu0 0
        %3047 = vmatpush1.bf16.msra.mxu0 0
        %3048 = vmatprep.subr.bf16.mxu0 0
        %3049 = vmatpush1.bf16.msra.mxu0 0
        %3050 = vmatprep.subr.bf16.mxu0 0
        %3051 = vmatpush1.bf16.msra.mxu0 0
        %3052 = vmatprep.subr.bf16.mxu0 0
        %3053 = vmatpush1.bf16.msra.mxu0 0
        %3054 = vmatprep.subr.bf16.mxu0 0
        %3055 = vmatpush1.bf16.msra.mxu0 0
        %3056 = vmatprep.subr.bf16.mxu0 0
        %3057 = vmatpush1.bf16.msra.mxu0 0
        %3058 = vmatprep.subr.bf16.mxu0 0
        %3059 = vmatpush1.bf16.msra.mxu0 0
        %3060 = vmatprep.subr.bf16.mxu0 0
        %3061 = vmatpush1.bf16.msra.mxu0 0
        %3062 = vmatprep.subr.bf16.mxu0 0
        %3063 = vmatpush1.bf16.msra.mxu0 0
        %3064 = vmatprep.subr.bf16.mxu0 0
        %3065 = vmatpush1.bf16.msra.mxu0 0
        %3066 = vmatprep.subr.bf16.mxu0 0
        %3067 = vmatpush1.bf16.msra.mxu0 0
        %3068 = vmatprep.subr.bf16.mxu0 0
        %3069 = vmatpush1.bf16.msra.mxu0 0
        %3070 = vmatprep.mubr.bf16.mxu0 0
        %3071 = vmatmul.mubr.bf16.gmra.mrb[0].mxu0 %v3027
        %v3072 = vpop.f32.mrb[0].mxu0
        %v3073 = vadd.f32 0.0, %v3072
        %v3074 = vpop.f32.mrb[0].mxu0
        %v3075 = vadd.f32 0.0, %v3074
        %v3076 = vpop.f32.mrb[0].mxu0
        %v3077 = vpop.f32.mrb[0].mxu0
        %3078 = vdwg.mxu0
        %3079 = vmatprep.subr.bf16.mxu0 0
        %3080 = vmatpush1.bf16.msra.mxu0 %v3013
        %3081 = vmatprep.subr.bf16.mxu0 0
        %3082 = vmatpush1.bf16.msra.mxu0 %v3016
        %3083 = vmatprep.subr.bf16.mxu0 0
        %3084 = vmatpush1.bf16.msra.mxu0 %v3036
        %3085 = vmatprep.subr.bf16.mxu0 0
        %3086 = vmatpush1.bf16.msra.mxu0 0
        %3087 = vmatprep.subr.bf16.mxu0 0
        %3088 = vmatpush1.bf16.msra.mxu0 0
        %3089 = vmatprep.subr.bf16.mxu0 0
        %3090 = vmatpush1.bf16.msra.mxu0 0
        %3091 = vmatprep.subr.bf16.mxu0 0
        %3092 = vmatpush1.bf16.msra.mxu0 0
        %3093 = vmatprep.subr.bf16.mxu0 0
        %3094 = vmatpush1.bf16.msra.mxu0 0
        %3095 = vmatprep.subr.bf16.mxu0 0
        %3096 = vmatpush1.bf16.msra.mxu0 0
        %3097 = vmatprep.subr.bf16.mxu0 0
        %3098 = vmatpush1.bf16.msra.mxu0 0
        %3099 = vmatprep.subr.bf16.mxu0 0
        %3100 = vmatpush1.bf16.msra.mxu0 0
        %3101 = vmatprep.subr.bf16.mxu0 0
        %3102 = vmatpush1.bf16.msra.mxu0 0
        %3103 = vmatprep.subr.bf16.mxu0 0
        %3104 = vmatpush1.bf16.msra.mxu0 0
        %3105 = vmatprep.subr.bf16.mxu0 0
        %3106 = vmatpush1.bf16.msra.mxu0 0
        %3107 = vmatprep.subr.bf16.mxu0 0
        %3108 = vmatpush1.bf16.msra.mxu0 0
        %3109 = vmatprep.subr.bf16.mxu0 0
        %3110 = vmatpush1.bf16.msra.mxu0 0
        %3111 = vmatprep.mubr.bf16.mxu0 0
        %3112 = vmatmul.mubr.bf16.gmra.mrb[0].mxu0 %v3027
        %v3113 = vpop.f32.mrb[0].mxu0
        %v3114 = vadd.f32 0.0, %v3113
        %v3115 = vpop.f32.mrb[0].mxu0
        %v3116 = vpop.f32.mrb[0].mxu0
        %v3117 = vpop.f32.mrb[0].mxu0
        %3118 = vdwg.mxu0
        %v3119 = vadd.f32 %v2929, %v3073
        %v3120 = vadd.f32 %v2931, %v3075
        %v3121 = vadd.f32 %v2970, %v3114
        %v3122 = vmul.f32 %v3119, %v2219
        %v3123 = vmul.f32 %v3120, %v2219
        %v3124 = vmul.f32 %v3121, %v2219
        %v3125 = vadd.f32 %v3122, %v2227
        %v3126 = vadd.f32 %v3123, %v2227
        %v3127 = vadd.f32 %v3124, %v2227
        %v3128 = vmax.f32 %v3125, 0.0
        %v3129 = vmax.f32 %v3126, 0.0
        %v3130 = vmax.f32 %v3127, 0.0
        %s3131 = scalar_lea.vmem %s163, 48 [#allocation5]
        %3132 = vst [vmem:[%s3131] sm:$0xff] %v3128
        %3133 = vst [vmem:[%s3131 + $0x8] sm:$0xff] %v3129
        %3134 = vst.msk [vmem:[%s3131 + $0x10] sm:$0xff] %vm2237, %v3130
        %v3135 = vld [vmem:[%s1] sm:$0xf]
        %v3136 = vld [vmem:[%s1030] sm:$0xff]
        %v3137 = vld [vmem:[%s1030 + $0x8] sm:$0xf]
        %v3138 = vld [vmem:[%s1030 + $0xc] sm:$0xff]
        %v3139 = vld [vmem:[%s1030 + $0x14] sm:$0xf]
        %v3140 = vld [vmem:[%s1030 + $0x18] sm:$0xff]
        %v3141 = vld [vmem:[%s1030 + $0x20] sm:$0xf]
        %v3142 = vld [vmem:[%s1030 + $0x24] sm:$0xff]
        %v3143 = vld [vmem:[%s1030 + $0x2c] sm:$0xf]
        %v3144 = vld [vmem:[%s1030 + $0x30] sm:$0x33]
        %v3145 = vld [vmem:[%s1030 + $0x38] sm:$0x3]
        %v3146 = vld [vmem:[%s1788] sm:$0xf]
        %v3147 = vld [vmem:[%s1285] sm:$0xff]
        %v3148 = vld [vmem:[%s1285 + $0x8] sm:$0xf]
        %v3149 = vld [vmem:[%s1285 + $0xc] sm:$0xff]
        %v3150 = vld [vmem:[%s1285 + $0x14] sm:$0xf]
        %v3151 = vld [vmem:[%s1285 + $0x18] sm:$0xff]
        %v3152 = vld [vmem:[%s1285 + $0x20] sm:$0xf]
        %v3153 = vld [vmem:[%s1285 + $0x24] sm:$0xff]
        %v3154 = vld [vmem:[%s1285 + $0x2c] sm:$0xf]
        %v3155 = vld [vmem:[%s1285 + $0x30] sm:$0x33]
        %v3156 = vld [vmem:[%s1285 + $0x38] sm:$0x3]
        %v3167 = vunpack.c.l.b16 %v3147
        %v3168 = vunpack.c.h.b16 %v3147
        %v3169 = vunpack.c.l.b16 %v3148
        %v3170 = vunpack.c.l.b16 %v3149
        %v3171 = vunpack.c.h.b16 %v3149
        %v3172 = vunpack.c.l.b16 %v3150
        %v3173 = vunpack.c.l.b16 %v3151
        %v3174 = vunpack.c.h.b16 %v3151
        %v3175 = vunpack.c.l.b16 %v3152
        %v3176 = vunpack.c.l.b16 %v3153
        %v3177 = vunpack.c.h.b16 %v3153
        %v3178 = vunpack.c.l.b16 %v3154
        %v3179 = vunpack.c.l.b16 %v3155
        %v3180 = vunpack.c.h.b16 %v3155
        %v3181 = vunpack.c.l.b16 %v3156
        %v3182 = vpack.c.b16 %v3170, %v3167
        %v3183 = vpack.c.b16 %v3171, %v3168
        %v3184 = vpack.c.b16 %v3172, %v3169
        %v3185 = vpack.c.b16 %v3176, %v3173
        %v3186 = vpack.c.b16 %v3177, %v3174
        %v3187 = vpack.c.b16 %v3178, %v3175
        %v3188 = vpack.c.b16 %v3179, %v3179
        %v3189 = vpack.c.b16 %v3180, %v3180
        %v3190 = vpack.c.b16 %v3181, %v3181
        %v3198 = vsel %vm1840, %v3146, 0
        %v3201 = vsel %vm1844, %v3188, 0
        %v3204 = vsel %vm1844, %v3189, 0
        %v3207 = vsel %vm1844, %v3190, 0
        %3209 = vmatprep.subr.bf16.mxu0 %v3183
        %3210 = vmatpush1.bf16.msra.mxu0 %v3182
        %3211 = vmatprep.subr.bf16.mxu0 %v3186
        %3212 = vmatpush1.bf16.msra.mxu0 %v3185
        %3213 = vmatprep.subr.bf16.mxu0 %v3204
        %3214 = vmatpush1.bf16.msra.mxu0 %v3201
        %3215 = vmatprep.subr.bf16.mxu0 0
        %3216 = vmatpush1.bf16.msra.mxu0 0
        %3217 = vmatprep.subr.bf16.mxu0 0
        %3218 = vmatpush1.bf16.msra.mxu0 0
        %3219 = vmatprep.subr.bf16.mxu0 0
        %3220 = vmatpush1.bf16.msra.mxu0 0
        %3221 = vmatprep.subr.bf16.mxu0 0
        %3222 = vmatpush1.bf16.msra.mxu0 0
        %3223 = vmatprep.subr.bf16.mxu0 0
        %3224 = vmatpush1.bf16.msra.mxu0 0
        %3225 = vmatprep.subr.bf16.mxu0 0
        %3226 = vmatpush1.bf16.msra.mxu0 0
        %3227 = vmatprep.subr.bf16.mxu0 0
        %3228 = vmatpush1.bf16.msra.mxu0 0
        %3229 = vmatprep.subr.bf16.mxu0 0
        %3230 = vmatpush1.bf16.msra.mxu0 0
        %3231 = vmatprep.subr.bf16.mxu0 0
        %3232 = vmatpush1.bf16.msra.mxu0 0
        %3233 = vmatprep.subr.bf16.mxu0 0
        %3234 = vmatpush1.bf16.msra.mxu0 0
        %3235 = vmatprep.subr.bf16.mxu0 0
        %3236 = vmatpush1.bf16.msra.mxu0 0
        %3237 = vmatprep.subr.bf16.mxu0 0
        %3238 = vmatpush1.bf16.msra.mxu0 0
        %3239 = vmatprep.subr.bf16.mxu0 0
        %3240 = vmatpush1.bf16.msra.mxu0 0
        %3241 = vmatprep.mubr.bf16.mxu0 0
        %3242 = vmatmul.mubr.bf16.gmra.mrb[0].mxu0 %v3198
        %v3243 = vpop.f32.mrb[0].mxu0
        %v3244 = vadd.f32 0.0, %v3243
        %v3245 = vpop.f32.mrb[0].mxu0
        %v3246 = vadd.f32 0.0, %v3245
        %v3247 = vpop.f32.mrb[0].mxu0
        %v3248 = vpop.f32.mrb[0].mxu0
        %3249 = vdwg.mxu0
        %3250 = vmatprep.subr.bf16.mxu0 0
        %3251 = vmatpush1.bf16.msra.mxu0 %v3184
        %3252 = vmatprep.subr.bf16.mxu0 0
        %3253 = vmatpush1.bf16.msra.mxu0 %v3187
        %3254 = vmatprep.subr.bf16.mxu0 0
        %3255 = vmatpush1.bf16.msra.mxu0 %v3207
        %3256 = vmatprep.subr.bf16.mxu0 0
        %3257 = vmatpush1.bf16.msra.mxu0 0
        %3258 = vmatprep.subr.bf16.mxu0 0
        %3259 = vmatpush1.bf16.msra.mxu0 0
        %3260 = vmatprep.subr.bf16.mxu0 0
        %3261 = vmatpush1.bf16.msra.mxu0 0
        %3262 = vmatprep.subr.bf16.mxu0 0
        %3263 = vmatpush1.bf16.msra.mxu0 0
        %3264 = vmatprep.subr.bf16.mxu0 0
        %3265 = vmatpush1.bf16.msra.mxu0 0
        %3266 = vmatprep.subr.bf16.mxu0 0
        %3267 = vmatpush1.bf16.msra.mxu0 0
        %3268 = vmatprep.subr.bf16.mxu0 0
        %3269 = vmatpush1.bf16.msra.mxu0 0
        %3270 = vmatprep.subr.bf16.mxu0 0
        %3271 = vmatpush1.bf16.msra.mxu0 0
        %3272 = vmatprep.subr.bf16.mxu0 0
        %3273 = vmatpush1.bf16.msra.mxu0 0
        %3274 = vmatprep.subr.bf16.mxu0 0
        %3275 = vmatpush1.bf16.msra.mxu0 0
        %3276 = vmatprep.subr.bf16.mxu0 0
        %3277 = vmatpush1.bf16.msra.mxu0 0
        %3278 = vmatprep.subr.bf16.mxu0 0
        %3279 = vmatpush1.bf16.msra.mxu0 0
        %3280 = vmatprep.subr.bf16.mxu0 0
        %3281 = vmatpush1.bf16.msra.mxu0 0
        %3282 = vmatprep.mubr.bf16.mxu0 0
        %3283 = vmatmul.mubr.bf16.gmra.mrb[0].mxu0 %v3198
        %v3284 = vpop.f32.mrb[0].mxu0
        %v3285 = vadd.f32 0.0, %v3284
        %v3286 = vpop.f32.mrb[0].mxu0
        %v3287 = vpop.f32.mrb[0].mxu0
        %v3288 = vpop.f32.mrb[0].mxu0
        %3289 = vdwg.mxu0
        %v3300 = vunpack.c.l.b16 %v3136
        %v3301 = vunpack.c.h.b16 %v3136
        %v3302 = vunpack.c.l.b16 %v3137
        %v3303 = vunpack.c.l.b16 %v3138
        %v3304 = vunpack.c.h.b16 %v3138
        %v3305 = vunpack.c.l.b16 %v3139
        %v3306 = vunpack.c.l.b16 %v3140
        %v3307 = vunpack.c.h.b16 %v3140
        %v3308 = vunpack.c.l.b16 %v3141
        %v3309 = vunpack.c.l.b16 %v3142
        %v3310 = vunpack.c.h.b16 %v3142
        %v3311 = vunpack.c.l.b16 %v3143
        %v3312 = vunpack.c.l.b16 %v3144
        %v3313 = vunpack.c.h.b16 %v3144
        %v3314 = vunpack.c.l.b16 %v3145
        %v3315 = vpack.c.b16 %v3303, %v3300
        %v3316 = vpack.c.b16 %v3304, %v3301
        %v3317 = vpack.c.b16 %v3305, %v3302
        %v3318 = vpack.c.b16 %v3309, %v3306
        %v3319 = vpack.c.b16 %v3310, %v3307
        %v3320 = vpack.c.b16 %v3311, %v3308
        %v3321 = vpack.c.b16 %v3312, %v3312
        %v3322 = vpack.c.b16 %v3313, %v3313
        %v3323 = vpack.c.b16 %v3314, %v3314
        %v3331 = vsel %vm1840, %v3135, 0
        %v3334 = vsel %vm1844, %v3321, 0
        %v3337 = vsel %vm1844, %v3322, 0
        %v3340 = vsel %vm1844, %v3323, 0
        %3342 = vmatprep.subr.bf16.mxu0 %v3316
        %3343 = vmatpush1.bf16.msra.mxu0 %v3315
        %3344 = vmatprep.subr.bf16.mxu0 %v3319
        %3345 = vmatpush1.bf16.msra.mxu0 %v3318
        %3346 = vmatprep.subr.bf16.mxu0 %v3337
        %3347 = vmatpush1.bf16.msra.mxu0 %v3334
        %3348 = vmatprep.subr.bf16.mxu0 0
        %3349 = vmatpush1.bf16.msra.mxu0 0
        %3350 = vmatprep.subr.bf16.mxu0 0
        %3351 = vmatpush1.bf16.msra.mxu0 0
        %3352 = vmatprep.subr.bf16.mxu0 0
        %3353 = vmatpush1.bf16.msra.mxu0 0
        %3354 = vmatprep.subr.bf16.mxu0 0
        %3355 = vmatpush1.bf16.msra.mxu0 0
        %3356 = vmatprep.subr.bf16.mxu0 0
        %3357 = vmatpush1.bf16.msra.mxu0 0
        %3358 = vmatprep.subr.bf16.mxu0 0
        %3359 = vmatpush1.bf16.msra.mxu0 0
        %3360 = vmatprep.subr.bf16.mxu0 0
        %3361 = vmatpush1.bf16.msra.mxu0 0
        %3362 = vmatprep.subr.bf16.mxu0 0
        %3363 = vmatpush1.bf16.msra.mxu0 0
        %3364 = vmatprep.subr.bf16.mxu0 0
        %3365 = vmatpush1.bf16.msra.mxu0 0
        %3366 = vmatprep.subr.bf16.mxu0 0
        %3367 = vmatpush1.bf16.msra.mxu0 0
        %3368 = vmatprep.subr.bf16.mxu0 0
        %3369 = vmatpush1.bf16.msra.mxu0 0
        %3370 = vmatprep.subr.bf16.mxu0 0
        %3371 = vmatpush1.bf16.msra.mxu0 0
        %3372 = vmatprep.subr.bf16.mxu0 0
        %3373 = vmatpush1.bf16.msra.mxu0 0
        %3374 = vmatprep.mubr.bf16.mxu0 0
        %3375 = vmatmul.mubr.bf16.gmra.mrb[0].mxu0 %v3331
        %v3376 = vpop.f32.mrb[0].mxu0
        %v3377 = vadd.f32 %v3244, %v3376
        %v3378 = vpop.f32.mrb[0].mxu0
        %v3379 = vadd.f32 %v3246, %v3378
        %v3380 = vpop.f32.mrb[0].mxu0
        %v3381 = vpop.f32.mrb[0].mxu0
        %3382 = vdwg.mxu0
        %3383 = vmatprep.subr.bf16.mxu0 0
        %3384 = vmatpush1.bf16.msra.mxu0 %v3317
        %3385 = vmatprep.subr.bf16.mxu0 0
        %3386 = vmatpush1.bf16.msra.mxu0 %v3320
        %3387 = vmatprep.subr.bf16.mxu0 0
        %3388 = vmatpush1.bf16.msra.mxu0 %v3340
        %3389 = vmatprep.subr.bf16.mxu0 0
        %3390 = vmatpush1.bf16.msra.mxu0 0
        %3391 = vmatprep.subr.bf16.mxu0 0
        %3392 = vmatpush1.bf16.msra.mxu0 0
        %3393 = vmatprep.subr.bf16.mxu0 0
        %3394 = vmatpush1.bf16.msra.mxu0 0
        %3395 = vmatprep.subr.bf16.mxu0 0
        %3396 = vmatpush1.bf16.msra.mxu0 0
        %3397 = vmatprep.subr.bf16.mxu0 0
        %3398 = vmatpush1.bf16.msra.mxu0 0
        %3399 = vmatprep.subr.bf16.mxu0 0
        %3400 = vmatpush1.bf16.msra.mxu0 0
        %3401 = vmatprep.subr.bf16.mxu0 0
        %3402 = vmatpush1.bf16.msra.mxu0 0
        %3403 = vmatprep.subr.bf16.mxu0 0
        %3404 = vmatpush1.bf16.msra.mxu0 0
        %3405 = vmatprep.subr.bf16.mxu0 0
        %3406 = vmatpush1.bf16.msra.mxu0 0
        %3407 = vmatprep.subr.bf16.mxu0 0
        %3408 = vmatpush1.bf16.msra.mxu0 0
        %3409 = vmatprep.subr.bf16.mxu0 0
        %3410 = vmatpush1.bf16.msra.mxu0 0
        %3411 = vmatprep.subr.bf16.mxu0 0
        %3412 = vmatpush1.bf16.msra.mxu0 0
        %3413 = vmatprep.subr.bf16.mxu0 0
        %3414 = vmatpush1.bf16.msra.mxu0 0
        %3415 = vmatprep.mubr.bf16.mxu0 0
        %3416 = vmatmul.mubr.bf16.gmra.mrb[0].mxu0 %v3331
        %v3417 = vpop.f32.mrb[0].mxu0
        %v3418 = vadd.f32 %v3285, %v3417
        %v3419 = vpop.f32.mrb[0].mxu0
        %v3420 = vpop.f32.mrb[0].mxu0
        %v3421 = vpop.f32.mrb[0].mxu0
        %3422 = vdwg.mxu0
        %v3423 = vld [vmem:[%s2068] sm:$0xf]
        %v3424 = vld [vmem:[%s1540] sm:$0xff]
        %v3425 = vld [vmem:[%s1540 + $0x8] sm:$0xf]
        %v3426 = vld [vmem:[%s1540 + $0xc] sm:$0xff]
        %v3427 = vld [vmem:[%s1540 + $0x14] sm:$0xf]
        %v3428 = vld [vmem:[%s1540 + $0x18] sm:$0xff]
        %v3429 = vld [vmem:[%s1540 + $0x20] sm:$0xf]
        %v3430 = vld [vmem:[%s1540 + $0x24] sm:$0xff]
        %v3431 = vld [vmem:[%s1540 + $0x2c] sm:$0xf]
        %v3432 = vld [vmem:[%s1540 + $0x30] sm:$0x33]
        %v3433 = vld [vmem:[%s1540 + $0x38] sm:$0x3]
        %v3444 = vunpack.c.l.b16 %v3424
        %v3445 = vunpack.c.h.b16 %v3424
        %v3446 = vunpack.c.l.b16 %v3425
        %v3447 = vunpack.c.l.b16 %v3426
        %v3448 = vunpack.c.h.b16 %v3426
        %v3449 = vunpack.c.l.b16 %v3427
        %v3450 = vunpack.c.l.b16 %v3428
        %v3451 = vunpack.c.h.b16 %v3428
        %v3452 = vunpack.c.l.b16 %v3429
        %v3453 = vunpack.c.l.b16 %v3430
        %v3454 = vunpack.c.h.b16 %v3430
        %v3455 = vunpack.c.l.b16 %v3431
        %v3456 = vunpack.c.l.b16 %v3432
        %v3457 = vunpack.c.h.b16 %v3432
        %v3458 = vunpack.c.l.b16 %v3433
        %v3459 = vpack.c.b16 %v3447, %v3444
        %v3460 = vpack.c.b16 %v3448, %v3445
        %v3461 = vpack.c.b16 %v3449, %v3446
        %v3462 = vpack.c.b16 %v3453, %v3450
        %v3463 = vpack.c.b16 %v3454, %v3451
        %v3464 = vpack.c.b16 %v3455, %v3452
        %v3465 = vpack.c.b16 %v3456, %v3456
        %v3466 = vpack.c.b16 %v3457, %v3457
        %v3467 = vpack.c.b16 %v3458, %v3458
        %v3475 = vsel %vm1840, %v3423, 0
        %v3478 = vsel %vm1844, %v3465, 0
        %v3481 = vsel %vm1844, %v3466, 0
        %v3484 = vsel %vm1844, %v3467, 0
        %3486 = vmatprep.subr.bf16.mxu0 %v3460
        %3487 = vmatpush1.bf16.msra.mxu0 %v3459
        %3488 = vmatprep.subr.bf16.mxu0 %v3463
        %3489 = vmatpush1.bf16.msra.mxu0 %v3462
        %3490 = vmatprep.subr.bf16.mxu0 %v3481
        %3491 = vmatpush1.bf16.msra.mxu0 %v3478
        %3492 = vmatprep.subr.bf16.mxu0 0
        %3493 = vmatpush1.bf16.msra.mxu0 0
        %3494 = vmatprep.subr.bf16.mxu0 0
        %3495 = vmatpush1.bf16.msra.mxu0 0
        %3496 = vmatprep.subr.bf16.mxu0 0
        %3497 = vmatpush1.bf16.msra.mxu0 0
        %3498 = vmatprep.subr.bf16.mxu0 0
        %3499 = vmatpush1.bf16.msra.mxu0 0
        %3500 = vmatprep.subr.bf16.mxu0 0
        %3501 = vmatpush1.bf16.msra.mxu0 0
        %3502 = vmatprep.subr.bf16.mxu0 0
        %3503 = vmatpush1.bf16.msra.mxu0 0
        %3504 = vmatprep.subr.bf16.mxu0 0
        %3505 = vmatpush1.bf16.msra.mxu0 0
        %3506 = vmatprep.subr.bf16.mxu0 0
        %3507 = vmatpush1.bf16.msra.mxu0 0
        %3508 = vmatprep.subr.bf16.mxu0 0
        %3509 = vmatpush1.bf16.msra.mxu0 0
        %3510 = vmatprep.subr.bf16.mxu0 0
        %3511 = vmatpush1.bf16.msra.mxu0 0
        %3512 = vmatprep.subr.bf16.mxu0 0
        %3513 = vmatpush1.bf16.msra.mxu0 0
        %3514 = vmatprep.subr.bf16.mxu0 0
        %3515 = vmatpush1.bf16.msra.mxu0 0
        %3516 = vmatprep.subr.bf16.mxu0 0
        %3517 = vmatpush1.bf16.msra.mxu0 0
        %3518 = vmatprep.mubr.bf16.mxu0 0
        %3519 = vmatmul.mubr.bf16.gmra.mrb[0].mxu0 %v3475
        %v3520 = vpop.f32.mrb[0].mxu0
        %v3521 = vadd.f32 0.0, %v3520
        %v3522 = vpop.f32.mrb[0].mxu0
        %v3523 = vadd.f32 0.0, %v3522
        %v3524 = vpop.f32.mrb[0].mxu0
        %v3525 = vpop.f32.mrb[0].mxu0
        %3526 = vdwg.mxu0
        %3527 = vmatprep.subr.bf16.mxu0 0
        %3528 = vmatpush1.bf16.msra.mxu0 %v3461
        %3529 = vmatprep.subr.bf16.mxu0 0
        %3530 = vmatpush1.bf16.msra.mxu0 %v3464
        %3531 = vmatprep.subr.bf16.mxu0 0
        %3532 = vmatpush1.bf16.msra.mxu0 %v3484
        %3533 = vmatprep.subr.bf16.mxu0 0
        %3534 = vmatpush1.bf16.msra.mxu0 0
        %3535 = vmatprep.subr.bf16.mxu0 0
        %3536 = vmatpush1.bf16.msra.mxu0 0
        %3537 = vmatprep.subr.bf16.mxu0 0
        %3538 = vmatpush1.bf16.msra.mxu0 0
        %3539 = vmatprep.subr.bf16.mxu0 0
        %3540 = vmatpush1.bf16.msra.mxu0 0
        %3541 = vmatprep.subr.bf16.mxu0 0
        %3542 = vmatpush1.bf16.msra.mxu0 0
        %3543 = vmatprep.subr.bf16.mxu0 0
        %3544 = vmatpush1.bf16.msra.mxu0 0
        %3545 = vmatprep.subr.bf16.mxu0 0
        %3546 = vmatpush1.bf16.msra.mxu0 0
        %3547 = vmatprep.subr.bf16.mxu0 0
        %3548 = vmatpush1.bf16.msra.mxu0 0
        %3549 = vmatprep.subr.bf16.mxu0 0
        %3550 = vmatpush1.bf16.msra.mxu0 0
        %3551 = vmatprep.subr.bf16.mxu0 0
        %3552 = vmatpush1.bf16.msra.mxu0 0
        %3553 = vmatprep.subr.bf16.mxu0 0
        %3554 = vmatpush1.bf16.msra.mxu0 0
        %3555 = vmatprep.subr.bf16.mxu0 0
        %3556 = vmatpush1.bf16.msra.mxu0 0
        %3557 = vmatprep.subr.bf16.mxu0 0
        %3558 = vmatpush1.bf16.msra.mxu0 0
        %3559 = vmatprep.mubr.bf16.mxu0 0
        %3560 = vmatmul.mubr.bf16.gmra.mrb[0].mxu0 %v3475
        %v3561 = vpop.f32.mrb[0].mxu0
        %v3562 = vadd.f32 0.0, %v3561
        %v3563 = vpop.f32.mrb[0].mxu0
        %v3564 = vpop.f32.mrb[0].mxu0
        %v3565 = vpop.f32.mrb[0].mxu0
        %3566 = vdwg.mxu0
        %v3567 = vadd.f32 %v3377, %v3521
        %v3568 = vadd.f32 %v3379, %v3523
        %v3569 = vadd.f32 %v3418, %v3562
        %v3570 = vmul.f32 %v3567, %v2219
        %v3571 = vmul.f32 %v3568, %v2219
        %v3572 = vmul.f32 %v3569, %v2219
        %v3573 = vadd.f32 %v3570, %v2227
        %v3574 = vadd.f32 %v3571, %v2227
        %v3575 = vadd.f32 %v3572, %v2227
        %v3576 = vmax.f32 %v3573, 0.0
        %v3577 = vmax.f32 %v3574, 0.0
        %v3578 = vmax.f32 %v3575, 0.0
        %s3579 = scalar_lea.vmem %s163, 72 [#allocation5]
        %3580 = vst [vmem:[%s3579] sm:$0xff] %v3576
        %3581 = vst [vmem:[%s3579 + $0x8] sm:$0xff] %v3577
        %3582 = vst.msk [vmem:[%s3579 + $0x10] sm:$0xff] %vm2237, %v3578
        %s3583 = sand.u32 %s103, 1
        %s3584 = scalar_lea.sflag [#allocation6], %s3583
        %s3585 = sand.u32 %s103, 1
        %s3586 = smul.addr %s3585, 96
        %s3587 = scalar_lea.vmem [#allocation5], %s3586
        // Predicated region
        $region49: #{tpu_custom_call.1} parent=31 // pred_check
          %p3588 = pneg %p113
        $region50: #{tpu_custom_call.1} parent=31 // pred_check_branch
          %3590 = sbr.rel (%p3588) target = $region52
        $region51: #{tpu_custom_call.1} parent=31 // pred_region
          %s3591 = smul.u32 4, %s23
          %s3593 = ssub.s32 1536, 1536
          %3594 = vsyncadd %s3584, %s3593
          %s3595 = smul.addr %s3591, 3
          %s3596 = smul.addr %s22, 24
          %s3597 = sadd.s32 %s3595, %s3596
          %s3598 = smul.addr %s3597, 128
          %s3599 = scalar_lea.hbm %s4, %s3598
          %s3600 = sshll.u32 %s3587, 4
          %s3601 = int_to_ptr.vmem [resolvable:$true] %s3600
          %3606 = dma.vmem_to_hbm [thread:$0]  %s3601, 1536, %s3599, %s3584, 384, 384, 24
        $region52: #{tpu_custom_call.1} parent=31 // pred_fallthru
          _
      $region32: #{tpu_custom_call.1} parent=5 // pred_fallthru
        _
      %p3607 = scmp.le.s32.totalorder 2, %s13
      // Predicated region
      $region53: #{tpu_custom_call.1} parent=5 // pred_check
        %p3608 = pneg %p3607
      $region54: #{tpu_custom_call.1} parent=5 // pred_check_branch
        %3610 = sbr.rel (%p3608) target = $region56
      $region55: #{tpu_custom_call.1} parent=5 // pred_region
        %s3611 = ssub.s32 %s13, 2
        // Predicated region
        $region57: #{tpu_custom_call.1} parent=55 // pred_check
          %p3612 = pneg %p119
        $region58: #{tpu_custom_call.1} parent=55 // pred_check_branch
          %3614 = sbr.rel (%p3612) target = $region60
        $region59: #{tpu_custom_call.1} parent=55 // pred_region
          %s3615 = sand.u32 %s104, 1
          %s3616 = scalar_lea.sflag [#allocation6], %s3615
          %s3617 = sand.u32 %s104, 1
          %s3618 = smul.addr %s3617, 96
          %s3619 = scalar_lea.vmem [#allocation5], %s3618
          %3620 = dma.done %s3616, 1536
        $region60: #{tpu_custom_call.1} parent=55 // pred_fallthru
          _
      $region56: #{tpu_custom_call.1} parent=5 // pred_fallthru
        _
    $region6: #{tpu_custom_call.1} parent=1 // loop_footer
      %s17 = sadd.s32 1, %s13
    $region7: #{tpu_custom_call.1} parent=1 // loop_footer_branch
      %12 = sbr.rel target = $region3
    $region8: #{tpu_custom_call.1} parent=1 // loop_exit
      _
    %3621 = vsyncpa [#allocation6], 1
    %s3622 = scalar_lea.sflag [#allocation6], 1
    %3623 = vsyncpa %s3622, 1
  %3624 = vsyncmov [#allocation4]
  %s3625 = vpop.sfrf %3624
  %p3626 = scmp.eq.s32.totalorder %s3625, 0
  %p3627 = pneg %p3626
  %3629 = shalt.err (%p3627)
  %s3630 = scalar_lea.sflag [#allocation4], 1
  %3631 = vsyncmov %s3630
  %s3632 = vpop.sfrf %3631
  %p3633 = scmp.eq.s32.totalorder %s3632, 0
  %p3634 = pneg %p3633
  %3636 = shalt.err (%p3634)

</llo_original>
